<compile_context>
chip_gen: v6e
topology: v6e:2x2x1
jax: 0.10.0
libtpu: 0.0.40
codegen_flags: <defaults>
</compile_context>

<pallas_src>
import numpy as np

import jax
import jax.numpy as jnp
from jax import lax
from jax.experimental import pallas as pl
from jax.experimental.pallas import tpu as pltpu


# ---------------- instance geometry (fixed by the chosen config) -------------
CIN, HIN, WIN = 4, 16, 16          # network input channels / spatial size
NIN = HIN * WIN                    # 256 flattened input spatial size
C1 = 8                             # conv-1 output channels
C2 = 4                             # deconv output channels (= C1 // scale)
H1 = W1 = 2 * HIN                  # 32  (after nearest-2x upsample / conv-1)
H2 = W2 = 2 * H1                   # 64  (after the stride-2 transposed conv)
WP = W1 + 2                        # 34  padded row width of the 32x32 grids
LFLAT = H1 * WP                    # 1088 flattened (row-major, padded) length
NPH = 4 * C2                       # 16  polyphase channels (2x2 phases x C2)


# -----------------------------------------------------------------------------
# Fused Pallas kernel: upsample -> conv3x3 -> deconv4x4/s2 -> conv3x3 (+ReLU)
# -----------------------------------------------------------------------------
def _vgg_upscaler_kernel(x_ref, wu_ref, wa_ref, ba_ref, wb_ref, wc_ref, bc_ref,
                         m_ref, o0_ref, o1_ref, o2_ref, sba, sbb, sbc):
    f32 = jnp.float32
    msk = m_ref[...]                                   # (1, LFLAT) valid-col mask

    def scatter9(dst, val, cin):
        # Build the 9-tap stacked (im2col-lite) conv operand: block t holds the
        # padded-flat activation shifted by the tap offset.  Halo slivers
        # (<= 35 lanes) are zero-filled every step, so the buffer is fully
        # defined without a first-iteration init (safe under "parallel").
        zrow = jnp.zeros((cin, WP + 1), f32)
        for t in range(9):
            dr, dc = divmod(t, 3)
            shift = (WP + 1) - (dr * WP + dc)          # 35..33, 1..-1, -33..-35
            r0 = t * cin
            if shift > 0:
                dst[r0:r0 + cin, :shift] = zrow[:, :shift]
                dst[r0:r0 + cin, shift:] = val[:, :LFLAT - shift]
            elif shift == 0:
                dst[r0:r0 + cin, :] = val
            else:
                dst[r0:r0 + cin, :LFLAT + shift] = val[:, -shift:]
                dst[r0:r0 + cin, LFLAT + shift:] = zrow[:, :-shift]

    # ---- block 0: nearest-2x upsample (one spread matmul) + conv3x3 + ReLU ---
    au = jnp.dot(x_ref[...], wu_ref[...], preferred_element_type=f32)  # (CIN, LFLAT)
    scatter9(sba, au, CIN)                                             # U already masks pad cols
    a_out = jnp.maximum(
        jnp.dot(wa_ref[...], sba[...], preferred_element_type=f32) + ba_ref[...],
        0.0)                                                           # (C1, LFLAT)
    o0_ref[...] = a_out

    # ---- block 1: ConvTranspose2d(k4, s2, p1, no bias) as 2x2 polyphase ------
    scatter9(sbb, a_out * msk, C1)
    b_out = jnp.maximum(
        jnp.dot(wb_ref[...], sbb[...], preferred_element_type=f32), 0.0)  # (NPH, LFLAT)
    o1_ref[...] = b_out

    # ---- block 2: 3x3 conv (4->4) + bias + ReLU, evaluated in phase domain ---
    scatter9(sbc, b_out * msk, NPH)
    c_out = jnp.maximum(
        jnp.dot(wc_ref[...], sbc[...], preferred_element_type=f32) + bc_ref[...],
        0.0)                                                           # (NPH, LFLAT)
    o2_ref[...] = c_out


# -----------------------------------------------------------------------------
# Parameter init (deterministic, same torch shapes as the nn.Module __init__)
# -----------------------------------------------------------------------------
def init_vgg_upscaler_params(key, structures, in_channels, scale=2):
    params = []
    c = in_channels
    for structure in structures:
        block = []
        for item in structure:
            if item == 'upsample':
                block.append(('upsample', None))
            elif item == 'deconv':
                cout = c // scale
                key, k1 = jax.random.split(key)
                # torch ConvTranspose2d weight: (in_ch, out_ch, kH, kW), bias=False
                w = 0.1 * jax.random.normal(k1, (c, cout, 4, 4), jnp.float32)
                block.append(('deconv', {'w': w}))
                c = cout
            else:
                cout = int(item)
                key, k1, k2 = jax.random.split(key, 3)
                # torch Conv2d weight: (out_ch, in_ch, 3, 3), with bias
                w = 0.1 * jax.random.normal(k1, (cout, c, 3, 3), jnp.float32)
                bb = 0.1 * jax.random.normal(k2, (cout,), jnp.float32)
                block.append(('conv', {'w': w, 'b': bb}))
                c = cout
        params.append(block)
    return params


# -----------------------------------------------------------------------------
# One-time (hoisted) rearrangement of weights into the kernel's matmul operands
# -----------------------------------------------------------------------------
def prepare_operands(params):
    convA = params[0][1][1]          # block 0: [upsample, conv]
    deconv = params[1][0][1]         # block 1: [deconv]
    convC = params[2][0][1]          # block 2: [conv]
    w1 = np.asarray(convA['w'])      # (C1, CIN, 3, 3)
    b1 = np.asarray(convA['b'])      # (C1,)
    wT = np.asarray(deconv['w'])     # (C1, C2, 4, 4)  [in, out, kh, kw]
    w2 = np.asarray(convC['w'])      # (C2, C2, 3, 3)
    b2 = np.asarray(convC['b'])      # (C2,)

    # Block 0 conv packed for the 9-tap stacked operand: (C1, 9*CIN).
    WA = np.zeros((C1, 9 * CIN), np.float32)
    for t in range(9):
        WA[:, t * CIN:(t + 1) * CIN] = w1[:, :, t // 3, t % 3]
    bA = b1.reshape(C1, 1).astype(np.float32)

    # Deconv polyphase tap tables:
    #   KH[p]: padded-window row offset dr -> transposed-conv kernel row kh
    KH = ({0: 3, 1: 1}, {1: 2, 2: 0})
    #   PH[p]: conv kernel row kh -> (input phase p~, padded-window offset dr)
    PH = ({0: (1, 0), 1: (0, 1), 2: (1, 1)},
          {0: (0, 1), 1: (1, 1), 2: (0, 2)})

    # Block 1 (deconv) as 4 output phases; rows ordered m = q*2*C2 + p*C2 + co.
    WB = np.zeros((NPH, 9 * C1), np.float32)
    for p in (0, 1):
        for q in (0, 1):
            row0 = q * 2 * C2 + p * C2
            for dr, kh in KH[p].items():
                for dc, kw in KH[q].items():
                    t = dr * 3 + dc
                    WB[row0:row0 + C2, t * C1:(t + 1) * C1] = wT[:, :, kh, kw].T

    # Block 2 (3x3 conv on the interleaved 64x64 image) evaluated per phase.
    WC = np.zeros((NPH, 9 * NPH), np.float32)
    for p in (0, 1):
        for q in (0, 1):
            row0 = q * 2 * C2 + p * C2
            for kh in range(3):
                pt, dr = PH[p][kh]
                for kw in range(3):
                    qt, dc = PH[q][kw]
                    t = dr * 3 + dc
                    col0 = t * NPH + qt * 2 * C2 + pt * C2
                    WC[row0:row0 + C2, col0:col0 + C2] = w2[:, :, kh, kw]
    bC = np.tile(b2, 4).reshape(NPH, 1).astype(np.float32)

    # Upsample spread matrix: x_flat(CIN,256) @ U(256,LFLAT) does the nearest-2x
    # row+col duplication AND the padded-flat placement (pad cols stay 0).
    U = np.zeros((NIN, LFLAT), np.float32)
    for h in range(HIN):
        for w in range(WIN):
            src = h * WIN + w
            for dr in range(2):
                for dc in range(2):
                    U[src, (2 * h + dr) * WP + (2 * w + dc)] = 1.0

    mask = (np.arange(LFLAT) % WP < W1).astype(np.float32).reshape(1, LFLAT)

    ops = dict(WA=WA, bA=bA, WB=WB, WC=WC, bC=bC, U=U, mask=mask)
    return {k: jnp.asarray(v, jnp.float32) for k, v in ops.items()}


# -----------------------------------------------------------------------------
# Forward pass (single fused pallas_call, grid over batch only)
# -----------------------------------------------------------------------------
def _const2(i):
    return (0, 0)


def _batch3(i):
    return (i, 0, 0)


def vgg_upscaler_forward(ops, x):
    """Returns [block2_out, block1_out, block0_out] (reversed), matching
    VGG_upscaler.forward for the chosen config."""
    n = x.shape[0]
    assert x.shape[1:] == (CIN, HIN, WIN)
    xf = x.reshape(n, CIN, NIN)                        # lane-dense flat input

    o0f, o1f, o2f = pl.pallas_call(
        _vgg_upscaler_kernel,
        out_shape=(
            jax.ShapeDtypeStruct((n, C1, LFLAT), jnp.float32),
            jax.ShapeDtypeStruct((n, NPH, LFLAT), jnp.float32),
            jax.ShapeDtypeStruct((n, NPH, LFLAT), jnp.float32),
        ),
        grid=(n,),
        in_specs=[
            pl.BlockSpec((None, CIN, NIN), _batch3),   # x (flat)
            pl.BlockSpec((NIN, LFLAT), _const2),       # U  upsample spread
            pl.BlockSpec((C1, 9 * CIN), _const2),      # WA
            pl.BlockSpec((C1, 1), _const2),            # bA
            pl.BlockSpec((NPH, 9 * C1), _const2),      # WB
            pl.BlockSpec((NPH, 9 * NPH), _const2),     # WC
            pl.BlockSpec((NPH, 1), _const2),           # bC
            pl.BlockSpec((1, LFLAT), _const2),         # mask
        ],
        out_specs=(
            pl.BlockSpec((None, C1, LFLAT), _batch3),
            pl.BlockSpec((None, NPH, LFLAT), _batch3),
            pl.BlockSpec((None, NPH, LFLAT), _batch3),
        ),
        scratch_shapes=[
            pltpu.VMEM((9 * CIN, LFLAT), jnp.float32),   # stacked operand, conv A
            pltpu.VMEM((9 * C1, LFLAT), jnp.float32),    # stacked operand, deconv
            pltpu.VMEM((9 * NPH, LFLAT), jnp.float32),   # stacked operand, conv C
        ],
        compiler_params=pltpu.CompilerParams(
            dimension_semantics=("parallel",)),
    )(xf, ops['U'], ops['WA'], ops['bA'], ops['WB'], ops['WC'], ops['bC'],
      ops['mask'])

    # ---- NCHW plumbing in the XLA wrapper (outputs are lane-dense slabs) ----
    # block 0: (n, C1, LFLAT) -> strip the 2 pad columns per row -> (n,8,32,32)
    o0 = o0f.reshape(n, C1, H1, WP)[:, :, :, :W1]

    # blocks 1/2: (n, NPH, LFLAT) polyphase-flat, rows ordered (q, p, c);
    # interleave the 2x2 phases back into (n, C2, 64, 64).
    def interleave(of):
        ph = of.reshape(n, 2, 2, C2, H1, WP)[..., :W1]        # (n, q, p, c, r, s)
        return ph.transpose(0, 3, 4, 2, 5, 1).reshape(n, C2, H2, W2)

    return [interleave(o2f), interleave(o1f), o0]


vgg_upscaler_forward_jit = jax.jit(vgg_upscaler_forward)


# -----------------------------------------------------------------------------
# Pure-JAX reference (torch semantics) for correctness checking
# -----------------------------------------------------------------------------
def reference_forward(params, x, non_lin='relu'):
    def act(v):
        return jnp.maximum(v, 0.0) if non_lin == 'relu' else jnp.where(v >= 0, v, 0.2 * v)

    dn = ('NCHW', 'OIHW', 'NCHW')
    outputs = []
    for block in params:
        for kind, p in block:
            if kind == 'upsample':
                x = jnp.repeat(jnp.repeat(x, 2, axis=2), 2, axis=3)
            elif kind == 'conv':
                y = lax.conv_general_dilated(x, p['w'], (1, 1), ((1, 1), (1, 1)),
                                             dimension_numbers=dn)
                x = act(y + p['b'][None, :, None, None])
            else:  # deconv: ConvTranspose2d(k=4, s=2, p=1, bias=False)
                w_conv = jnp.flip(p['w'], axis=(2, 3)).transpose(1, 0, 2, 3)
                y = lax.conv_general_dilated(x, w_conv, (1, 1), ((2, 2), (2, 2)),
                                             lhs_dilation=(2, 2),
                                             dimension_numbers=dn)
                x = act(y)
        outputs.append(x)
    outputs.reverse()
    return outputs


if __name__ == "__main__":
    key = jax.random.PRNGKey(0)
    kp, kx = jax.random.split(key)

    # VGG_upscaler(structures, L=3, in_channels=4, norm_type='none',
    #              non_lin='relu', scale=2)
    structures = [['upsample', 8], ['deconv'], [4]]
    in_channels = CIN

    params = init_vgg_upscaler_params(kp, structures, in_channels, scale=2)
    ops = prepare_operands(params)   # hoisted weight reshuffle (done once)
    x = jax.random.normal(kx, (2, in_channels, HIN, WIN), jnp.float32)

    outs = vgg_upscaler_forward_jit(ops, x)
    outs = jax.block_until_ready(outs)

    refs = reference_forward(params, x, non_lin='relu')
    expected_shapes = [(2, C2, H2, W2), (2, C2, H2, W2), (2, C1, H1, W1)]
    for o, r, s in zip(outs, refs, expected_shapes):
        assert o.shape == s, (o.shape, s)
        err = float(jnp.max(jnp.abs(o - r)))
        assert jnp.allclose(o, r, atol=2e-4, rtol=2e-4), f"mismatch: max abs err {err}"

    print("KERNEL_OK")
</pallas_src>

<mosaic_0001>
module attributes {stable_mosaic.version = 11 : i64} {
  func.func @_vgg_upscaler_kernel(%arg0: i32, %arg1: memref<1x4x256xf32, #tpu.memory_space<vmem>>, %arg2: memref<256x1088xf32, #tpu.memory_space<vmem>>, %arg3: memref<8x36xf32, #tpu.memory_space<vmem>>, %arg4: memref<8x1xf32, #tpu.memory_space<vmem>>, %arg5: memref<16x72xf32, #tpu.memory_space<vmem>>, %arg6: memref<16x144xf32, #tpu.memory_space<vmem>>, %arg7: memref<16x1xf32, #tpu.memory_space<vmem>>, %arg8: memref<1x1088xf32, #tpu.memory_space<vmem>>, %arg9: memref<1x8x1088xf32, #tpu.memory_space<vmem>>, %arg10: memref<1x16x1088xf32, #tpu.memory_space<vmem>>, %arg11: memref<1x16x1088xf32, #tpu.memory_space<vmem>>, %arg12: memref<36x1088xf32, #tpu.memory_space<vmem>>, %arg13: memref<72x1088xf32, #tpu.memory_space<vmem>>, %arg14: memref<144x1088xf32, #tpu.memory_space<vmem>>) attributes {dimension_semantics = [#tpu.dimension_semantics<parallel>], iteration_bounds = array<i64: 2>, scalar_prefetch = 0 : i64, scratch_operands = 3 : i64, tpu.core_type = #tpu.core_type<tc>, window_params = [{transform_indices = @transform_0, window_bounds = array<i64: 1, 4, 256>}, {pipeline_mode = #tpu.pipeline_mode<synchronous>, transform_indices = @transform_1, window_bounds = array<i64: 256, 1088>}, {pipeline_mode = #tpu.pipeline_mode<synchronous>, transform_indices = @transform_2, window_bounds = array<i64: 8, 36>}, {pipeline_mode = #tpu.pipeline_mode<synchronous>, transform_indices = @transform_3, window_bounds = array<i64: 8, 1>}, {pipeline_mode = #tpu.pipeline_mode<synchronous>, transform_indices = @transform_4, window_bounds = array<i64: 16, 72>}, {pipeline_mode = #tpu.pipeline_mode<synchronous>, transform_indices = @transform_5, window_bounds = array<i64: 16, 144>}, {pipeline_mode = #tpu.pipeline_mode<synchronous>, transform_indices = @transform_6, window_bounds = array<i64: 16, 1>}, {pipeline_mode = #tpu.pipeline_mode<synchronous>, transform_indices = @transform_7, window_bounds = array<i64: 1, 1088>}, {transform_indices = @transform_8, window_bounds = array<i64: 1, 8, 1088>}, {transform_indices = @transform_9, window_bounds = array<i64: 1, 16, 1088>}, {transform_indices = @transform_10, window_bounds = array<i64: 1, 16, 1088>}]} {
    %c0 = arith.constant 0 : index
    %c0_0 = arith.constant 0 : index
    %0 = vector.load %arg8[%c0, %c0_0] : memref<1x1088xf32, #tpu.memory_space<vmem>>, vector<1x1088xf32>
    %c0_1 = arith.constant 0 : index
    %c0_2 = arith.constant 0 : index
    %c0_3 = arith.constant 0 : index
    %1 = vector.load %arg1[%c0_1, %c0_2, %c0_3] : memref<1x4x256xf32, #tpu.memory_space<vmem>>, vector<1x4x256xf32>
    %2 = vector.shape_cast %1 : vector<1x4x256xf32> to vector<4x256xf32>
    %c0_4 = arith.constant 0 : index
    %c0_5 = arith.constant 0 : index
    %3 = vector.load %arg2[%c0_4, %c0_5] : memref<256x1088xf32, #tpu.memory_space<vmem>>, vector<256x1088xf32>
    %cst = arith.constant dense<0.000000e+00> : vector<4x1088xf32>
    %4 = tpu.matmul %2, %3, %cst {dimension_numbers = #tpu.dot_dimension_numbers<[1], [0], [0], [1], [0, 0, 1, 1], [], []>} : vector<4x256xf32>, vector<256x1088xf32>, vector<4x1088xf32> -> vector<4x1088xf32>
    %cst_6 = arith.constant 0.000000e+00 : f32
    %5 = vector.broadcast %cst_6 : f32 to vector<4x35xf32>
    %c0_7 = arith.constant 0 : index
    %c0_8 = arith.constant 0 : index
    %6 = vector.load %arg12[%c0_7, %c0_8] : memref<36x1088xf32, #tpu.memory_space<vmem>>, vector<4x35xf32>
    tpu.vector_store %arg12[%c0_7, %c0_8], %5 {strides = array<i32>} : memref<36x1088xf32, #tpu.memory_space<vmem>>, vector<4x35xf32>,
    %7 = vector.extract_strided_slice %4 {offsets = [0, 0], sizes = [4, 1053], strides = [1, 1]} : vector<4x1088xf32> to vector<4x1053xf32>
    %c0_9 = arith.constant 0 : index
    %c35 = arith.constant 35 : index
    %8 = vector.load %arg12[%c0_9, %c35] : memref<36x1088xf32, #tpu.memory_space<vmem>>, vector<4x1053xf32>
    tpu.vector_store %arg12[%c0_9, %c35], %7 {strides = array<i32>} : memref<36x1088xf32, #tpu.memory_space<vmem>>, vector<4x1053xf32>,
    %9 = vector.extract_strided_slice %5 {offsets = [0, 0], sizes = [4, 34], strides = [1, 1]} : vector<4x35xf32> to vector<4x34xf32>
    %c4 = arith.constant 4 : index
    %c0_10 = arith.constant 0 : index
    %10 = vector.load %arg12[%c4, %c0_10] : memref<36x1088xf32, #tpu.memory_space<vmem>>, vector<4x34xf32>
    tpu.vector_store %arg12[%c4, %c0_10], %9 {strides = array<i32>} : memref<36x1088xf32, #tpu.memory_space<vmem>>, vector<4x34xf32>,
    %11 = vector.extract_strided_slice %4 {offsets = [0, 0], sizes = [4, 1054], strides = [1, 1]} : vector<4x1088xf32> to vector<4x1054xf32>
    %c4_11 = arith.constant 4 : index
    %c34 = arith.constant 34 : index
    %12 = vector.load %arg12[%c4_11, %c34] : memref<36x1088xf32, #tpu.memory_space<vmem>>, vector<4x1054xf32>
    tpu.vector_store %arg12[%c4_11, %c34], %11 {strides = array<i32>} : memref<36x1088xf32, #tpu.memory_space<vmem>>, vector<4x1054xf32>,
    %13 = vector.extract_strided_slice %5 {offsets = [0, 0], sizes = [4, 33], strides = [1, 1]} : vector<4x35xf32> to vector<4x33xf32>
    %c8 = arith.constant 8 : index
    %c0_12 = arith.constant 0 : index
    %14 = vector.load %arg12[%c8, %c0_12] : memref<36x1088xf32, #tpu.memory_space<vmem>>, vector<4x33xf32>
    tpu.vector_store %arg12[%c8, %c0_12], %13 {strides = array<i32>} : memref<36x1088xf32, #tpu.memory_space<vmem>>, vector<4x33xf32>,
    %15 = vector.extract_strided_slice %4 {offsets = [0, 0], sizes = [4, 1055], strides = [1, 1]} : vector<4x1088xf32> to vector<4x1055xf32>
    %c8_13 = arith.constant 8 : index
    %c33 = arith.constant 33 : index
    %16 = vector.load %arg12[%c8_13, %c33] : memref<36x1088xf32, #tpu.memory_space<vmem>>, vector<4x1055xf32>
    tpu.vector_store %arg12[%c8_13, %c33], %15 {strides = array<i32>} : memref<36x1088xf32, #tpu.memory_space<vmem>>, vector<4x1055xf32>,
    %17 = vector.extract_strided_slice %5 {offsets = [0, 0], sizes = [4, 1], strides = [1, 1]} : vector<4x35xf32> to vector<4x1xf32>
    %c12 = arith.constant 12 : index
    %c0_14 = arith.constant 0 : index
    %18 = vector.load %arg12[%c12, %c0_14] : memref<36x1088xf32, #tpu.memory_space<vmem>>, vector<4x1xf32>
    tpu.vector_store %arg12[%c12, %c0_14], %17 {strides = array<i32>} : memref<36x1088xf32, #tpu.memory_space<vmem>>, vector<4x1xf32>,
    %19 = vector.extract_strided_slice %4 {offsets = [0, 0], sizes = [4, 1087], strides = [1, 1]} : vector<4x1088xf32> to vector<4x1087xf32>
    %c12_15 = arith.constant 12 : index
    %c1 = arith.constant 1 : index
    %20 = vector.load %arg12[%c12_15, %c1] : memref<36x1088xf32, #tpu.memory_space<vmem>>, vector<4x1087xf32>
    tpu.vector_store %arg12[%c12_15, %c1], %19 {strides = array<i32>} : memref<36x1088xf32, #tpu.memory_space<vmem>>, vector<4x1087xf32>,
    %c16 = arith.constant 16 : index
    %c0_16 = arith.constant 0 : index
    %21 = vector.load %arg12[%c16, %c0_16] : memref<36x1088xf32, #tpu.memory_space<vmem>>, vector<4x1088xf32>
    tpu.vector_store %arg12[%c16, %c0_16], %4 {strides = array<i32>} : memref<36x1088xf32, #tpu.memory_space<vmem>>, vector<4x1088xf32>,
    %22 = vector.extract_strided_slice %4 {offsets = [0, 1], sizes = [4, 1087], strides = [1, 1]} : vector<4x1088xf32> to vector<4x1087xf32>
    %c20 = arith.constant 20 : index
    %c0_17 = arith.constant 0 : index
    %23 = vector.load %arg12[%c20, %c0_17] : memref<36x1088xf32, #tpu.memory_space<vmem>>, vector<4x1087xf32>
    tpu.vector_store %arg12[%c20, %c0_17], %22 {strides = array<i32>} : memref<36x1088xf32, #tpu.memory_space<vmem>>, vector<4x1087xf32>,
    %24 = vector.extract_strided_slice %5 {offsets = [0, 0], sizes = [4, 1], strides = [1, 1]} : vector<4x35xf32> to vector<4x1xf32>
    %c20_18 = arith.constant 20 : index
    %c1087 = arith.constant 1087 : index
    %25 = vector.load %arg12[%c20_18, %c1087] : memref<36x1088xf32, #tpu.memory_space<vmem>>, vector<4x1xf32>
    tpu.vector_store %arg12[%c20_18, %c1087], %24 {strides = array<i32>} : memref<36x1088xf32, #tpu.memory_space<vmem>>, vector<4x1xf32>,
    %26 = vector.extract_strided_slice %4 {offsets = [0, 33], sizes = [4, 1055], strides = [1, 1]} : vector<4x1088xf32> to vector<4x1055xf32>
    %c24 = arith.constant 24 : index
    %c0_19 = arith.constant 0 : index
    %27 = vector.load %arg12[%c24, %c0_19] : memref<36x1088xf32, #tpu.memory_space<vmem>>, vector<4x1055xf32>
    tpu.vector_store %arg12[%c24, %c0_19], %26 {strides = array<i32>} : memref<36x1088xf32, #tpu.memory_space<vmem>>, vector<4x1055xf32>,
    %28 = vector.extract_strided_slice %5 {offsets = [0, 0], sizes = [4, 33], strides = [1, 1]} : vector<4x35xf32> to vector<4x33xf32>
    %c24_20 = arith.constant 24 : index
    %c1055 = arith.constant 1055 : index
    %29 = vector.load %arg12[%c24_20, %c1055] : memref<36x1088xf32, #tpu.memory_space<vmem>>, vector<4x33xf32>
    tpu.vector_store %arg12[%c24_20, %c1055], %28 {strides = array<i32>} : memref<36x1088xf32, #tpu.memory_space<vmem>>, vector<4x33xf32>,
    %30 = vector.extract_strided_slice %4 {offsets = [0, 34], sizes = [4, 1054], strides = [1, 1]} : vector<4x1088xf32> to vector<4x1054xf32>
    %c28 = arith.constant 28 : index
    %c0_21 = arith.constant 0 : index
    %31 = vector.load %arg12[%c28, %c0_21] : memref<36x1088xf32, #tpu.memory_space<vmem>>, vector<4x1054xf32>
    tpu.vector_store %arg12[%c28, %c0_21], %30 {strides = array<i32>} : memref<36x1088xf32, #tpu.memory_space<vmem>>, vector<4x1054xf32>,
    %32 = vector.extract_strided_slice %5 {offsets = [0, 0], sizes = [4, 34], strides = [1, 1]} : vector<4x35xf32> to vector<4x34xf32>
    %c28_22 = arith.constant 28 : index
    %c1054 = arith.constant 1054 : index
    %33 = vector.load %arg12[%c28_22, %c1054] : memref<36x1088xf32, #tpu.memory_space<vmem>>, vector<4x34xf32>
    tpu.vector_store %arg12[%c28_22, %c1054], %32 {strides = array<i32>} : memref<36x1088xf32, #tpu.memory_space<vmem>>, vector<4x34xf32>,
    %34 = vector.extract_strided_slice %4 {offsets = [0, 35], sizes = [4, 1053], strides = [1, 1]} : vector<4x1088xf32> to vector<4x1053xf32>
    %c32 = arith.constant 32 : index
    %c0_23 = arith.constant 0 : index
    %35 = vector.load %arg12[%c32, %c0_23] : memref<36x1088xf32, #tpu.memory_space<vmem>>, vector<4x1053xf32>
    tpu.vector_store %arg12[%c32, %c0_23], %34 {strides = array<i32>} : memref<36x1088xf32, #tpu.memory_space<vmem>>, vector<4x1053xf32>,
    %c32_24 = arith.constant 32 : index
    %c1053 = arith.constant 1053 : index
    %36 = vector.load %arg12[%c32_24, %c1053] : memref<36x1088xf32, #tpu.memory_space<vmem>>, vector<4x35xf32>
    tpu.vector_store %arg12[%c32_24, %c1053], %5 {strides = array<i32>} : memref<36x1088xf32, #tpu.memory_space<vmem>>, vector<4x35xf32>,
    %c0_25 = arith.constant 0 : index
    %c0_26 = arith.constant 0 : index
    %37 = vector.load %arg3[%c0_25, %c0_26] : memref<8x36xf32, #tpu.memory_space<vmem>>, vector<8x36xf32>
    %c0_27 = arith.constant 0 : index
    %c0_28 = arith.constant 0 : index
    %38 = vector.load %arg12[%c0_27, %c0_28] : memref<36x1088xf32, #tpu.memory_space<vmem>>, vector<36x1088xf32>
    %cst_29 = arith.constant dense<0.000000e+00> : vector<8x1088xf32>
    %39 = tpu.matmul %37, %38, %cst_29 {dimension_numbers = #tpu.dot_dimension_numbers<[1], [0], [0], [1], [0, 0, 1, 1], [], []>} : vector<8x36xf32>, vector<36x1088xf32>, vector<8x1088xf32> -> vector<8x1088xf32>
    %c0_30 = arith.constant 0 : index
    %c0_31 = arith.constant 0 : index
    %40 = vector.load %arg4[%c0_30, %c0_31] : memref<8x1xf32, #tpu.memory_space<vmem>>, vector<8x1xf32>
    %41 = vector.broadcast %40 : vector<8x1xf32> to vector<8x1088xf32>
    %42 = arith.addf %39, %41 : vector<8x1088xf32>
    %cst_32 = arith.constant 0.000000e+00 : f32
    %43 = vector.broadcast %cst_32 : f32 to vector<8x1088xf32>
    %44 = arith.maximumf %42, %43 : vector<8x1088xf32>
    %c0_33 = arith.constant 0 : index
    %c0_34 = arith.constant 0 : index
    %c0_35 = arith.constant 0 : index
    %45 = vector.load %arg9[%c0_33, %c0_34, %c0_35] : memref<1x8x1088xf32, #tpu.memory_space<vmem>>, vector<1x8x1088xf32>
    %46 = vector.shape_cast %45 : vector<1x8x1088xf32> to vector<8x1088xf32>
    %47 = vector.shape_cast %44 : vector<8x1088xf32> to vector<1x8x1088xf32>
    tpu.vector_store %arg9[%c0_33, %c0_34, %c0_35], %47 {strides = array<i32>} : memref<1x8x1088xf32, #tpu.memory_space<vmem>>, vector<1x8x1088xf32>,
    %48 = vector.broadcast %0 : vector<1x1088xf32> to vector<8x1088xf32>
    %49 = arith.mulf %44, %48 : vector<8x1088xf32>
    %cst_36 = arith.constant 0.000000e+00 : f32
    %50 = vector.broadcast %cst_36 : f32 to vector<8x35xf32>
    %c0_37 = arith.constant 0 : index
    %c0_38 = arith.constant 0 : index
    %51 = vector.load %arg13[%c0_37, %c0_38] : memref<72x1088xf32, #tpu.memory_space<vmem>>, vector<8x35xf32>
    tpu.vector_store %arg13[%c0_37, %c0_38], %50 {strides = array<i32>} : memref<72x1088xf32, #tpu.memory_space<vmem>>, vector<8x35xf32>,
    %52 = vector.extract_strided_slice %49 {offsets = [0, 0], sizes = [8, 1053], strides = [1, 1]} : vector<8x1088xf32> to vector<8x1053xf32>
    %c0_39 = arith.constant 0 : index
    %c35_40 = arith.constant 35 : index
    %53 = vector.load %arg13[%c0_39, %c35_40] : memref<72x1088xf32, #tpu.memory_space<vmem>>, vector<8x1053xf32>
    tpu.vector_store %arg13[%c0_39, %c35_40], %52 {strides = array<i32>} : memref<72x1088xf32, #tpu.memory_space<vmem>>, vector<8x1053xf32>,
    %54 = vector.extract_strided_slice %50 {offsets = [0, 0], sizes = [8, 34], strides = [1, 1]} : vector<8x35xf32> to vector<8x34xf32>
    %c8_41 = arith.constant 8 : index
    %c0_42 = arith.constant 0 : index
    %55 = vector.load %arg13[%c8_41, %c0_42] : memref<72x1088xf32, #tpu.memory_space<vmem>>, vector<8x34xf32>
    tpu.vector_store %arg13[%c8_41, %c0_42], %54 {strides = array<i32>} : memref<72x1088xf32, #tpu.memory_space<vmem>>, vector<8x34xf32>,
    %56 = vector.extract_strided_slice %49 {offsets = [0, 0], sizes = [8, 1054], strides = [1, 1]} : vector<8x1088xf32> to vector<8x1054xf32>
    %c8_43 = arith.constant 8 : index
    %c34_44 = arith.constant 34 : index
    %57 = vector.load %arg13[%c8_43, %c34_44] : memref<72x1088xf32, #tpu.memory_space<vmem>>, vector<8x1054xf32>
    tpu.vector_store %arg13[%c8_43, %c34_44], %56 {strides = array<i32>} : memref<72x1088xf32, #tpu.memory_space<vmem>>, vector<8x1054xf32>,
    %58 = vector.extract_strided_slice %50 {offsets = [0, 0], sizes = [8, 33], strides = [1, 1]} : vector<8x35xf32> to vector<8x33xf32>
    %c16_45 = arith.constant 16 : index
    %c0_46 = arith.constant 0 : index
    %59 = vector.load %arg13[%c16_45, %c0_46] : memref<72x1088xf32, #tpu.memory_space<vmem>>, vector<8x33xf32>
    tpu.vector_store %arg13[%c16_45, %c0_46], %58 {strides = array<i32>} : memref<72x1088xf32, #tpu.memory_space<vmem>>, vector<8x33xf32>,
    %60 = vector.extract_strided_slice %49 {offsets = [0, 0], sizes = [8, 1055], strides = [1, 1]} : vector<8x1088xf32> to vector<8x1055xf32>
    %c16_47 = arith.constant 16 : index
    %c33_48 = arith.constant 33 : index
    %61 = vector.load %arg13[%c16_47, %c33_48] : memref<72x1088xf32, #tpu.memory_space<vmem>>, vector<8x1055xf32>
    tpu.vector_store %arg13[%c16_47, %c33_48], %60 {strides = array<i32>} : memref<72x1088xf32, #tpu.memory_space<vmem>>, vector<8x1055xf32>,
    %62 = vector.extract_strided_slice %50 {offsets = [0, 0], sizes = [8, 1], strides = [1, 1]} : vector<8x35xf32> to vector<8x1xf32>
    %c24_49 = arith.constant 24 : index
    %c0_50 = arith.constant 0 : index
    %63 = vector.load %arg13[%c24_49, %c0_50] : memref<72x1088xf32, #tpu.memory_space<vmem>>, vector<8x1xf32>
    tpu.vector_store %arg13[%c24_49, %c0_50], %62 {strides = array<i32>} : memref<72x1088xf32, #tpu.memory_space<vmem>>, vector<8x1xf32>,
    %64 = vector.extract_strided_slice %49 {offsets = [0, 0], sizes = [8, 1087], strides = [1, 1]} : vector<8x1088xf32> to vector<8x1087xf32>
    %c24_51 = arith.constant 24 : index
    %c1_52 = arith.constant 1 : index
    %65 = vector.load %arg13[%c24_51, %c1_52] : memref<72x1088xf32, #tpu.memory_space<vmem>>, vector<8x1087xf32>
    tpu.vector_store %arg13[%c24_51, %c1_52], %64 {strides = array<i32>} : memref<72x1088xf32, #tpu.memory_space<vmem>>, vector<8x1087xf32>,
    %c32_53 = arith.constant 32 : index
    %c0_54 = arith.constant 0 : index
    %66 = vector.load %arg13[%c32_53, %c0_54] : memref<72x1088xf32, #tpu.memory_space<vmem>>, vector<8x1088xf32>
    tpu.vector_store %arg13[%c32_53, %c0_54], %49 {strides = array<i32>} : memref<72x1088xf32, #tpu.memory_space<vmem>>, vector<8x1088xf32>,
    %67 = vector.extract_strided_slice %49 {offsets = [0, 1], sizes = [8, 1087], strides = [1, 1]} : vector<8x1088xf32> to vector<8x1087xf32>
    %c40 = arith.constant 40 : index
    %c0_55 = arith.constant 0 : index
    %68 = vector.load %arg13[%c40, %c0_55] : memref<72x1088xf32, #tpu.memory_space<vmem>>, vector<8x1087xf32>
    tpu.vector_store %arg13[%c40, %c0_55], %67 {strides = array<i32>} : memref<72x1088xf32, #tpu.memory_space<vmem>>, vector<8x1087xf32>,
    %69 = vector.extract_strided_slice %50 {offsets = [0, 0], sizes = [8, 1], strides = [1, 1]} : vector<8x35xf32> to vector<8x1xf32>
    %c40_56 = arith.constant 40 : index
    %c1087_57 = arith.constant 1087 : index
    %70 = vector.load %arg13[%c40_56, %c1087_57] : memref<72x1088xf32, #tpu.memory_space<vmem>>, vector<8x1xf32>
    tpu.vector_store %arg13[%c40_56, %c1087_57], %69 {strides = array<i32>} : memref<72x1088xf32, #tpu.memory_space<vmem>>, vector<8x1xf32>,
    %71 = vector.extract_strided_slice %49 {offsets = [0, 33], sizes = [8, 1055], strides = [1, 1]} : vector<8x1088xf32> to vector<8x1055xf32>
    %c48 = arith.constant 48 : index
    %c0_58 = arith.constant 0 : index
    %72 = vector.load %arg13[%c48, %c0_58] : memref<72x1088xf32, #tpu.memory_space<vmem>>, vector<8x1055xf32>
    tpu.vector_store %arg13[%c48, %c0_58], %71 {strides = array<i32>} : memref<72x1088xf32, #tpu.memory_space<vmem>>, vector<8x1055xf32>,
    %73 = vector.extract_strided_slice %50 {offsets = [0, 0], sizes = [8, 33], strides = [1, 1]} : vector<8x35xf32> to vector<8x33xf32>
    %c48_59 = arith.constant 48 : index
    %c1055_60 = arith.constant 1055 : index
    %74 = vector.load %arg13[%c48_59, %c1055_60] : memref<72x1088xf32, #tpu.memory_space<vmem>>, vector<8x33xf32>
    tpu.vector_store %arg13[%c48_59, %c1055_60], %73 {strides = array<i32>} : memref<72x1088xf32, #tpu.memory_space<vmem>>, vector<8x33xf32>,
    %75 = vector.extract_strided_slice %49 {offsets = [0, 34], sizes = [8, 1054], strides = [1, 1]} : vector<8x1088xf32> to vector<8x1054xf32>
    %c56 = arith.constant 56 : index
    %c0_61 = arith.constant 0 : index
    %76 = vector.load %arg13[%c56, %c0_61] : memref<72x1088xf32, #tpu.memory_space<vmem>>, vector<8x1054xf32>
    tpu.vector_store %arg13[%c56, %c0_61], %75 {strides = array<i32>} : memref<72x1088xf32, #tpu.memory_space<vmem>>, vector<8x1054xf32>,
    %77 = vector.extract_strided_slice %50 {offsets = [0, 0], sizes = [8, 34], strides = [1, 1]} : vector<8x35xf32> to vector<8x34xf32>
    %c56_62 = arith.constant 56 : index
    %c1054_63 = arith.constant 1054 : index
    %78 = vector.load %arg13[%c56_62, %c1054_63] : memref<72x1088xf32, #tpu.memory_space<vmem>>, vector<8x34xf32>
    tpu.vector_store %arg13[%c56_62, %c1054_63], %77 {strides = array<i32>} : memref<72x1088xf32, #tpu.memory_space<vmem>>, vector<8x34xf32>,
    %79 = vector.extract_strided_slice %49 {offsets = [0, 35], sizes = [8, 1053], strides = [1, 1]} : vector<8x1088xf32> to vector<8x1053xf32>
    %c64 = arith.constant 64 : index
    %c0_64 = arith.constant 0 : index
    %80 = vector.load %arg13[%c64, %c0_64] : memref<72x1088xf32, #tpu.memory_space<vmem>>, vector<8x1053xf32>
    tpu.vector_store %arg13[%c64, %c0_64], %79 {strides = array<i32>} : memref<72x1088xf32, #tpu.memory_space<vmem>>, vector<8x1053xf32>,
    %c64_65 = arith.constant 64 : index
    %c1053_66 = arith.constant 1053 : index
    %81 = vector.load %arg13[%c64_65, %c1053_66] : memref<72x1088xf32, #tpu.memory_space<vmem>>, vector<8x35xf32>
    tpu.vector_store %arg13[%c64_65, %c1053_66], %50 {strides = array<i32>} : memref<72x1088xf32, #tpu.memory_space<vmem>>, vector<8x35xf32>,
    %c0_67 = arith.constant 0 : index
    %c0_68 = arith.constant 0 : index
    %82 = vector.load %arg5[%c0_67, %c0_68] : memref<16x72xf32, #tpu.memory_space<vmem>>, vector<16x72xf32>
    %c0_69 = arith.constant 0 : index
    %c0_70 = arith.constant 0 : index
    %83 = vector.load %arg13[%c0_69, %c0_70] : memref<72x1088xf32, #tpu.memory_space<vmem>>, vector<72x1088xf32>
    %cst_71 = arith.constant dense<0.000000e+00> : vector<16x1088xf32>
    %84 = tpu.matmul %82, %83, %cst_71 {dimension_numbers = #tpu.dot_dimension_numbers<[1], [0], [0], [1], [0, 0, 1, 1], [], []>} : vector<16x72xf32>, vector<72x1088xf32>, vector<16x1088xf32> -> vector<16x1088xf32>
    %cst_72 = arith.constant 0.000000e+00 : f32
    %85 = vector.broadcast %cst_72 : f32 to vector<16x1088xf32>
    %86 = arith.maximumf %84, %85 : vector<16x1088xf32>
    %c0_73 = arith.constant 0 : index
    %c0_74 = arith.constant 0 : index
    %c0_75 = arith.constant 0 : index
    %87 = vector.load %arg10[%c0_73, %c0_74, %c0_75] : memref<1x16x1088xf32, #tpu.memory_space<vmem>>, vector<1x16x1088xf32>
    %88 = vector.shape_cast %87 : vector<1x16x1088xf32> to vector<16x1088xf32>
    %89 = vector.shape_cast %86 : vector<16x1088xf32> to vector<1x16x1088xf32>
    tpu.vector_store %arg10[%c0_73, %c0_74, %c0_75], %89 {strides = array<i32>} : memref<1x16x1088xf32, #tpu.memory_space<vmem>>, vector<1x16x1088xf32>,
    %90 = vector.broadcast %0 : vector<1x1088xf32> to vector<16x1088xf32>
    %91 = arith.mulf %86, %90 : vector<16x1088xf32>
    %cst_76 = arith.constant 0.000000e+00 : f32
    %92 = vector.broadcast %cst_76 : f32 to vector<16x35xf32>
    %c0_77 = arith.constant 0 : index
    %c0_78 = arith.constant 0 : index
    %93 = vector.load %arg14[%c0_77, %c0_78] : memref<144x1088xf32, #tpu.memory_space<vmem>>, vector<16x35xf32>
    tpu.vector_store %arg14[%c0_77, %c0_78], %92 {strides = array<i32>} : memref<144x1088xf32, #tpu.memory_space<vmem>>, vector<16x35xf32>,
    %94 = vector.extract_strided_slice %91 {offsets = [0, 0], sizes = [16, 1053], strides = [1, 1]} : vector<16x1088xf32> to vector<16x1053xf32>
    %c0_79 = arith.constant 0 : index
    %c35_80 = arith.constant 35 : index
    %95 = vector.load %arg14[%c0_79, %c35_80] : memref<144x1088xf32, #tpu.memory_space<vmem>>, vector<16x1053xf32>
    tpu.vector_store %arg14[%c0_79, %c35_80], %94 {strides = array<i32>} : memref<144x1088xf32, #tpu.memory_space<vmem>>, vector<16x1053xf32>,
    %96 = vector.extract_strided_slice %92 {offsets = [0, 0], sizes = [16, 34], strides = [1, 1]} : vector<16x35xf32> to vector<16x34xf32>
    %c16_81 = arith.constant 16 : index
    %c0_82 = arith.constant 0 : index
    %97 = vector.load %arg14[%c16_81, %c0_82] : memref<144x1088xf32, #tpu.memory_space<vmem>>, vector<16x34xf32>
    tpu.vector_store %arg14[%c16_81, %c0_82], %96 {strides = array<i32>} : memref<144x1088xf32, #tpu.memory_space<vmem>>, vector<16x34xf32>,
    %98 = vector.extract_strided_slice %91 {offsets = [0, 0], sizes = [16, 1054], strides = [1, 1]} : vector<16x1088xf32> to vector<16x1054xf32>
    %c16_83 = arith.constant 16 : index
    %c34_84 = arith.constant 34 : index
    %99 = vector.load %arg14[%c16_83, %c34_84] : memref<144x1088xf32, #tpu.memory_space<vmem>>, vector<16x1054xf32>
    tpu.vector_store %arg14[%c16_83, %c34_84], %98 {strides = array<i32>} : memref<144x1088xf32, #tpu.memory_space<vmem>>, vector<16x1054xf32>,
    %100 = vector.extract_strided_slice %92 {offsets = [0, 0], sizes = [16, 33], strides = [1, 1]} : vector<16x35xf32> to vector<16x33xf32>
    %c32_85 = arith.constant 32 : index
    %c0_86 = arith.constant 0 : index
    %101 = vector.load %arg14[%c32_85, %c0_86] : memref<144x1088xf32, #tpu.memory_space<vmem>>, vector<16x33xf32>
    tpu.vector_store %arg14[%c32_85, %c0_86], %100 {strides = array<i32>} : memref<144x1088xf32, #tpu.memory_space<vmem>>, vector<16x33xf32>,
    %102 = vector.extract_strided_slice %91 {offsets = [0, 0], sizes = [16, 1055], strides = [1, 1]} : vector<16x1088xf32> to vector<16x1055xf32>
    %c32_87 = arith.constant 32 : index
    %c33_88 = arith.constant 33 : index
    %103 = vector.load %arg14[%c32_87, %c33_88] : memref<144x1088xf32, #tpu.memory_space<vmem>>, vector<16x1055xf32>
    tpu.vector_store %arg14[%c32_87, %c33_88], %102 {strides = array<i32>} : memref<144x1088xf32, #tpu.memory_space<vmem>>, vector<16x1055xf32>,
    %104 = vector.extract_strided_slice %92 {offsets = [0, 0], sizes = [16, 1], strides = [1, 1]} : vector<16x35xf32> to vector<16x1xf32>
    %c48_89 = arith.constant 48 : index
    %c0_90 = arith.constant 0 : index
    %105 = vector.load %arg14[%c48_89, %c0_90] : memref<144x1088xf32, #tpu.memory_space<vmem>>, vector<16x1xf32>
    tpu.vector_store %arg14[%c48_89, %c0_90], %104 {strides = array<i32>} : memref<144x1088xf32, #tpu.memory_space<vmem>>, vector<16x1xf32>,
    %106 = vector.extract_strided_slice %91 {offsets = [0, 0], sizes = [16, 1087], strides = [1, 1]} : vector<16x1088xf32> to vector<16x1087xf32>
    %c48_91 = arith.constant 48 : index
    %c1_92 = arith.constant 1 : index
    %107 = vector.load %arg14[%c48_91, %c1_92] : memref<144x1088xf32, #tpu.memory_space<vmem>>, vector<16x1087xf32>
    tpu.vector_store %arg14[%c48_91, %c1_92], %106 {strides = array<i32>} : memref<144x1088xf32, #tpu.memory_space<vmem>>, vector<16x1087xf32>,
    %c64_93 = arith.constant 64 : index
    %c0_94 = arith.constant 0 : index
    %108 = vector.load %arg14[%c64_93, %c0_94] : memref<144x1088xf32, #tpu.memory_space<vmem>>, vector<16x1088xf32>
    tpu.vector_store %arg14[%c64_93, %c0_94], %91 {strides = array<i32>} : memref<144x1088xf32, #tpu.memory_space<vmem>>, vector<16x1088xf32>,
    %109 = vector.extract_strided_slice %91 {offsets = [0, 1], sizes = [16, 1087], strides = [1, 1]} : vector<16x1088xf32> to vector<16x1087xf32>
    %c80 = arith.constant 80 : index
    %c0_95 = arith.constant 0 : index
    %110 = vector.load %arg14[%c80, %c0_95] : memref<144x1088xf32, #tpu.memory_space<vmem>>, vector<16x1087xf32>
    tpu.vector_store %arg14[%c80, %c0_95], %109 {strides = array<i32>} : memref<144x1088xf32, #tpu.memory_space<vmem>>, vector<16x1087xf32>,
    %111 = vector.extract_strided_slice %92 {offsets = [0, 0], sizes = [16, 1], strides = [1, 1]} : vector<16x35xf32> to vector<16x1xf32>
    %c80_96 = arith.constant 80 : index
    %c1087_97 = arith.constant 1087 : index
    %112 = vector.load %arg14[%c80_96, %c1087_97] : memref<144x1088xf32, #tpu.memory_space<vmem>>, vector<16x1xf32>
    tpu.vector_store %arg14[%c80_96, %c1087_97], %111 {strides = array<i32>} : memref<144x1088xf32, #tpu.memory_space<vmem>>, vector<16x1xf32>,
    %113 = vector.extract_strided_slice %91 {offsets = [0, 33], sizes = [16, 1055], strides = [1, 1]} : vector<16x1088xf32> to vector<16x1055xf32>
    %c96 = arith.constant 96 : index
    %c0_98 = arith.constant 0 : index
    %114 = vector.load %arg14[%c96, %c0_98] : memref<144x1088xf32, #tpu.memory_space<vmem>>, vector<16x1055xf32>
    tpu.vector_store %arg14[%c96, %c0_98], %113 {strides = array<i32>} : memref<144x1088xf32, #tpu.memory_space<vmem>>, vector<16x1055xf32>,
    %115 = vector.extract_strided_slice %92 {offsets = [0, 0], sizes = [16, 33], strides = [1, 1]} : vector<16x35xf32> to vector<16x33xf32>
    %c96_99 = arith.constant 96 : index
    %c1055_100 = arith.constant 1055 : index
    %116 = vector.load %arg14[%c96_99, %c1055_100] : memref<144x1088xf32, #tpu.memory_space<vmem>>, vector<16x33xf32>
    tpu.vector_store %arg14[%c96_99, %c1055_100], %115 {strides = array<i32>} : memref<144x1088xf32, #tpu.memory_space<vmem>>, vector<16x33xf32>,
    %117 = vector.extract_strided_slice %91 {offsets = [0, 34], sizes = [16, 1054], strides = [1, 1]} : vector<16x1088xf32> to vector<16x1054xf32>
    %c112 = arith.constant 112 : index
    %c0_101 = arith.constant 0 : index
    %118 = vector.load %arg14[%c112, %c0_101] : memref<144x1088xf32, #tpu.memory_space<vmem>>, vector<16x1054xf32>
    tpu.vector_store %arg14[%c112, %c0_101], %117 {strides = array<i32>} : memref<144x1088xf32, #tpu.memory_space<vmem>>, vector<16x1054xf32>,
    %119 = vector.extract_strided_slice %92 {offsets = [0, 0], sizes = [16, 34], strides = [1, 1]} : vector<16x35xf32> to vector<16x34xf32>
    %c112_102 = arith.constant 112 : index
    %c1054_103 = arith.constant 1054 : index
    %120 = vector.load %arg14[%c112_102, %c1054_103] : memref<144x1088xf32, #tpu.memory_space<vmem>>, vector<16x34xf32>
    tpu.vector_store %arg14[%c112_102, %c1054_103], %119 {strides = array<i32>} : memref<144x1088xf32, #tpu.memory_space<vmem>>, vector<16x34xf32>,
    %121 = vector.extract_strided_slice %91 {offsets = [0, 35], sizes = [16, 1053], strides = [1, 1]} : vector<16x1088xf32> to vector<16x1053xf32>
    %c128 = arith.constant 128 : index
    %c0_104 = arith.constant 0 : index
    %122 = vector.load %arg14[%c128, %c0_104] : memref<144x1088xf32, #tpu.memory_space<vmem>>, vector<16x1053xf32>
    tpu.vector_store %arg14[%c128, %c0_104], %121 {strides = array<i32>} : memref<144x1088xf32, #tpu.memory_space<vmem>>, vector<16x1053xf32>,
    %c128_105 = arith.constant 128 : index
    %c1053_106 = arith.constant 1053 : index
    %123 = vector.load %arg14[%c128_105, %c1053_106] : memref<144x1088xf32, #tpu.memory_space<vmem>>, vector<16x35xf32>
    tpu.vector_store %arg14[%c128_105, %c1053_106], %92 {strides = array<i32>} : memref<144x1088xf32, #tpu.memory_space<vmem>>, vector<16x35xf32>,
    %c0_107 = arith.constant 0 : index
    %c0_108 = arith.constant 0 : index
    %124 = vector.load %arg6[%c0_107, %c0_108] : memref<16x144xf32, #tpu.memory_space<vmem>>, vector<16x144xf32>
    %c0_109 = arith.constant 0 : index
    %c0_110 = arith.constant 0 : index
    %125 = vector.load %arg14[%c0_109, %c0_110] : memref<144x1088xf32, #tpu.memory_space<vmem>>, vector<144x1088xf32>
    %cst_111 = arith.constant dense<0.000000e+00> : vector<16x1088xf32>
    %126 = tpu.matmul %124, %125, %cst_111 {dimension_numbers = #tpu.dot_dimension_numbers<[1], [0], [0], [1], [0, 0, 1, 1], [], []>} : vector<16x144xf32>, vector<144x1088xf32>, vector<16x1088xf32> -> vector<16x1088xf32>
    %c0_112 = arith.constant 0 : index
    %c0_113 = arith.constant 0 : index
    %127 = vector.load %arg7[%c0_112, %c0_113] : memref<16x1xf32, #tpu.memory_space<vmem>>, vector<16x1xf32>
    %128 = vector.broadcast %127 : vector<16x1xf32> to vector<16x1088xf32>
    %129 = arith.addf %126, %128 : vector<16x1088xf32>
    %cst_114 = arith.constant 0.000000e+00 : f32
    %130 = vector.broadcast %cst_114 : f32 to vector<16x1088xf32>
    %131 = arith.maximumf %129, %130 : vector<16x1088xf32>
    %c0_115 = arith.constant 0 : index
    %c0_116 = arith.constant 0 : index
    %c0_117 = arith.constant 0 : index
    %132 = vector.load %arg11[%c0_115, %c0_116, %c0_117] : memref<1x16x1088xf32, #tpu.memory_space<vmem>>, vector<1x16x1088xf32>
    %133 = vector.shape_cast %132 : vector<1x16x1088xf32> to vector<16x1088xf32>
    %134 = vector.shape_cast %131 : vector<16x1088xf32> to vector<1x16x1088xf32>
    tpu.vector_store %arg11[%c0_115, %c0_116, %c0_117], %134 {strides = array<i32>} : memref<1x16x1088xf32, #tpu.memory_space<vmem>>, vector<1x16x1088xf32>,
    return
  }
  func.func @transform_0(%arg0: i32) -> (i32, i32, i32) {
    %c0_i32 = arith.constant 0 : i32
    %c0_i32_0 = arith.constant 0 : i32
    %c0_i32_1 = arith.constant 0 : i32
    return %arg0, %c0_i32, %c0_i32_0 : i32, i32, i32
  }
  func.func @transform_1(%arg0: i32) -> (i32, i32) {
    %c0_i32 = arith.constant 0 : i32
    %c0_i32_0 = arith.constant 0 : i32
    %c0_i32_1 = arith.constant 0 : i32
    return %c0_i32, %c0_i32_0 : i32, i32
  }
  func.func @transform_2(%arg0: i32) -> (i32, i32) {
    %c0_i32 = arith.constant 0 : i32
    %c0_i32_0 = arith.constant 0 : i32
    %c0_i32_1 = arith.constant 0 : i32
    return %c0_i32, %c0_i32_0 : i32, i32
  }
  func.func @transform_3(%arg0: i32) -> (i32, i32) {
    %c0_i32 = arith.constant 0 : i32
    %c0_i32_0 = arith.constant 0 : i32
    %c0_i32_1 = arith.constant 0 : i32
    return %c0_i32, %c0_i32_0 : i32, i32
  }
  func.func @transform_4(%arg0: i32) -> (i32, i32) {
    %c0_i32 = arith.constant 0 : i32
    %c0_i32_0 = arith.constant 0 : i32
    %c0_i32_1 = arith.constant 0 : i32
    return %c0_i32, %c0_i32_0 : i32, i32
  }
  func.func @transform_5(%arg0: i32) -> (i32, i32) {
    %c0_i32 = arith.constant 0 : i32
    %c0_i32_0 = arith.constant 0 : i32
    %c0_i32_1 = arith.constant 0 : i32
    return %c0_i32, %c0_i32_0 : i32, i32
  }
  func.func @transform_6(%arg0: i32) -> (i32, i32) {
    %c0_i32 = arith.constant 0 : i32
    %c0_i32_0 = arith.constant 0 : i32
    %c0_i32_1 = arith.constant 0 : i32
    return %c0_i32, %c0_i32_0 : i32, i32
  }
  func.func @transform_7(%arg0: i32) -> (i32, i32) {
    %c0_i32 = arith.constant 0 : i32
    %c0_i32_0 = arith.constant 0 : i32
    %c0_i32_1 = arith.constant 0 : i32
    return %c0_i32, %c0_i32_0 : i32, i32
  }
  func.func @transform_8(%arg0: i32) -> (i32, i32, i32) {
    %c0_i32 = arith.constant 0 : i32
    %c0_i32_0 = arith.constant 0 : i32
    %c0_i32_1 = arith.constant 0 : i32
    return %arg0, %c0_i32, %c0_i32_0 : i32, i32, i32
  }
  func.func @transform_9(%arg0: i32) -> (i32, i32, i32) {
    %c0_i32 = arith.constant 0 : i32
    %c0_i32_0 = arith.constant 0 : i32
    %c0_i32_1 = arith.constant 0 : i32
    return %arg0, %c0_i32, %c0_i32_0 : i32, i32, i32
  }
  func.func @transform_10(%arg0: i32) -> (i32, i32, i32) {
    %c0_i32 = arith.constant 0 : i32
    %c0_i32_0 = arith.constant 0 : i32
    %c0_i32_1 = arith.constant 0 : i32
    return %arg0, %c0_i32, %c0_i32_0 : i32, i32, i32
  }
}

</mosaic_0001>

<llo_original>
// kernel: vgg_upscaler_forward.1
$region0: #{vgg_upscaler_forward.1}
  #allocation0 [shape = 'u32[]', space=smem, size = 0x4, offset = 0x4, fixed_abs, tag = 'smem constant byte address 0x4 - core index']
  #allocation1 [shape = 'u32[144,128]{1,0:T(1,128)}', space=vmem, size = 0x12000, scoped, tag = 'internal scratch']
  #allocation2 [shape = 'f32[36,1088]{1,0:T(8,128)}', space=vmem, size = 0x2d000, scoped, tag = 'scratch operand']
  #allocation3 [shape = 'f32[72,1088]{1,0:T(8,128)}', space=vmem, size = 0x51000, scoped, tag = 'scratch operand']
  #allocation4 [shape = 'f32[144,1088]{1,0:T(8,128)}', space=vmem, size = 0xa2000, scoped, tag = 'scratch operand']
  %s0 = inlined_call_operand.vmem [shape: f32[2,4,256], index: 0, kind: input, shape index: {}]
  %s1 = inlined_call_operand.vmem [shape: f32[256,1088], index: 1, kind: input, shape index: {}]
  %s2 = inlined_call_operand.hbm [shape: f32[8,36], index: 2, kind: input, shape index: {}]
  %s3 = inlined_call_operand.vmem [shape: f32[8,1], index: 3, kind: input, shape index: {}]
  %s4 = inlined_call_operand.hbm [shape: f32[16,72], index: 4, kind: input, shape index: {}]
  %s5 = inlined_call_operand.hbm [shape: f32[16,144], index: 5, kind: input, shape index: {}]
  %s6 = inlined_call_operand.vmem [shape: f32[16,1], index: 6, kind: input, shape index: {}]
  %s7 = inlined_call_operand.hbm [shape: f32[1,1088], index: 7, kind: input, shape index: {}]
  %s8 = inlined_call_operand.vmem [shape: f32[2,8,1088], index: 8, kind: output, shape index: {0}]
  %s9 = inlined_call_operand.vmem [shape: f32[2,16,1088], index: 9, kind: output, shape index: {1}]
  %s10 = inlined_call_operand.vmem [shape: f32[2,16,1088], index: 10, kind: output, shape index: {2}]
  %11 = xla_tuple %s8, %s9, %s10
  %s12 = sld [smem:[#allocation0]]
  $region97: #{vgg_upscaler_forward.1} parent=0
    _
  %s14 = ssub.s32 1, %s12
  %s15 = scalar_select 0, %s14, %s12
  $region1: #{vgg_upscaler_forward.1} parent=0
    #allocation5 [shape = 'u8[4096]{0}', space=vmem, size = 0x1000, scoped, tag = 'input window, operand 2, single buffered']
    #allocation6 [shape = 's32[2]{0}', space=sflag, size = 0x8, scoped, tag = 'scoped memory for vgg_upscaler_forward.1']
    #allocation7 [shape = 'u8[8192]{0}', space=vmem, size = 0x2000, scoped, tag = 'input window, operand 4, single buffered']
    #allocation8 [shape = 's32[1]{0}', space=sflag, size = 0x4, scoped, tag = 'scoped memory for vgg_upscaler_forward.1']
    #allocation9 [shape = 'u8[16384]{0}', space=vmem, size = 0x4000, scoped, tag = 'input window, operand 5, single buffered']
    #allocation10 [shape = 'u8[4608]{0}', space=vmem, size = 0x1400, scoped, tag = 'input window, operand 7, single buffered']
    #allocation11 [shape = 's32[1]{0}', space=sflag, size = 0x4, scoped, tag = 'scoped memory for vgg_upscaler_forward.1']
    %16 = vsyncpa [#allocation6], 0
    %17 = vsyncpa [#allocation8], 0
    %18 = vsyncpa [#allocation11], 0
    loop: start=0, step=1, limit=4
    $region2: #{vgg_upscaler_forward.1} parent=1 // loop_pre_header
      _
    $region3: #{vgg_upscaler_forward.1} parent=1 // loop_header
      %s20 = sphi 0, %s24
      %p21 = scmp.ge.s32.totalorder %s20, 4
      %s30 = sphi 0, %s32
      %s33 = sphi 0, %s30
      %s34 = sphi 0, %s33
      %s50 = sphi 0, %s34
      %s54 = sphi 0, %s54
      %s56 = sphi 0, %s54
      %s57 = sphi 0, %s56
      %s71 = sphi 0, %s57
      %s75 = sphi 0, %s75
      %s77 = sphi 0, %s75
      %s78 = sphi 0, %s77
      %s92 = sphi 0, %s78
      %s96 = sphi 0, %s96
      %s98 = sphi 0, %s96
      %s99 = sphi 0, %s98
      %s113 = sphi 0, %s99
      %s117 = sphi 0, %s117
      %s119 = sphi 0, %s117
      %s120 = sphi 0, %s119
      %s134 = sphi 0, %s120
      %s138 = sphi 0, %s138
      %s140 = sphi 0, %s138
      %s141 = sphi 0, %s140
      %s155 = sphi 0, %s141
      %s159 = sphi 0, %s159
      %s161 = sphi 0, %s159
      %s162 = sphi 0, %s161
      %s176 = sphi 0, %s162
      %s180 = sphi 0, %s180
      %s182 = sphi 0, %s180
      %s183 = sphi 0, %s182
      %s197 = sphi 0, %s183
      %s203 = sphi 0, %s205
      %s206 = sphi 0, %s203
      %s207 = sphi 0, %s206
      %s223 = sphi 0, %s207
      %s229 = sphi 0, %s231
      %s232 = sphi 0, %s229
      %s233 = sphi 0, %s232
      %s249 = sphi 0, %s233
      %s255 = sphi 0, %s257
      %s258 = sphi 0, %s255
      %s259 = sphi 0, %s258
      %s275 = sphi 0, %s259
    $region4: #{vgg_upscaler_forward.1} parent=1 // loop_header_branch
      %23 = sbr.rel (%p21) target = $region8
    $region5: #{vgg_upscaler_forward.1} parent=1 // loop_body
      %s25 = ssub.s32 %s20, 1
      %s26 = ssub.s32 %s20, 2
      %s27 = sadd.s32 %s20, 1
      %s28 = ssub.s32 %s20, %s27
      %p29 = scmp.eq.s32.totalorder %s28, 0
      %s31 = sadd.s32 %s30, 1
      %s32 = scalar_select %p29, %s30, %s31
      %p35 = pneg %p29
      %p36 = scmp.eq.s32.totalorder %s20, 1
      %p37 = por %p35, %p36
      %p38 = scmp.ne.s32.totalorder %s30, %s33
      %p39 = scmp.eq.s32.totalorder %s20, 0
      %p40 = por %p38, %p39
      %p41 = scmp.ne.s32.totalorder %s30, %s33
      %p42 = scmp.eq.s32.totalorder %s25, 1
      %p43 = por %p41, %p42
      %p44 = scmp.ne.s32.totalorder %s33, %s34
      %p45 = scmp.eq.s32.totalorder %s25, 0
      %p46 = por %p44, %p45
      %p47 = scmp.ne.s32.totalorder %s33, %s34
      %p48 = scmp.eq.s32.totalorder %s26, 1
      %p49 = por %p47, %p48
      %p51 = scmp.ne.s32.totalorder %s34, %s50
      %p52 = scmp.eq.s32.totalorder %s26, 0
      %p53 = por %p51, %p52
      %s55 = sadd.s32 %s54, 1
      %p58 = scmp.eq.s32.totalorder %s20, 1
      %p59 = scmp.ne.s32.totalorder %s54, %s56
      %p60 = scmp.eq.s32.totalorder %s20, 0
      %p61 = por %p59, %p60
      %p62 = scmp.ne.s32.totalorder %s54, %s56
      %p63 = scmp.eq.s32.totalorder %s25, 1
      %p64 = por %p62, %p63
      %p65 = scmp.ne.s32.totalorder %s56, %s57
      %p66 = scmp.eq.s32.totalorder %s25, 0
      %p67 = por %p65, %p66
      %p68 = scmp.ne.s32.totalorder %s56, %s57
      %p69 = scmp.eq.s32.totalorder %s26, 1
      %p70 = por %p68, %p69
      %p72 = scmp.ne.s32.totalorder %s57, %s71
      %p73 = scmp.eq.s32.totalorder %s26, 0
      %p74 = por %p72, %p73
      %s76 = sadd.s32 %s75, 1
      %p79 = scmp.eq.s32.totalorder %s20, 1
      %p80 = scmp.ne.s32.totalorder %s75, %s77
      %p81 = scmp.eq.s32.totalorder %s20, 0
      %p82 = por %p80, %p81
      %p83 = scmp.ne.s32.totalorder %s75, %s77
      %p84 = scmp.eq.s32.totalorder %s25, 1
      %p85 = por %p83, %p84
      %p86 = scmp.ne.s32.totalorder %s77, %s78
      %p87 = scmp.eq.s32.totalorder %s25, 0
      %p88 = por %p86, %p87
      %p89 = scmp.ne.s32.totalorder %s77, %s78
      %p90 = scmp.eq.s32.totalorder %s26, 1
      %p91 = por %p89, %p90
      %p93 = scmp.ne.s32.totalorder %s78, %s92
      %p94 = scmp.eq.s32.totalorder %s26, 0
      %p95 = por %p93, %p94
      %s97 = sadd.s32 %s96, 1
      %p100 = scmp.eq.s32.totalorder %s20, 1
      %p101 = scmp.ne.s32.totalorder %s96, %s98
      %p102 = scmp.eq.s32.totalorder %s20, 0
      %p103 = por %p101, %p102
      %p104 = scmp.ne.s32.totalorder %s96, %s98
      %p105 = scmp.eq.s32.totalorder %s25, 1
      %p106 = por %p104, %p105
      %p107 = scmp.ne.s32.totalorder %s98, %s99
      %p108 = scmp.eq.s32.totalorder %s25, 0
      %p109 = por %p107, %p108
      %p110 = scmp.ne.s32.totalorder %s98, %s99
      %p111 = scmp.eq.s32.totalorder %s26, 1
      %p112 = por %p110, %p111
      %p114 = scmp.ne.s32.totalorder %s99, %s113
      %p115 = scmp.eq.s32.totalorder %s26, 0
      %p116 = por %p114, %p115
      %s118 = sadd.s32 %s117, 1
      %p121 = scmp.eq.s32.totalorder %s20, 1
      %p122 = scmp.ne.s32.totalorder %s117, %s119
      %p123 = scmp.eq.s32.totalorder %s20, 0
      %p124 = por %p122, %p123
      %p125 = scmp.ne.s32.totalorder %s117, %s119
      %p126 = scmp.eq.s32.totalorder %s25, 1
      %p127 = por %p125, %p126
      %p128 = scmp.ne.s32.totalorder %s119, %s120
      %p129 = scmp.eq.s32.totalorder %s25, 0
      %p130 = por %p128, %p129
      %p131 = scmp.ne.s32.totalorder %s119, %s120
      %p132 = scmp.eq.s32.totalorder %s26, 1
      %p133 = por %p131, %p132
      %p135 = scmp.ne.s32.totalorder %s120, %s134
      %p136 = scmp.eq.s32.totalorder %s26, 0
      %p137 = por %p135, %p136
      %s139 = sadd.s32 %s138, 1
      %p142 = scmp.eq.s32.totalorder %s20, 1
      %p143 = scmp.ne.s32.totalorder %s138, %s140
      %p144 = scmp.eq.s32.totalorder %s20, 0
      %p145 = por %p143, %p144
      %p146 = scmp.ne.s32.totalorder %s138, %s140
      %p147 = scmp.eq.s32.totalorder %s25, 1
      %p148 = por %p146, %p147
      %p149 = scmp.ne.s32.totalorder %s140, %s141
      %p150 = scmp.eq.s32.totalorder %s25, 0
      %p151 = por %p149, %p150
      %p152 = scmp.ne.s32.totalorder %s140, %s141
      %p153 = scmp.eq.s32.totalorder %s26, 1
      %p154 = por %p152, %p153
      %p156 = scmp.ne.s32.totalorder %s141, %s155
      %p157 = scmp.eq.s32.totalorder %s26, 0
      %p158 = por %p156, %p157
      %s160 = sadd.s32 %s159, 1
      %p163 = scmp.eq.s32.totalorder %s20, 1
      %p164 = scmp.ne.s32.totalorder %s159, %s161
      %p165 = scmp.eq.s32.totalorder %s20, 0
      %p166 = por %p164, %p165
      %p167 = scmp.ne.s32.totalorder %s159, %s161
      %p168 = scmp.eq.s32.totalorder %s25, 1
      %p169 = por %p167, %p168
      %p170 = scmp.ne.s32.totalorder %s161, %s162
      %p171 = scmp.eq.s32.totalorder %s25, 0
      %p172 = por %p170, %p171
      %p173 = scmp.ne.s32.totalorder %s161, %s162
      %p174 = scmp.eq.s32.totalorder %s26, 1
      %p175 = por %p173, %p174
      %p177 = scmp.ne.s32.totalorder %s162, %s176
      %p178 = scmp.eq.s32.totalorder %s26, 0
      %p179 = por %p177, %p178
      %s181 = sadd.s32 %s180, 1
      %p184 = scmp.eq.s32.totalorder %s20, 1
      %p185 = scmp.ne.s32.totalorder %s180, %s182
      %p186 = scmp.eq.s32.totalorder %s20, 0
      %p187 = por %p185, %p186
      %p188 = scmp.ne.s32.totalorder %s180, %s182
      %p189 = scmp.eq.s32.totalorder %s25, 1
      %p190 = por %p188, %p189
      %p191 = scmp.ne.s32.totalorder %s182, %s183
      %p192 = scmp.eq.s32.totalorder %s25, 0
      %p193 = por %p191, %p192
      %p194 = scmp.ne.s32.totalorder %s182, %s183
      %p195 = scmp.eq.s32.totalorder %s26, 1
      %p196 = por %p194, %p195
      %p198 = scmp.ne.s32.totalorder %s183, %s197
      %p199 = scmp.eq.s32.totalorder %s26, 0
      %p200 = por %p198, %p199
      %s201 = ssub.s32 %s20, %s27
      %p202 = scmp.eq.s32.totalorder %s201, 0
      %s204 = sadd.s32 %s203, 1
      %s205 = scalar_select %p202, %s203, %s204
      %p208 = pneg %p202
      %p209 = scmp.eq.s32.totalorder %s20, 1
      %p210 = por %p208, %p209
      %p211 = scmp.ne.s32.totalorder %s203, %s206
      %p212 = scmp.eq.s32.totalorder %s20, 0
      %p213 = por %p211, %p212
      %p214 = scmp.ne.s32.totalorder %s203, %s206
      %p215 = scmp.eq.s32.totalorder %s25, 1
      %p216 = por %p214, %p215
      %p217 = scmp.ne.s32.totalorder %s206, %s207
      %p218 = scmp.eq.s32.totalorder %s25, 0
      %p219 = por %p217, %p218
      %p220 = scmp.ne.s32.totalorder %s206, %s207
      %p221 = scmp.eq.s32.totalorder %s26, 1
      %p222 = por %p220, %p221
      %p224 = scmp.ne.s32.totalorder %s207, %s223
      %p225 = scmp.eq.s32.totalorder %s26, 0
      %p226 = por %p224, %p225
      %s227 = ssub.s32 %s20, %s27
      %p228 = scmp.eq.s32.totalorder %s227, 0
      %s230 = sadd.s32 %s229, 1
      %s231 = scalar_select %p228, %s229, %s230
      %p234 = pneg %p228
      %p235 = scmp.eq.s32.totalorder %s20, 1
      %p236 = por %p234, %p235
      %p237 = scmp.ne.s32.totalorder %s229, %s232
      %p238 = scmp.eq.s32.totalorder %s20, 0
      %p239 = por %p237, %p238
      %p240 = scmp.ne.s32.totalorder %s229, %s232
      %p241 = scmp.eq.s32.totalorder %s25, 1
      %p242 = por %p240, %p241
      %p243 = scmp.ne.s32.totalorder %s232, %s233
      %p244 = scmp.eq.s32.totalorder %s25, 0
      %p245 = por %p243, %p244
      %p246 = scmp.ne.s32.totalorder %s232, %s233
      %p247 = scmp.eq.s32.totalorder %s26, 1
      %p248 = por %p246, %p247
      %p250 = scmp.ne.s32.totalorder %s233, %s249
      %p251 = scmp.eq.s32.totalorder %s26, 0
      %p252 = por %p250, %p251
      %s253 = ssub.s32 %s20, %s27
      %p254 = scmp.eq.s32.totalorder %s253, 0
      %s256 = sadd.s32 %s255, 1
      %s257 = scalar_select %p254, %s255, %s256
      %p260 = pneg %p254
      %p261 = scmp.eq.s32.totalorder %s20, 1
      %p262 = por %p260, %p261
      %p263 = scmp.ne.s32.totalorder %s255, %s258
      %p264 = scmp.eq.s32.totalorder %s20, 0
      %p265 = por %p263, %p264
      %p266 = scmp.ne.s32.totalorder %s255, %s258
      %p267 = scmp.eq.s32.totalorder %s25, 1
      %p268 = por %p266, %p267
      %p269 = scmp.ne.s32.totalorder %s258, %s259
      %p270 = scmp.eq.s32.totalorder %s25, 0
      %p271 = por %p269, %p270
      %p272 = scmp.ne.s32.totalorder %s258, %s259
      %p273 = scmp.eq.s32.totalorder %s26, 1
      %p274 = por %p272, %p273
      %p276 = scmp.ne.s32.totalorder %s259, %s275
      %p277 = scmp.eq.s32.totalorder %s26, 0
      %p278 = por %p276, %p277
      %p279 = scmp.le.s32.totalorder 1, %s20
      %p280 = scmp.lt.s32.totalorder %s20, 3
      %p281 = pnand %p279, %p280
      %p282 = pneg %p281
      // Predicated region
      $region9: #{vgg_upscaler_forward.1} parent=5 // pred_check
        _
      $region10: #{vgg_upscaler_forward.1} parent=5 // pred_check_branch
        %284 = sbr.rel (%p281) target = $region12
      $region11: #{vgg_upscaler_forward.1} parent=5 // pred_region
        %s285 = ssub.s32 %s20, 1
        // Predicated region
        $region13: #{vgg_upscaler_forward.1} parent=11 // pred_check
          %p286 = pneg %p67
        $region14: #{vgg_upscaler_forward.1} parent=11 // pred_check_branch
          %288 = sbr.rel (%p286) target = $region16
        $region15: #{vgg_upscaler_forward.1} parent=11 // pred_region
          _
        $region16: #{vgg_upscaler_forward.1} parent=11 // pred_fallthru
          _
        // Predicated region
        $region17: #{vgg_upscaler_forward.1} parent=11 // pred_check
          %p289 = pneg %p88
        $region18: #{vgg_upscaler_forward.1} parent=11 // pred_check_branch
          %291 = sbr.rel (%p289) target = $region20
        $region19: #{vgg_upscaler_forward.1} parent=11 // pred_region
          %s293 = ssub.s32 128, 128
          %294 = vsyncadd [#allocation6], %s293
          %s296 = sshll.u32 [#allocation5], 4
          %s297 = int_to_ptr.vmem [resolvable:$true] %s296
          %299 = dma.hbm_to_vmem [thread:$0]  %s2, 128, %s297, [#allocation6]
        $region20: #{vgg_upscaler_forward.1} parent=11 // pred_fallthru
          _
        // Predicated region
        $region21: #{vgg_upscaler_forward.1} parent=11 // pred_check
          %p300 = pneg %p109
        $region22: #{vgg_upscaler_forward.1} parent=11 // pred_check_branch
          %302 = sbr.rel (%p300) target = $region24
        $region23: #{vgg_upscaler_forward.1} parent=11 // pred_region
          _
        $region24: #{vgg_upscaler_forward.1} parent=11 // pred_fallthru
          _
        // Predicated region
        $region25: #{vgg_upscaler_forward.1} parent=11 // pred_check
          %p303 = pneg %p130
        $region26: #{vgg_upscaler_forward.1} parent=11 // pred_check_branch
          %305 = sbr.rel (%p303) target = $region28
        $region27: #{vgg_upscaler_forward.1} parent=11 // pred_region
          %s307 = ssub.s32 256, 256
          %308 = vsyncadd [#allocation8], %s307
          %s309 = sshll.u32 [#allocation7], 4
          %s310 = int_to_ptr.vmem [resolvable:$true] %s309
          %315 = dma.hbm_to_vmem [thread:$0]  %s4, 256, %s310, [#allocation8], 128, 128, 8
        $region28: #{vgg_upscaler_forward.1} parent=11 // pred_fallthru
          _
        // Predicated region
        $region29: #{vgg_upscaler_forward.1} parent=11 // pred_check
          %p316 = pneg %p151
        $region30: #{vgg_upscaler_forward.1} parent=11 // pred_check_branch
          %318 = sbr.rel (%p316) target = $region32
        $region31: #{vgg_upscaler_forward.1} parent=11 // pred_region
          %s320 = ssub.s32 512, 512
          %321 = vsyncadd [#allocation8], %s320
          %s322 = sshll.u32 [#allocation9], 4
          %s323 = int_to_ptr.vmem [resolvable:$true] %s322
          %328 = dma.hbm_to_vmem [thread:$0]  %s5, 512, %s323, [#allocation8], 256, 256, 16
        $region32: #{vgg_upscaler_forward.1} parent=11 // pred_fallthru
          _
        // Predicated region
        $region33: #{vgg_upscaler_forward.1} parent=11 // pred_check
          %p329 = pneg %p172
        $region34: #{vgg_upscaler_forward.1} parent=11 // pred_check_branch
          %331 = sbr.rel (%p329) target = $region36
        $region35: #{vgg_upscaler_forward.1} parent=11 // pred_region
          _
        $region36: #{vgg_upscaler_forward.1} parent=11 // pred_fallthru
          _
        // Predicated region
        $region37: #{vgg_upscaler_forward.1} parent=11 // pred_check
          %p332 = pneg %p193
        $region38: #{vgg_upscaler_forward.1} parent=11 // pred_check_branch
          %334 = sbr.rel (%p332) target = $region40
        $region39: #{vgg_upscaler_forward.1} parent=11 // pred_region
          %s336 = ssub.s32 144, 144
          %337 = vsyncadd [#allocation11], %s336
          %s339 = sshll.u32 [#allocation10], 4
          %s340 = int_to_ptr.vmem [resolvable:$true] %s339
          %342 = dma.hbm_to_vmem [thread:$0]  %s7, 144, %s340, [#allocation11]
        $region40: #{vgg_upscaler_forward.1} parent=11 // pred_fallthru
          _
      $region12: #{vgg_upscaler_forward.1} parent=5 // pred_fallthru
        _
      %p343 = scmp.lt.s32.totalorder %s20, 2
      // Predicated region
      $region41: #{vgg_upscaler_forward.1} parent=5 // pred_check
        %p344 = pneg %p343
      $region42: #{vgg_upscaler_forward.1} parent=5 // pred_check_branch
        %346 = sbr.rel (%p344) target = $region44
      $region43: #{vgg_upscaler_forward.1} parent=5 // pred_region
        // Predicated region
        $region45: #{vgg_upscaler_forward.1} parent=43 // pred_check
          %p347 = pneg %p40
        $region46: #{vgg_upscaler_forward.1} parent=43 // pred_check_branch
          %349 = sbr.rel (%p347) target = $region48
        $region47: #{vgg_upscaler_forward.1} parent=43 // pred_region
          %p350 = scmp.lt.s32.totalorder %s20, 1
          %s351 = scalar_select %p350, %s20, 1
          %s352 = smul.addr %s351, 2
          %s353 = smul.addr %s352, 4
          %s354 = scalar_lea.vmem %s0, %s353
        $region48: #{vgg_upscaler_forward.1} parent=43 // pred_fallthru
          _
      $region44: #{vgg_upscaler_forward.1} parent=5 // pred_fallthru
        _
      %p355 = scmp.le.s32.totalorder 1, %s20
      %p356 = scmp.lt.s32.totalorder %s20, 3
      %p357 = pnand %p355, %p356
      %p358 = pneg %p357
      // Predicated region
      $region49: #{vgg_upscaler_forward.1} parent=5 // pred_check
        _
      $region50: #{vgg_upscaler_forward.1} parent=5 // pred_check_branch
        %360 = sbr.rel (%p357) target = $region52
      $region51: #{vgg_upscaler_forward.1} parent=5 // pred_region
        %s361 = ssub.s32 %s20, 1
        // Predicated region
        $region53: #{vgg_upscaler_forward.1} parent=51 // pred_check
          %p362 = pneg %p88
        $region54: #{vgg_upscaler_forward.1} parent=51 // pred_check_branch
          %364 = sbr.rel (%p362) target = $region56
        $region55: #{vgg_upscaler_forward.1} parent=51 // pred_region
          %365 = dma.done [#allocation6], 128
        $region56: #{vgg_upscaler_forward.1} parent=51 // pred_fallthru
          _
        // Predicated region
        $region57: #{vgg_upscaler_forward.1} parent=51 // pred_check
          %p366 = pneg %p130
        $region58: #{vgg_upscaler_forward.1} parent=51 // pred_check_branch
          %368 = sbr.rel (%p366) target = $region60
        $region59: #{vgg_upscaler_forward.1} parent=51 // pred_region
          %369 = dma.done [#allocation8], 256
        $region60: #{vgg_upscaler_forward.1} parent=51 // pred_fallthru
          _
        // Predicated region
        $region61: #{vgg_upscaler_forward.1} parent=51 // pred_check
          %p370 = pneg %p151
        $region62: #{vgg_upscaler_forward.1} parent=51 // pred_check_branch
          %372 = sbr.rel (%p370) target = $region64
        $region63: #{vgg_upscaler_forward.1} parent=51 // pred_region
          %373 = dma.done [#allocation8], 512
        $region64: #{vgg_upscaler_forward.1} parent=51 // pred_fallthru
          _
        // Predicated region
        $region65: #{vgg_upscaler_forward.1} parent=51 // pred_check
          %p374 = pneg %p193
        $region66: #{vgg_upscaler_forward.1} parent=51 // pred_check_branch
          %376 = sbr.rel (%p374) target = $region68
        $region67: #{vgg_upscaler_forward.1} parent=51 // pred_region
          %377 = dma.done [#allocation11], 144
        $region68: #{vgg_upscaler_forward.1} parent=51 // pred_fallthru
          _
        %p378 = scmp.lt.s32.totalorder %s25, 1
        %s379 = scalar_select %p378, %s25, 1
        %s380 = smul.addr %s379, 2
        %s381 = smul.addr %s380, 4
        %s382 = scalar_lea.vmem %s0, %s381
        %p383 = pneg %p46
        %p384 = pneg %p43
        %p385 = pneg %p67
        %p386 = pneg %p64
        %p387 = pneg %p88
        %p388 = pneg %p85
        %p389 = pneg %p109
        %p390 = pneg %p106
        %p391 = pneg %p130
        %p392 = pneg %p127
        %p393 = pneg %p151
        %p394 = pneg %p148
        %p395 = pneg %p172
        %p396 = pneg %p169
        %p397 = pneg %p193
        %p398 = pneg %p190
        %p399 = pneg %p219
        %p400 = pneg %p216
        %p401 = scmp.lt.s32.totalorder %s25, 1
        %s402 = scalar_select %p401, %s25, 1
        %s403 = smul.addr %s402, 9
        %s404 = smul.addr %s403, 8
        %s405 = scalar_lea.vmem %s8, %s404
        %p406 = pneg %p245
        %p407 = pneg %p242
        %p408 = scmp.lt.s32.totalorder %s25, 1
        %s409 = scalar_select %p408, %s25, 1
        %s410 = smul.addr %s409, 18
        %s411 = smul.addr %s410, 8
        %s412 = scalar_lea.vmem %s9, %s411
        %p413 = pneg %p271
        %p414 = pneg %p268
        %p415 = scmp.lt.s32.totalorder %s25, 1
        %s416 = scalar_select %p415, %s25, 1
        %s417 = smul.addr %s416, 18
        %s418 = smul.addr %s417, 8
        %s419 = scalar_lea.vmem %s10, %s418
        %p420 = scmp.lt.s32.totalorder %s25, 1
        %s421 = scalar_select %p420, %s25, 1
        %s422 = smul.addr %s421, 2
        %s423 = smul.addr %s422, 4
        %s424 = scalar_lea.vmem %s0, %s423
        %p425 = scmp.lt.s32.totalorder %s25, 1
        %s426 = scalar_select %p425, %s25, 1
        %s427 = smul.addr %s426, 9
        %s428 = smul.addr %s427, 8
        %s429 = scalar_lea.vmem %s8, %s428
        %p430 = scmp.lt.s32.totalorder %s25, 1
        %s431 = scalar_select %p430, %s25, 1
        %s432 = smul.addr %s431, 18
        %s433 = smul.addr %s432, 8
        %s434 = scalar_lea.vmem %s9, %s433
        %p435 = scmp.lt.s32.totalorder %s25, 1
        %s436 = scalar_select %p435, %s25, 1
        %s437 = smul.addr %s436, 18
        %s438 = smul.addr %s437, 8
        %s439 = scalar_lea.vmem %s10, %s438
        %v440 = vld [vmem:[#allocation10] sm:$0xff]
        %v441 = vld [vmem:[#allocation10 + $0x8] sm:$0x1]
        %v442 = vld [vmem:[%s424] sm:$0xff]
        %v443 = vld [vmem:[%s1] sm:$0xff]
        %v444 = vld [vmem:[%s1 + $0x8] sm:$0xff]
        %v445 = vld [vmem:[%s1 + $0x10] sm:$0xff]
        %v446 = vld [vmem:[%s1 + $0x18] sm:$0xff]
        %v447 = vld [vmem:[%s1 + $0x20] sm:$0xff]
        %v448 = vld [vmem:[%s1 + $0x28] sm:$0xff]
        %v449 = vld [vmem:[%s1 + $0x30] sm:$0xff]
        %v450 = vld [vmem:[%s1 + $0x38] sm:$0xff]
        %v451 = vld [vmem:[%s1 + $0x40] sm:$0xff]
        %v452 = vld [vmem:[%s1 + $0x48] sm:$0xff]
        %v453 = vld [vmem:[%s1 + $0x50] sm:$0xff]
        %v454 = vld [vmem:[%s1 + $0x58] sm:$0xff]
        %v455 = vld [vmem:[%s1 + $0x60] sm:$0xff]
        %v456 = vld [vmem:[%s1 + $0x68] sm:$0xff]
        %v457 = vld [vmem:[%s1 + $0x70] sm:$0xff]
        %v458 = vld [vmem:[%s1 + $0x78] sm:$0xff]
        %v459 = vld [vmem:[%s1 + $0x80] sm:$0xff]
        %v460 = vld [vmem:[%s1 + $0x88] sm:$0xff]
        %v461 = vld [vmem:[%s1 + $0x90] sm:$0xff]
        %v462 = vld [vmem:[%s1 + $0x98] sm:$0xff]
        %v463 = vld [vmem:[%s1 + $0xa0] sm:$0xff]
        %v464 = vld [vmem:[%s1 + $0xa8] sm:$0xff]
        %v465 = vld [vmem:[%s1 + $0xb0] sm:$0xff]
        %v466 = vld [vmem:[%s1 + $0xb8] sm:$0xff]
        %v467 = vld [vmem:[%s1 + $0xc0] sm:$0xff]
        %v468 = vld [vmem:[%s1 + $0xc8] sm:$0xff]
        %v469 = vld [vmem:[%s1 + $0xd0] sm:$0xff]
        %v470 = vld [vmem:[%s1 + $0xd8] sm:$0xff]
        %v471 = vld [vmem:[%s1 + $0xe0] sm:$0xff]
        %v472 = vld [vmem:[%s1 + $0xe8] sm:$0xff]
        %v473 = vld [vmem:[%s1 + $0xf0] sm:$0xff]
        %v474 = vld [vmem:[%s1 + $0xf8] sm:$0xff]
        %v475 = vld [vmem:[%s1 + $0x100] sm:$0xff]
        %v476 = vld [vmem:[%s1 + $0x108] sm:$0xff]
        %v477 = vld [vmem:[%s1 + $0x110] sm:$0xff]
        %v478 = vld [vmem:[%s1 + $0x118] sm:$0xff]
        %v479 = vld [vmem:[%s1 + $0x120] sm:$0xff]
        %v480 = vld [vmem:[%s1 + $0x128] sm:$0xff]
        %v481 = vld [vmem:[%s1 + $0x130] sm:$0xff]
        %v482 = vld [vmem:[%s1 + $0x138] sm:$0xff]
        %v483 = vld [vmem:[%s1 + $0x140] sm:$0xff]
        %v484 = vld [vmem:[%s1 + $0x148] sm:$0xff]
        %v485 = vld [vmem:[%s1 + $0x150] sm:$0xff]
        %v486 = vld [vmem:[%s1 + $0x158] sm:$0xff]
        %v487 = vld [vmem:[%s1 + $0x160] sm:$0xff]
        %v488 = vld [vmem:[%s1 + $0x168] sm:$0xff]
        %v489 = vld [vmem:[%s1 + $0x170] sm:$0xff]
        %v490 = vld [vmem:[%s1 + $0x178] sm:$0xff]
        %v491 = vld [vmem:[%s1 + $0x180] sm:$0xff]
        %v492 = vld [vmem:[%s1 + $0x188] sm:$0xff]
        %v493 = vld [vmem:[%s1 + $0x190] sm:$0xff]
        %v494 = vld [vmem:[%s1 + $0x198] sm:$0xff]
        %v495 = vld [vmem:[%s1 + $0x1a0] sm:$0xff]
        %v496 = vld [vmem:[%s1 + $0x1a8] sm:$0xff]
        %v497 = vld [vmem:[%s1 + $0x1b0] sm:$0xff]
        %v498 = vld [vmem:[%s1 + $0x1b8] sm:$0xff]
        %v499 = vld [vmem:[%s1 + $0x1c0] sm:$0xff]
        %v500 = vld [vmem:[%s1 + $0x1c8] sm:$0xff]
        %v501 = vld [vmem:[%s1 + $0x1d0] sm:$0xff]
        %v502 = vld [vmem:[%s1 + $0x1d8] sm:$0xff]
        %v503 = vld [vmem:[%s1 + $0x1e0] sm:$0xff]
        %v504 = vld [vmem:[%s1 + $0x1e8] sm:$0xff]
        %v505 = vld [vmem:[%s1 + $0x1f0] sm:$0xff]
        %v506 = vld [vmem:[%s1 + $0x1f8] sm:$0xff]
        %v507 = vld [vmem:[%s1 + $0x200] sm:$0xff]
        %v508 = vld [vmem:[%s1 + $0x208] sm:$0xff]
        %v509 = vld [vmem:[%s1 + $0x210] sm:$0xff]
        %v510 = vld [vmem:[%s1 + $0x218] sm:$0xff]
        %v511 = vld [vmem:[%s1 + $0x220] sm:$0xff]
        %v512 = vld [vmem:[%s1 + $0x228] sm:$0xff]
        %v513 = vld [vmem:[%s1 + $0x230] sm:$0xff]
        %v514 = vld [vmem:[%s1 + $0x238] sm:$0xff]
        %v515 = vld [vmem:[%s1 + $0x240] sm:$0xff]
        %v516 = vld [vmem:[%s1 + $0x248] sm:$0xff]
        %v517 = vld [vmem:[%s1 + $0x250] sm:$0xff]
        %v518 = vld [vmem:[%s1 + $0x258] sm:$0xff]
        %v519 = vld [vmem:[%s1 + $0x260] sm:$0xff]
        %v520 = vld [vmem:[%s1 + $0x268] sm:$0xff]
        %v521 = vld [vmem:[%s1 + $0x270] sm:$0xff]
        %v522 = vld [vmem:[%s1 + $0x278] sm:$0xff]
        %v523 = vld [vmem:[%s1 + $0x280] sm:$0xff]
        %v524 = vld [vmem:[%s1 + $0x288] sm:$0xff]
        %v525 = vld [vmem:[%s1 + $0x290] sm:$0xff]
        %v526 = vld [vmem:[%s1 + $0x298] sm:$0xff]
        %v527 = vld [vmem:[%s1 + $0x2a0] sm:$0xff]
        %v528 = vld [vmem:[%s1 + $0x2a8] sm:$0xff]
        %v529 = vld [vmem:[%s1 + $0x2b0] sm:$0xff]
        %v530 = vld [vmem:[%s1 + $0x2b8] sm:$0xff]
        %v531 = vld [vmem:[%s1 + $0x2c0] sm:$0xff]
        %v532 = vld [vmem:[%s1 + $0x2c8] sm:$0xff]
        %v533 = vld [vmem:[%s1 + $0x2d0] sm:$0xff]
        %v534 = vld [vmem:[%s1 + $0x2d8] sm:$0xff]
        %v535 = vld [vmem:[%s1 + $0x2e0] sm:$0xff]
        %v536 = vld [vmem:[%s1 + $0x2e8] sm:$0xff]
        %v537 = vld [vmem:[%s1 + $0x2f0] sm:$0xff]
        %v538 = vld [vmem:[%s1 + $0x2f8] sm:$0xff]
        %v539 = vld [vmem:[%s1 + $0x300] sm:$0xff]
        %v540 = vld [vmem:[%s1 + $0x308] sm:$0xff]
        %v541 = vld [vmem:[%s1 + $0x310] sm:$0xff]
        %v542 = vld [vmem:[%s1 + $0x318] sm:$0xff]
        %v543 = vld [vmem:[%s1 + $0x320] sm:$0xff]
        %v544 = vld [vmem:[%s1 + $0x328] sm:$0xff]
        %v545 = vld [vmem:[%s1 + $0x330] sm:$0xff]
        %v546 = vld [vmem:[%s1 + $0x338] sm:$0xff]
        %v547 = vld [vmem:[%s1 + $0x340] sm:$0xff]
        %v548 = vld [vmem:[%s1 + $0x348] sm:$0xff]
        %v549 = vld [vmem:[%s1 + $0x350] sm:$0xff]
        %v550 = vld [vmem:[%s1 + $0x358] sm:$0xff]
        %v551 = vld [vmem:[%s1 + $0x360] sm:$0xff]
        %v552 = vld [vmem:[%s1 + $0x368] sm:$0xff]
        %v553 = vld [vmem:[%s1 + $0x370] sm:$0xff]
        %v554 = vld [vmem:[%s1 + $0x378] sm:$0xff]
        %v555 = vld [vmem:[%s1 + $0x380] sm:$0xff]
        %v556 = vld [vmem:[%s1 + $0x388] sm:$0xff]
        %v557 = vld [vmem:[%s1 + $0x390] sm:$0xff]
        %v558 = vld [vmem:[%s1 + $0x398] sm:$0xff]
        %v559 = vld [vmem:[%s1 + $0x3a0] sm:$0xff]
        %v560 = vld [vmem:[%s1 + $0x3a8] sm:$0xff]
        %v561 = vld [vmem:[%s1 + $0x3b0] sm:$0xff]
        %v562 = vld [vmem:[%s1 + $0x3b8] sm:$0xff]
        %v563 = vld [vmem:[%s1 + $0x3c0] sm:$0xff]
        %v564 = vld [vmem:[%s1 + $0x3c8] sm:$0xff]
        %v565 = vld [vmem:[%s1 + $0x3d0] sm:$0xff]
        %v566 = vld [vmem:[%s1 + $0x3d8] sm:$0xff]
        %v567 = vld [vmem:[%s1 + $0x3e0] sm:$0xff]
        %v568 = vld [vmem:[%s1 + $0x3e8] sm:$0xff]
        %v569 = vld [vmem:[%s1 + $0x3f0] sm:$0xff]
        %v570 = vld [vmem:[%s1 + $0x3f8] sm:$0xff]
        %v571 = vld [vmem:[%s1 + $0x400] sm:$0xff]
        %v572 = vld [vmem:[%s1 + $0x408] sm:$0xff]
        %v573 = vld [vmem:[%s1 + $0x410] sm:$0xff]
        %v574 = vld [vmem:[%s1 + $0x418] sm:$0xff]
        %v575 = vld [vmem:[%s1 + $0x420] sm:$0xff]
        %v576 = vld [vmem:[%s1 + $0x428] sm:$0xff]
        %v577 = vld [vmem:[%s1 + $0x430] sm:$0xff]
        %v578 = vld [vmem:[%s1 + $0x438] sm:$0xff]
        %v579 = vld [vmem:[%s1 + $0x440] sm:$0xff]
        %v580 = vld [vmem:[%s1 + $0x448] sm:$0xff]
        %v581 = vld [vmem:[%s1 + $0x450] sm:$0xff]
        %v582 = vld [vmem:[%s1 + $0x458] sm:$0xff]
        %v583 = vld [vmem:[%s1 + $0x460] sm:$0xff]
        %v584 = vld [vmem:[%s1 + $0x468] sm:$0xff]
        %v585 = vld [vmem:[%s1 + $0x470] sm:$0xff]
        %v586 = vld [vmem:[%s1 + $0x478] sm:$0xff]
        %v587 = vld [vmem:[%s1 + $0x480] sm:$0xff]
        %v588 = vld [vmem:[%s1 + $0x488] sm:$0xff]
        %v589 = vld [vmem:[%s1 + $0x490] sm:$0xff]
        %v590 = vld [vmem:[%s1 + $0x498] sm:$0xff]
        %v591 = vld [vmem:[%s1 + $0x4a0] sm:$0xff]
        %v592 = vld [vmem:[%s1 + $0x4a8] sm:$0xff]
        %v593 = vld [vmem:[%s1 + $0x4b0] sm:$0xff]
        %v594 = vld [vmem:[%s1 + $0x4b8] sm:$0xff]
        %v595 = vld [vmem:[%s1 + $0x4c0] sm:$0xff]
        %v596 = vld [vmem:[%s1 + $0x4c8] sm:$0xff]
        %v597 = vld [vmem:[%s1 + $0x4d0] sm:$0xff]
        %v598 = vld [vmem:[%s1 + $0x4d8] sm:$0xff]
        %v599 = vld [vmem:[%s1 + $0x4e0] sm:$0xff]
        %v600 = vld [vmem:[%s1 + $0x4e8] sm:$0xff]
        %v601 = vld [vmem:[%s1 + $0x4f0] sm:$0xff]
        %v602 = vld [vmem:[%s1 + $0x4f8] sm:$0xff]
        %v603 = vld [vmem:[%s1 + $0x500] sm:$0xff]
        %v604 = vld [vmem:[%s1 + $0x508] sm:$0xff]
        %v605 = vld [vmem:[%s1 + $0x510] sm:$0xff]
        %v606 = vld [vmem:[%s1 + $0x518] sm:$0xff]
        %v607 = vld [vmem:[%s1 + $0x520] sm:$0xff]
        %v608 = vld [vmem:[%s1 + $0x528] sm:$0xff]
        %v609 = vld [vmem:[%s1 + $0x530] sm:$0xff]
        %v610 = vld [vmem:[%s1 + $0x538] sm:$0xff]
        %v611 = vld [vmem:[%s1 + $0x540] sm:$0xff]
        %v612 = vld [vmem:[%s1 + $0x548] sm:$0xff]
        %v613 = vld [vmem:[%s1 + $0x550] sm:$0xff]
        %v614 = vld [vmem:[%s1 + $0x558] sm:$0xff]
        %v615 = vld [vmem:[%s1 + $0x560] sm:$0xff]
        %v616 = vld [vmem:[%s1 + $0x568] sm:$0xff]
        %v617 = vld [vmem:[%s1 + $0x570] sm:$0xff]
        %v618 = vld [vmem:[%s1 + $0x578] sm:$0xff]
        %v619 = vld [vmem:[%s1 + $0x580] sm:$0xff]
        %v620 = vld [vmem:[%s1 + $0x588] sm:$0xff]
        %v621 = vld [vmem:[%s1 + $0x590] sm:$0xff]
        %v622 = vld [vmem:[%s1 + $0x598] sm:$0xff]
        %v623 = vld [vmem:[%s1 + $0x5a0] sm:$0xff]
        %v624 = vld [vmem:[%s1 + $0x5a8] sm:$0xff]
        %v625 = vld [vmem:[%s1 + $0x5b0] sm:$0xff]
        %v626 = vld [vmem:[%s1 + $0x5b8] sm:$0xff]
        %v627 = vld [vmem:[%s1 + $0x5c0] sm:$0xff]
        %v628 = vld [vmem:[%s1 + $0x5c8] sm:$0xff]
        %v629 = vld [vmem:[%s1 + $0x5d0] sm:$0xff]
        %v630 = vld [vmem:[%s1 + $0x5d8] sm:$0xff]
        %v631 = vld [vmem:[%s1 + $0x5e0] sm:$0xff]
        %v632 = vld [vmem:[%s1 + $0x5e8] sm:$0xff]
        %v633 = vld [vmem:[%s1 + $0x5f0] sm:$0xff]
        %v634 = vld [vmem:[%s1 + $0x5f8] sm:$0xff]
        %v635 = vld [vmem:[%s1 + $0x600] sm:$0xff]
        %v636 = vld [vmem:[%s1 + $0x608] sm:$0xff]
        %v637 = vld [vmem:[%s1 + $0x610] sm:$0xff]
        %v638 = vld [vmem:[%s1 + $0x618] sm:$0xff]
        %v639 = vld [vmem:[%s1 + $0x620] sm:$0xff]
        %v640 = vld [vmem:[%s1 + $0x628] sm:$0xff]
        %v641 = vld [vmem:[%s1 + $0x630] sm:$0xff]
        %v642 = vld [vmem:[%s1 + $0x638] sm:$0xff]
        %v643 = vld [vmem:[%s1 + $0x640] sm:$0xff]
        %v644 = vld [vmem:[%s1 + $0x648] sm:$0xff]
        %v645 = vld [vmem:[%s1 + $0x650] sm:$0xff]
        %v646 = vld [vmem:[%s1 + $0x658] sm:$0xff]
        %v647 = vld [vmem:[%s1 + $0x660] sm:$0xff]
        %v648 = vld [vmem:[%s1 + $0x668] sm:$0xff]
        %v649 = vld [vmem:[%s1 + $0x670] sm:$0xff]
        %v650 = vld [vmem:[%s1 + $0x678] sm:$0xff]
        %v651 = vld [vmem:[%s1 + $0x680] sm:$0xff]
        %v652 = vld [vmem:[%s1 + $0x688] sm:$0xff]
        %v653 = vld [vmem:[%s1 + $0x690] sm:$0xff]
        %v654 = vld [vmem:[%s1 + $0x698] sm:$0xff]
        %v655 = vld [vmem:[%s1 + $0x6a0] sm:$0xff]
        %v656 = vld [vmem:[%s1 + $0x6a8] sm:$0xff]
        %v657 = vld [vmem:[%s1 + $0x6b0] sm:$0xff]
        %v658 = vld [vmem:[%s1 + $0x6b8] sm:$0xff]
        %v659 = vld [vmem:[%s1 + $0x6c0] sm:$0xff]
        %v660 = vld [vmem:[%s1 + $0x6c8] sm:$0xff]
        %v661 = vld [vmem:[%s1 + $0x6d0] sm:$0xff]
        %v662 = vld [vmem:[%s1 + $0x6d8] sm:$0xff]
        %v663 = vld [vmem:[%s1 + $0x6e0] sm:$0xff]
        %v664 = vld [vmem:[%s1 + $0x6e8] sm:$0xff]
        %v665 = vld [vmem:[%s1 + $0x6f0] sm:$0xff]
        %v666 = vld [vmem:[%s1 + $0x6f8] sm:$0xff]
        %v667 = vld [vmem:[%s1 + $0x700] sm:$0xff]
        %v668 = vld [vmem:[%s1 + $0x708] sm:$0xff]
        %v669 = vld [vmem:[%s1 + $0x710] sm:$0xff]
        %v670 = vld [vmem:[%s1 + $0x718] sm:$0xff]
        %v671 = vld [vmem:[%s1 + $0x720] sm:$0xff]
        %v672 = vld [vmem:[%s1 + $0x728] sm:$0xff]
        %v673 = vld [vmem:[%s1 + $0x730] sm:$0xff]
        %v674 = vld [vmem:[%s1 + $0x738] sm:$0xff]
        %v675 = vld [vmem:[%s1 + $0x740] sm:$0xff]
        %v676 = vld [vmem:[%s1 + $0x748] sm:$0xff]
        %v677 = vld [vmem:[%s1 + $0x750] sm:$0xff]
        %v678 = vld [vmem:[%s1 + $0x758] sm:$0xff]
        %v679 = vld [vmem:[%s1 + $0x760] sm:$0xff]
        %v680 = vld [vmem:[%s1 + $0x768] sm:$0xff]
        %v681 = vld [vmem:[%s1 + $0x770] sm:$0xff]
        %v682 = vld [vmem:[%s1 + $0x778] sm:$0xff]
        %v683 = vld [vmem:[%s1 + $0x780] sm:$0xff]
        %v684 = vld [vmem:[%s1 + $0x788] sm:$0xff]
        %v685 = vld [vmem:[%s1 + $0x790] sm:$0xff]
        %v686 = vld [vmem:[%s1 + $0x798] sm:$0xff]
        %v687 = vld [vmem:[%s1 + $0x7a0] sm:$0xff]
        %v688 = vld [vmem:[%s1 + $0x7a8] sm:$0xff]
        %v689 = vld [vmem:[%s1 + $0x7b0] sm:$0xff]
        %v690 = vld [vmem:[%s1 + $0x7b8] sm:$0xff]
        %v691 = vld [vmem:[%s1 + $0x7c0] sm:$0xff]
        %v692 = vld [vmem:[%s1 + $0x7c8] sm:$0xff]
        %v693 = vld [vmem:[%s1 + $0x7d0] sm:$0xff]
        %v694 = vld [vmem:[%s1 + $0x7d8] sm:$0xff]
        %v695 = vld [vmem:[%s1 + $0x7e0] sm:$0xff]
        %v696 = vld [vmem:[%s1 + $0x7e8] sm:$0xff]
        %v697 = vld [vmem:[%s1 + $0x7f0] sm:$0xff]
        %v698 = vld [vmem:[%s1 + $0x7f8] sm:$0xff]
        %v699 = vld [vmem:[%s1 + $0x800] sm:$0xff]
        %v700 = vld [vmem:[%s1 + $0x808] sm:$0xff]
        %v701 = vld [vmem:[%s1 + $0x810] sm:$0xff]
        %v702 = vld [vmem:[%s1 + $0x818] sm:$0xff]
        %v703 = vld [vmem:[%s1 + $0x820] sm:$0xff]
        %v704 = vld [vmem:[%s1 + $0x828] sm:$0xff]
        %v705 = vld [vmem:[%s1 + $0x830] sm:$0xff]
        %v706 = vld [vmem:[%s1 + $0x838] sm:$0xff]
        %v707 = vld [vmem:[%s1 + $0x840] sm:$0xff]
        %v708 = vld [vmem:[%s1 + $0x848] sm:$0xff]
        %v709 = vld [vmem:[%s1 + $0x850] sm:$0xff]
        %v710 = vld [vmem:[%s1 + $0x858] sm:$0xff]
        %v711 = vld [vmem:[%s1 + $0x860] sm:$0xff]
        %v712 = vld [vmem:[%s1 + $0x868] sm:$0xff]
        %v713 = vld [vmem:[%s1 + $0x870] sm:$0xff]
        %v714 = vld [vmem:[%s1 + $0x878] sm:$0xff]
        %v715 = vld [vmem:[%s1 + $0x880] sm:$0xff]
        %v716 = vld [vmem:[%s1 + $0x888] sm:$0xff]
        %v717 = vld [vmem:[%s1 + $0x890] sm:$0xff]
        %v718 = vld [vmem:[%s1 + $0x898] sm:$0xff]
        %v719 = vld [vmem:[%s1 + $0x8a0] sm:$0xff]
        %v720 = vld [vmem:[%s1 + $0x8a8] sm:$0xff]
        %v721 = vld [vmem:[%s1 + $0x8b0] sm:$0xff]
        %v722 = vld [vmem:[%s1 + $0x8b8] sm:$0xff]
        %v723 = vld [vmem:[%s1 + $0x8c0] sm:$0xff]
        %v724 = vld [vmem:[%s1 + $0x8c8] sm:$0xff]
        %v725 = vld [vmem:[%s1 + $0x8d0] sm:$0xff]
        %v726 = vld [vmem:[%s1 + $0x8d8] sm:$0xff]
        %v727 = vld [vmem:[%s1 + $0x8e0] sm:$0xff]
        %v728 = vld [vmem:[%s1 + $0x8e8] sm:$0xff]
        %v729 = vld [vmem:[%s1 + $0x8f0] sm:$0xff]
        %v730 = vld [vmem:[%s1 + $0x8f8] sm:$0xff]
        %v732 = vcombine.high %v442, %v442
        %734 = vmatprep.subr.mxu0 %v579
        %735 = vmatpush1.msra.mxu0 %v578
        %736 = vmatprep.subr.mxu0 %v570
        %737 = vmatpush1.msra.mxu0 %v569
        %738 = vmatprep.subr.mxu0 %v561
        %739 = vmatpush1.msra.mxu0 %v560
        %740 = vmatprep.subr.mxu0 %v552
        %741 = vmatpush1.msra.mxu0 %v551
        %742 = vmatprep.subr.mxu0 %v543
        %743 = vmatpush1.msra.mxu0 %v542
        %744 = vmatprep.subr.mxu0 %v534
        %745 = vmatpush1.msra.mxu0 %v533
        %746 = vmatprep.subr.mxu0 %v525
        %747 = vmatpush1.msra.mxu0 %v524
        %748 = vmatprep.subr.mxu0 %v516
        %749 = vmatpush1.msra.mxu0 %v515
        %750 = vmatprep.subr.mxu0 %v507
        %751 = vmatpush1.msra.mxu0 %v506
        %752 = vmatprep.subr.mxu0 %v498
        %753 = vmatpush1.msra.mxu0 %v497
        %754 = vmatprep.subr.mxu0 %v489
        %755 = vmatpush1.msra.mxu0 %v488
        %756 = vmatprep.subr.mxu0 %v480
        %757 = vmatpush1.msra.mxu0 %v479
        %758 = vmatprep.subr.mxu0 %v471
        %759 = vmatpush1.msra.mxu0 %v470
        %760 = vmatprep.subr.mxu0 %v462
        %761 = vmatpush1.msra.mxu0 %v461
        %762 = vmatprep.subr.mxu0 %v453
        %763 = vmatpush1.msra.mxu0 %v452
        %764 = vmatprep.subr.mxu0 %v444
        %765 = vmatpush1.msra.mxu0 %v443
        %766 = vmatprep.subr.mxu0 %v723
        %767 = vmatpush2.msra.mxu0 %v722
        %768 = vmatprep.subr.mxu0 %v714
        %769 = vmatpush2.msra.mxu0 %v713
        %770 = vmatprep.subr.mxu0 %v705
        %771 = vmatpush2.msra.mxu0 %v704
        %772 = vmatprep.subr.mxu0 %v696
        %773 = vmatpush2.msra.mxu0 %v695
        %774 = vmatprep.subr.mxu0 %v687
        %775 = vmatpush2.msra.mxu0 %v686
        %776 = vmatprep.subr.mxu0 %v678
        %777 = vmatpush2.msra.mxu0 %v677
        %778 = vmatprep.subr.mxu0 %v669
        %779 = vmatpush2.msra.mxu0 %v668
        %780 = vmatprep.subr.mxu0 %v660
        %781 = vmatpush2.msra.mxu0 %v659
        %782 = vmatprep.subr.mxu0 %v651
        %783 = vmatpush2.msra.mxu0 %v650
        %784 = vmatprep.subr.mxu0 %v642
        %785 = vmatpush2.msra.mxu0 %v641
        %786 = vmatprep.subr.mxu0 %v633
        %787 = vmatpush2.msra.mxu0 %v632
        %788 = vmatprep.subr.mxu0 %v624
        %789 = vmatpush2.msra.mxu0 %v623
        %790 = vmatprep.subr.mxu0 %v615
        %791 = vmatpush2.msra.mxu0 %v614
        %792 = vmatprep.subr.mxu0 %v606
        %793 = vmatpush2.msra.mxu0 %v605
        %794 = vmatprep.subr.mxu0 %v597
        %795 = vmatpush2.msra.mxu0 %v596
        %796 = vmatprep.subr.mxu0 %v588
        %797 = vmatpush2.msra.mxu0 %v587
        %798 = vmatprep.mubr.f32.mxu0 %v732
        %799 = vmatmul.mubr.f32.gmra.mxu0 %v442
        %v800 = vpop.f32.mrf.mxu0
        %v801 = vadd.f32 0.0, %v800
        %v802 = vpop.f32.mrf.mxu0
        %v803 = vadd.f32 0.0, %v802
        %804 = vdwg.mxu0
        %805 = vmatprep.subr.mxu0 %v581
        %806 = vmatpush1.msra.mxu0 %v580
        %807 = vmatprep.subr.mxu0 %v572
        %808 = vmatpush1.msra.mxu0 %v571
        %809 = vmatprep.subr.mxu0 %v563
        %810 = vmatpush1.msra.mxu0 %v562
        %811 = vmatprep.subr.mxu0 %v554
        %812 = vmatpush1.msra.mxu0 %v553
        %813 = vmatprep.subr.mxu0 %v545
        %814 = vmatpush1.msra.mxu0 %v544
        %815 = vmatprep.subr.mxu0 %v536
        %816 = vmatpush1.msra.mxu0 %v535
        %817 = vmatprep.subr.mxu0 %v527
        %818 = vmatpush1.msra.mxu0 %v526
        %819 = vmatprep.subr.mxu0 %v518
        %820 = vmatpush1.msra.mxu0 %v517
        %821 = vmatprep.subr.mxu0 %v509
        %822 = vmatpush1.msra.mxu0 %v508
        %823 = vmatprep.subr.mxu0 %v500
        %824 = vmatpush1.msra.mxu0 %v499
        %825 = vmatprep.subr.mxu0 %v491
        %826 = vmatpush1.msra.mxu0 %v490
        %827 = vmatprep.subr.mxu0 %v482
        %828 = vmatpush1.msra.mxu0 %v481
        %829 = vmatprep.subr.mxu0 %v473
        %830 = vmatpush1.msra.mxu0 %v472
        %831 = vmatprep.subr.mxu0 %v464
        %832 = vmatpush1.msra.mxu0 %v463
        %833 = vmatprep.subr.mxu0 %v455
        %834 = vmatpush1.msra.mxu0 %v454
        %835 = vmatprep.subr.mxu0 %v446
        %836 = vmatpush1.msra.mxu0 %v445
        %837 = vmatprep.subr.mxu0 %v725
        %838 = vmatpush2.msra.mxu0 %v724
        %839 = vmatprep.subr.mxu0 %v716
        %840 = vmatpush2.msra.mxu0 %v715
        %841 = vmatprep.subr.mxu0 %v707
        %842 = vmatpush2.msra.mxu0 %v706
        %843 = vmatprep.subr.mxu0 %v698
        %844 = vmatpush2.msra.mxu0 %v697
        %845 = vmatprep.subr.mxu0 %v689
        %846 = vmatpush2.msra.mxu0 %v688
        %847 = vmatprep.subr.mxu0 %v680
        %848 = vmatpush2.msra.mxu0 %v679
        %849 = vmatprep.subr.mxu0 %v671
        %850 = vmatpush2.msra.mxu0 %v670
        %851 = vmatprep.subr.mxu0 %v662
        %852 = vmatpush2.msra.mxu0 %v661
        %853 = vmatprep.subr.mxu0 %v653
        %854 = vmatpush2.msra.mxu0 %v652
        %855 = vmatprep.subr.mxu0 %v644
        %856 = vmatpush2.msra.mxu0 %v643
        %857 = vmatprep.subr.mxu0 %v635
        %858 = vmatpush2.msra.mxu0 %v634
        %859 = vmatprep.subr.mxu0 %v626
        %860 = vmatpush2.msra.mxu0 %v625
        %861 = vmatprep.subr.mxu0 %v617
        %862 = vmatpush2.msra.mxu0 %v616
        %863 = vmatprep.subr.mxu0 %v608
        %864 = vmatpush2.msra.mxu0 %v607
        %865 = vmatprep.subr.mxu0 %v599
        %866 = vmatpush2.msra.mxu0 %v598
        %867 = vmatprep.subr.mxu0 %v590
        %868 = vmatpush2.msra.mxu0 %v589
        %869 = vmatprep.mubr.f32.mxu0 %v732
        %870 = vmatmul.mubr.f32.gmra.mxu0 %v442
        %v871 = vpop.f32.mrf.mxu0
        %v872 = vadd.f32 0.0, %v871
        %v873 = vpop.f32.mrf.mxu0
        %v874 = vadd.f32 0.0, %v873
        %875 = vdwg.mxu0
        %876 = vmatprep.subr.mxu0 %v583
        %877 = vmatpush1.msra.mxu0 %v582
        %878 = vmatprep.subr.mxu0 %v574
        %879 = vmatpush1.msra.mxu0 %v573
        %880 = vmatprep.subr.mxu0 %v565
        %881 = vmatpush1.msra.mxu0 %v564
        %882 = vmatprep.subr.mxu0 %v556
        %883 = vmatpush1.msra.mxu0 %v555
        %884 = vmatprep.subr.mxu0 %v547
        %885 = vmatpush1.msra.mxu0 %v546
        %886 = vmatprep.subr.mxu0 %v538
        %887 = vmatpush1.msra.mxu0 %v537
        %888 = vmatprep.subr.mxu0 %v529
        %889 = vmatpush1.msra.mxu0 %v528
        %890 = vmatprep.subr.mxu0 %v520
        %891 = vmatpush1.msra.mxu0 %v519
        %892 = vmatprep.subr.mxu0 %v511
        %893 = vmatpush1.msra.mxu0 %v510
        %894 = vmatprep.subr.mxu0 %v502
        %895 = vmatpush1.msra.mxu0 %v501
        %896 = vmatprep.subr.mxu0 %v493
        %897 = vmatpush1.msra.mxu0 %v492
        %898 = vmatprep.subr.mxu0 %v484
        %899 = vmatpush1.msra.mxu0 %v483
        %900 = vmatprep.subr.mxu0 %v475
        %901 = vmatpush1.msra.mxu0 %v474
        %902 = vmatprep.subr.mxu0 %v466
        %903 = vmatpush1.msra.mxu0 %v465
        %904 = vmatprep.subr.mxu0 %v457
        %905 = vmatpush1.msra.mxu0 %v456
        %906 = vmatprep.subr.mxu0 %v448
        %907 = vmatpush1.msra.mxu0 %v447
        %908 = vmatprep.subr.mxu0 %v727
        %909 = vmatpush2.msra.mxu0 %v726
        %910 = vmatprep.subr.mxu0 %v718
        %911 = vmatpush2.msra.mxu0 %v717
        %912 = vmatprep.subr.mxu0 %v709
        %913 = vmatpush2.msra.mxu0 %v708
        %914 = vmatprep.subr.mxu0 %v700
        %915 = vmatpush2.msra.mxu0 %v699
        %916 = vmatprep.subr.mxu0 %v691
        %917 = vmatpush2.msra.mxu0 %v690
        %918 = vmatprep.subr.mxu0 %v682
        %919 = vmatpush2.msra.mxu0 %v681
        %920 = vmatprep.subr.mxu0 %v673
        %921 = vmatpush2.msra.mxu0 %v672
        %922 = vmatprep.subr.mxu0 %v664
        %923 = vmatpush2.msra.mxu0 %v663
        %924 = vmatprep.subr.mxu0 %v655
        %925 = vmatpush2.msra.mxu0 %v654
        %926 = vmatprep.subr.mxu0 %v646
        %927 = vmatpush2.msra.mxu0 %v645
        %928 = vmatprep.subr.mxu0 %v637
        %929 = vmatpush2.msra.mxu0 %v636
        %930 = vmatprep.subr.mxu0 %v628
        %931 = vmatpush2.msra.mxu0 %v627
        %932 = vmatprep.subr.mxu0 %v619
        %933 = vmatpush2.msra.mxu0 %v618
        %934 = vmatprep.subr.mxu0 %v610
        %935 = vmatpush2.msra.mxu0 %v609
        %936 = vmatprep.subr.mxu0 %v601
        %937 = vmatpush2.msra.mxu0 %v600
        %938 = vmatprep.subr.mxu0 %v592
        %939 = vmatpush2.msra.mxu0 %v591
        %940 = vmatprep.mubr.f32.mxu0 %v732
        %941 = vmatmul.mubr.f32.gmra.mxu0 %v442
        %v942 = vpop.f32.mrf.mxu0
        %v943 = vadd.f32 0.0, %v942
        %v944 = vpop.f32.mrf.mxu0
        %v945 = vadd.f32 0.0, %v944
        %946 = vdwg.mxu0
        %947 = vmatprep.subr.mxu0 %v585
        %948 = vmatpush1.msra.mxu0 %v584
        %949 = vmatprep.subr.mxu0 %v576
        %950 = vmatpush1.msra.mxu0 %v575
        %951 = vmatprep.subr.mxu0 %v567
        %952 = vmatpush1.msra.mxu0 %v566
        %953 = vmatprep.subr.mxu0 %v558
        %954 = vmatpush1.msra.mxu0 %v557
        %955 = vmatprep.subr.mxu0 %v549
        %956 = vmatpush1.msra.mxu0 %v548
        %957 = vmatprep.subr.mxu0 %v540
        %958 = vmatpush1.msra.mxu0 %v539
        %959 = vmatprep.subr.mxu0 %v531
        %960 = vmatpush1.msra.mxu0 %v530
        %961 = vmatprep.subr.mxu0 %v522
        %962 = vmatpush1.msra.mxu0 %v521
        %963 = vmatprep.subr.mxu0 %v513
        %964 = vmatpush1.msra.mxu0 %v512
        %965 = vmatprep.subr.mxu0 %v504
        %966 = vmatpush1.msra.mxu0 %v503
        %967 = vmatprep.subr.mxu0 %v495
        %968 = vmatpush1.msra.mxu0 %v494
        %969 = vmatprep.subr.mxu0 %v486
        %970 = vmatpush1.msra.mxu0 %v485
        %971 = vmatprep.subr.mxu0 %v477
        %972 = vmatpush1.msra.mxu0 %v476
        %973 = vmatprep.subr.mxu0 %v468
        %974 = vmatpush1.msra.mxu0 %v467
        %975 = vmatprep.subr.mxu0 %v459
        %976 = vmatpush1.msra.mxu0 %v458
        %977 = vmatprep.subr.mxu0 %v450
        %978 = vmatpush1.msra.mxu0 %v449
        %979 = vmatprep.subr.mxu0 %v729
        %980 = vmatpush2.msra.mxu0 %v728
        %981 = vmatprep.subr.mxu0 %v720
        %982 = vmatpush2.msra.mxu0 %v719
        %983 = vmatprep.subr.mxu0 %v711
        %984 = vmatpush2.msra.mxu0 %v710
        %985 = vmatprep.subr.mxu0 %v702
        %986 = vmatpush2.msra.mxu0 %v701
        %987 = vmatprep.subr.mxu0 %v693
        %988 = vmatpush2.msra.mxu0 %v692
        %989 = vmatprep.subr.mxu0 %v684
        %990 = vmatpush2.msra.mxu0 %v683
        %991 = vmatprep.subr.mxu0 %v675
        %992 = vmatpush2.msra.mxu0 %v674
        %993 = vmatprep.subr.mxu0 %v666
        %994 = vmatpush2.msra.mxu0 %v665
        %995 = vmatprep.subr.mxu0 %v657
        %996 = vmatpush2.msra.mxu0 %v656
        %997 = vmatprep.subr.mxu0 %v648
        %998 = vmatpush2.msra.mxu0 %v647
        %999 = vmatprep.subr.mxu0 %v639
        %1000 = vmatpush2.msra.mxu0 %v638
        %1001 = vmatprep.subr.mxu0 %v630
        %1002 = vmatpush2.msra.mxu0 %v629
        %1003 = vmatprep.subr.mxu0 %v621
        %1004 = vmatpush2.msra.mxu0 %v620
        %1005 = vmatprep.subr.mxu0 %v612
        %1006 = vmatpush2.msra.mxu0 %v611
        %1007 = vmatprep.subr.mxu0 %v603
        %1008 = vmatpush2.msra.mxu0 %v602
        %1009 = vmatprep.subr.mxu0 %v594
        %1010 = vmatpush2.msra.mxu0 %v593
        %1011 = vmatprep.mubr.f32.mxu0 %v732
        %1012 = vmatmul.mubr.f32.gmra.mxu0 %v442
        %v1013 = vpop.f32.mrf.mxu0
        %v1014 = vadd.f32 0.0, %v1013
        %v1015 = vpop.f32.mrf.mxu0
        %v1016 = vadd.f32 0.0, %v1015
        %1017 = vdwg.mxu0
        %1018 = vmatprep.subr.mxu0 0.0
        %1019 = vmatpush1.msra.mxu0 %v586
        %1020 = vmatprep.subr.mxu0 0.0
        %1021 = vmatpush1.msra.mxu0 %v577
        %1022 = vmatprep.subr.mxu0 0.0
        %1023 = vmatpush1.msra.mxu0 %v568
        %1024 = vmatprep.subr.mxu0 0.0
        %1025 = vmatpush1.msra.mxu0 %v559
        %1026 = vmatprep.subr.mxu0 0.0
        %1027 = vmatpush1.msra.mxu0 %v550
        %1028 = vmatprep.subr.mxu0 0.0
        %1029 = vmatpush1.msra.mxu0 %v541
        %1030 = vmatprep.subr.mxu0 0.0
        %1031 = vmatpush1.msra.mxu0 %v532
        %1032 = vmatprep.subr.mxu0 0.0
        %1033 = vmatpush1.msra.mxu0 %v523
        %1034 = vmatprep.subr.mxu0 0.0
        %1035 = vmatpush1.msra.mxu0 %v514
        %1036 = vmatprep.subr.mxu0 0.0
        %1037 = vmatpush1.msra.mxu0 %v505
        %1038 = vmatprep.subr.mxu0 0.0
        %1039 = vmatpush1.msra.mxu0 %v496
        %1040 = vmatprep.subr.mxu0 0.0
        %1041 = vmatpush1.msra.mxu0 %v487
        %1042 = vmatprep.subr.mxu0 0.0
        %1043 = vmatpush1.msra.mxu0 %v478
        %1044 = vmatprep.subr.mxu0 0.0
        %1045 = vmatpush1.msra.mxu0 %v469
        %1046 = vmatprep.subr.mxu0 0.0
        %1047 = vmatpush1.msra.mxu0 %v460
        %1048 = vmatprep.subr.mxu0 0.0
        %1049 = vmatpush1.msra.mxu0 %v451
        %1050 = vmatprep.subr.mxu0 0.0
        %1051 = vmatpush2.msra.mxu0 %v730
        %1052 = vmatprep.subr.mxu0 0.0
        %1053 = vmatpush2.msra.mxu0 %v721
        %1054 = vmatprep.subr.mxu0 0.0
        %1055 = vmatpush2.msra.mxu0 %v712
        %1056 = vmatprep.subr.mxu0 0.0
        %1057 = vmatpush2.msra.mxu0 %v703
        %1058 = vmatprep.subr.mxu0 0.0
        %1059 = vmatpush2.msra.mxu0 %v694
        %1060 = vmatprep.subr.mxu0 0.0
        %1061 = vmatpush2.msra.mxu0 %v685
        %1062 = vmatprep.subr.mxu0 0.0
        %1063 = vmatpush2.msra.mxu0 %v676
        %1064 = vmatprep.subr.mxu0 0.0
        %1065 = vmatpush2.msra.mxu0 %v667
        %1066 = vmatprep.subr.mxu0 0.0
        %1067 = vmatpush2.msra.mxu0 %v658
        %1068 = vmatprep.subr.mxu0 0.0
        %1069 = vmatpush2.msra.mxu0 %v649
        %1070 = vmatprep.subr.mxu0 0.0
        %1071 = vmatpush2.msra.mxu0 %v640
        %1072 = vmatprep.subr.mxu0 0.0
        %1073 = vmatpush2.msra.mxu0 %v631
        %1074 = vmatprep.subr.mxu0 0.0
        %1075 = vmatpush2.msra.mxu0 %v622
        %1076 = vmatprep.subr.mxu0 0.0
        %1077 = vmatpush2.msra.mxu0 %v613
        %1078 = vmatprep.subr.mxu0 0.0
        %1079 = vmatpush2.msra.mxu0 %v604
        %1080 = vmatprep.subr.mxu0 0.0
        %1081 = vmatpush2.msra.mxu0 %v595
        %1082 = vmatprep.mubr.f32.mxu0 %v732
        %1083 = vmatmul.mubr.f32.gmra.mxu0 %v442
        %v1084 = vpop.f32.mrf.mxu0
        %v1085 = vadd.f32 0.0, %v1084
        %v1086 = vpop.f32.mrf.mxu0
        %1087 = vdwg.mxu0
        %vm1088 = vcmask 281600
        %1089 = vst.msk [vmem:[#allocation2] sm:$0xf] %vm1088, 0.0
        %1099 = vrot.lane.b32.xlu0 %v801, 35
        %v1100 = vpop.permute.xlu0 %1099
        %1101 = vrot.lane.b32.xlu0 %v803, 35
        %v1102 = vpop.permute.xlu0 %1101
        %1103 = vrot.lane.b32.xlu0 %v872, 35
        %v1104 = vpop.permute.xlu0 %1103
        %1105 = vrot.lane.b32.xlu0 %v874, 35
        %v1106 = vpop.permute.xlu0 %1105
        %1107 = vrot.lane.b32.xlu0 %v943, 35
        %v1108 = vpop.permute.xlu0 %1107
        %1109 = vrot.lane.b32.xlu0 %v945, 35
        %v1110 = vpop.permute.xlu0 %1109
        %1111 = vrot.lane.b32.xlu0 %v1014, 35
        %v1112 = vpop.permute.xlu0 %1111
        %1113 = vrot.lane.b32.xlu0 %v1016, 35
        %v1114 = vpop.permute.xlu0 %1113
        %1115 = vrot.lane.b32.xlu0 %v1085, 35
        %v1116 = vpop.permute.xlu0 %1115
        %vm1117 = vcmask 285696
        %v1118 = vsel %vm1117, %v1100, %v1102
        %v1119 = vsel %vm1117, %v1102, %v1104
        %v1120 = vsel %vm1117, %v1104, %v1106
        %v1121 = vsel %vm1117, %v1106, %v1108
        %v1122 = vsel %vm1117, %v1108, %v1110
        %v1123 = vsel %vm1117, %v1110, %v1112
        %v1124 = vsel %vm1117, %v1112, %v1114
        %v1125 = vsel %vm1117, %v1114, %v1116
        %vm1135 = vcmask 1043736
        %1136 = vst.msk [vmem:[#allocation2] sm:$0xf] %vm1135, %v1100
        %1137 = vst [vmem:[#allocation2 + $0x8] sm:$0xf] %v1118
        %1138 = vst [vmem:[#allocation2 + $0x10] sm:$0xf] %v1119
        %1139 = vst [vmem:[#allocation2 + $0x18] sm:$0xf] %v1120
        %1140 = vst [vmem:[#allocation2 + $0x20] sm:$0xf] %v1121
        %1141 = vst [vmem:[#allocation2 + $0x28] sm:$0xf] %v1122
        %1142 = vst [vmem:[#allocation2 + $0x30] sm:$0xf] %v1123
        %1143 = vst [vmem:[#allocation2 + $0x38] sm:$0xf] %v1124
        %vm1144 = vcmask 519168
        %1145 = vst.msk [vmem:[#allocation2 + $0x40] sm:$0xf] %vm1144, %v1125
        %vm1146 = vcmask 277508
        %1147 = vst.msk [vmem:[#allocation2] sm:$0xf0] %vm1146, 0.0
        %v1148 = vrot.slane %v801, 4
        %v1149 = vrot.slane %v803, 4
        %v1150 = vrot.slane %v872, 4
        %v1151 = vrot.slane %v874, 4
        %v1152 = vrot.slane %v943, 4
        %v1153 = vrot.slane %v945, 4
        %v1154 = vrot.slane %v1014, 4
        %v1155 = vrot.slane %v1016, 4
        %v1156 = vrot.slane %v1085, 4
        %1157 = vrot.lane.b32.xlu0 %v1148, 34
        %v1158 = vpop.permute.xlu0 %1157
        %1159 = vrot.lane.b32.xlu0 %v1149, 34
        %v1160 = vpop.permute.xlu0 %1159
        %1161 = vrot.lane.b32.xlu0 %v1150, 34
        %v1162 = vpop.permute.xlu0 %1161
        %1163 = vrot.lane.b32.xlu0 %v1151, 34
        %v1164 = vpop.permute.xlu0 %1163
        %1165 = vrot.lane.b32.xlu0 %v1152, 34
        %v1166 = vpop.permute.xlu0 %1165
        %1167 = vrot.lane.b32.xlu0 %v1153, 34
        %v1168 = vpop.permute.xlu0 %1167
        %1169 = vrot.lane.b32.xlu0 %v1154, 34
        %v1170 = vpop.permute.xlu0 %1169
        %1171 = vrot.lane.b32.xlu0 %v1155, 34
        %v1172 = vpop.permute.xlu0 %1171
        %1173 = vrot.lane.b32.xlu0 %v1156, 34
        %v1174 = vpop.permute.xlu0 %1173
        %vm1175 = vcmask 277504
        %v1176 = vsel %vm1175, %v1158, %v1160
        %v1177 = vsel %vm1175, %v1160, %v1162
        %v1178 = vsel %vm1175, %v1162, %v1164
        %v1179 = vsel %vm1175, %v1164, %v1166
        %v1180 = vsel %vm1175, %v1166, %v1168
        %v1181 = vsel %vm1175, %v1168, %v1170
        %v1182 = vsel %vm1175, %v1170, %v1172
        %v1183 = vsel %vm1175, %v1172, %v1174
        %vm1193 = vcmask 1047828
        %1194 = vst.msk [vmem:[#allocation2] sm:$0xf0] %vm1193, %v1158
        %1195 = vst [vmem:[#allocation2 + $0x8] sm:$0xf0] %v1176
        %1196 = vst [vmem:[#allocation2 + $0x10] sm:$0xf0] %v1177
        %1197 = vst [vmem:[#allocation2 + $0x18] sm:$0xf0] %v1178
        %1198 = vst [vmem:[#allocation2 + $0x20] sm:$0xf0] %v1179
        %1199 = vst [vmem:[#allocation2 + $0x28] sm:$0xf0] %v1180
        %1200 = vst [vmem:[#allocation2 + $0x30] sm:$0xf0] %v1181
        %1201 = vst [vmem:[#allocation2 + $0x38] sm:$0xf0] %v1182
        %vm1202 = vcmask 523268
        %1203 = vst.msk [vmem:[#allocation2 + $0x40] sm:$0xf0] %vm1202, %v1183
        %vm1204 = vcmask 265216
        %1205 = vst.msk [vmem:[#allocation2 + $0x48] sm:$0xf] %vm1204, 0.0
        %1206 = vrot.lane.b32.xlu0 %v801, 33
        %v1207 = vpop.permute.xlu0 %1206
        %1208 = vrot.lane.b32.xlu0 %v803, 33
        %v1209 = vpop.permute.xlu0 %1208
        %1210 = vrot.lane.b32.xlu0 %v872, 33
        %v1211 = vpop.permute.xlu0 %1210
        %1212 = vrot.lane.b32.xlu0 %v874, 33
        %v1213 = vpop.permute.xlu0 %1212
        %1214 = vrot.lane.b32.xlu0 %v943, 33
        %v1215 = vpop.permute.xlu0 %1214
        %1216 = vrot.lane.b32.xlu0 %v945, 33
        %v1217 = vpop.permute.xlu0 %1216
        %1218 = vrot.lane.b32.xlu0 %v1014, 33
        %v1219 = vpop.permute.xlu0 %1218
        %1220 = vrot.lane.b32.xlu0 %v1016, 33
        %v1221 = vpop.permute.xlu0 %1220
        %1222 = vrot.lane.b32.xlu0 %v1085, 33
        %v1223 = vpop.permute.xlu0 %1222
        %vm1224 = vcmask 269312
        %v1225 = vsel %vm1224, %v1207, %v1209
        %v1226 = vsel %vm1224, %v1209, %v1211
        %v1227 = vsel %vm1224, %v1211, %v1213
        %v1228 = vsel %vm1224, %v1213, %v1215
        %v1229 = vsel %vm1224, %v1215, %v1217
        %v1230 = vsel %vm1224, %v1217, %v1219
        %v1231 = vsel %vm1224, %v1219, %v1221
        %v1232 = vsel %vm1224, %v1221, %v1223
        %vm1242 = vcmask 1043720
        %1243 = vst.msk [vmem:[#allocation2 + $0x48] sm:$0xf] %vm1242, %v1207
        %1244 = vst [vmem:[#allocation2 + $0x50] sm:$0xf] %v1225
        %1245 = vst [vmem:[#allocation2 + $0x58] sm:$0xf] %v1226
        %1246 = vst [vmem:[#allocation2 + $0x60] sm:$0xf] %v1227
        %1247 = vst [vmem:[#allocation2 + $0x68] sm:$0xf] %v1228
        %1248 = vst [vmem:[#allocation2 + $0x70] sm:$0xf] %v1229
        %1249 = vst [vmem:[#allocation2 + $0x78] sm:$0xf] %v1230
        %1250 = vst [vmem:[#allocation2 + $0x80] sm:$0xf] %v1231
        %1251 = vst.msk [vmem:[#allocation2 + $0x88] sm:$0xf] %vm1144, %v1232
        %vm1252 = vcmask 7172
        %1253 = vst.msk [vmem:[#allocation2 + $0x48] sm:$0xf0] %vm1252, 0.0
        %1254 = vrot.lane.b32.xlu0 %v1148, 1
        %v1255 = vpop.permute.xlu0 %1254
        %1256 = vrot.lane.b32.xlu0 %v1149, 1
        %v1257 = vpop.permute.xlu0 %1256
        %1258 = vrot.lane.b32.xlu0 %v1150, 1
        %v1259 = vpop.permute.xlu0 %1258
        %1260 = vrot.lane.b32.xlu0 %v1151, 1
        %v1261 = vpop.permute.xlu0 %1260
        %1262 = vrot.lane.b32.xlu0 %v1152, 1
        %v1263 = vpop.permute.xlu0 %1262
        %1264 = vrot.lane.b32.xlu0 %v1153, 1
        %v1265 = vpop.permute.xlu0 %1264
        %1266 = vrot.lane.b32.xlu0 %v1154, 1
        %v1267 = vpop.permute.xlu0 %1266
        %1268 = vrot.lane.b32.xlu0 %v1155, 1
        %v1269 = vpop.permute.xlu0 %1268
        %1270 = vrot.lane.b32.xlu0 %v1156, 1
        %v1271 = vpop.permute.xlu0 %1270
        %vm1272 = vcmask 7168
        %v1273 = vsel %vm1272, %v1255, %v1257
        %v1274 = vsel %vm1272, %v1257, %v1259
        %v1275 = vsel %vm1272, %v1259, %v1261
        %v1276 = vsel %vm1272, %v1261, %v1263
        %v1277 = vsel %vm1272, %v1263, %v1265
        %v1278 = vsel %vm1272, %v1265, %v1267
        %v1279 = vsel %vm1272, %v1267, %v1269
        %v1280 = vsel %vm1272, %v1269, %v1271
        %vm1290 = vcmask 1047564
        %1291 = vst.msk [vmem:[#allocation2 + $0x48] sm:$0xf0] %vm1290, %v1255
        %1292 = vst [vmem:[#allocation2 + $0x50] sm:$0xf0] %v1273
        %1293 = vst [vmem:[#allocation2 + $0x58] sm:$0xf0] %v1274
        %1294 = vst [vmem:[#allocation2 + $0x60] sm:$0xf0] %v1275
        %1295 = vst [vmem:[#allocation2 + $0x68] sm:$0xf0] %v1276
        %1296 = vst [vmem:[#allocation2 + $0x70] sm:$0xf0] %v1277
        %1297 = vst [vmem:[#allocation2 + $0x78] sm:$0xf0] %v1278
        %1298 = vst [vmem:[#allocation2 + $0x80] sm:$0xf0] %v1279
        %1299 = vst.msk [vmem:[#allocation2 + $0x88] sm:$0xf0] %vm1202, %v1280
        %1300 = vst [vmem:[#allocation2 + $0x90] sm:$0xf] %v801
        %1301 = vst [vmem:[#allocation2 + $0x98] sm:$0xf] %v803
        %1302 = vst [vmem:[#allocation2 + $0xa0] sm:$0xf] %v872
        %1303 = vst [vmem:[#allocation2 + $0xa8] sm:$0xf] %v874
        %1304 = vst [vmem:[#allocation2 + $0xb0] sm:$0xf] %v943
        %1305 = vst [vmem:[#allocation2 + $0xb8] sm:$0xf] %v945
        %1306 = vst [vmem:[#allocation2 + $0xc0] sm:$0xf] %v1014
        %1307 = vst [vmem:[#allocation2 + $0xc8] sm:$0xf] %v1016
        %1308 = vst.msk [vmem:[#allocation2 + $0xd0] sm:$0xf] %vm1144, %v1085
        %1309 = vrot.lane.b32.xlu0 %v1148, 127
        %v1310 = vpop.permute.xlu0 %1309
        %1311 = vrot.lane.b32.xlu0 %v1149, 127
        %v1312 = vpop.permute.xlu0 %1311
        %1313 = vrot.lane.b32.xlu0 %v1150, 127
        %v1314 = vpop.permute.xlu0 %1313
        %1315 = vrot.lane.b32.xlu0 %v1151, 127
        %v1316 = vpop.permute.xlu0 %1315
        %1317 = vrot.lane.b32.xlu0 %v1152, 127
        %v1318 = vpop.permute.xlu0 %1317
        %1319 = vrot.lane.b32.xlu0 %v1153, 127
        %v1320 = vpop.permute.xlu0 %1319
        %1321 = vrot.lane.b32.xlu0 %v1154, 127
        %v1322 = vpop.permute.xlu0 %1321
        %1323 = vrot.lane.b32.xlu0 %v1155, 127
        %v1324 = vpop.permute.xlu0 %1323
        %1325 = vrot.lane.b32.xlu0 %v1156, 127
        %v1326 = vpop.permute.xlu0 %1325
        %vm1327 = vcmask 1039360
        %v1328 = vsel %vm1327, %v1310, %v1312
        %v1329 = vsel %vm1327, %v1312, %v1314
        %v1330 = vsel %vm1327, %v1314, %v1316
        %v1331 = vsel %vm1327, %v1316, %v1318
        %v1332 = vsel %vm1327, %v1318, %v1320
        %v1333 = vsel %vm1327, %v1320, %v1322
        %v1334 = vsel %vm1327, %v1322, %v1324
        %v1335 = vsel %vm1327, %v1324, %v1326
        %1345 = vst [vmem:[#allocation2 + $0x90] sm:$0xf0] %v1328
        %1346 = vst [vmem:[#allocation2 + $0x98] sm:$0xf0] %v1329
        %1347 = vst [vmem:[#allocation2 + $0xa0] sm:$0xf0] %v1330
        %1348 = vst [vmem:[#allocation2 + $0xa8] sm:$0xf0] %v1331
        %1349 = vst [vmem:[#allocation2 + $0xb0] sm:$0xf0] %v1332
        %1350 = vst [vmem:[#allocation2 + $0xb8] sm:$0xf0] %v1333
        %1351 = vst [vmem:[#allocation2 + $0xc0] sm:$0xf0] %v1334
        %1352 = vst [vmem:[#allocation2 + $0xc8] sm:$0xf0] %v1335
        %vm1353 = vcmask 515076
        %1354 = vst.msk [vmem:[#allocation2 + $0xd0] sm:$0xf0] %vm1353, %v1326
        %vm1355 = vcmask 523772
        %1356 = vst.msk [vmem:[#allocation2 + $0xd0] sm:$0xf0] %vm1355, 0.0
        %1357 = vrot.lane.b32.xlu0 %v801, 95
        %v1358 = vpop.permute.xlu0 %1357
        %1359 = vrot.lane.b32.xlu0 %v803, 95
        %v1360 = vpop.permute.xlu0 %1359
        %1361 = vrot.lane.b32.xlu0 %v872, 95
        %v1362 = vpop.permute.xlu0 %1361
        %1363 = vrot.lane.b32.xlu0 %v874, 95
        %v1364 = vpop.permute.xlu0 %1363
        %1365 = vrot.lane.b32.xlu0 %v943, 95
        %v1366 = vpop.permute.xlu0 %1365
        %1367 = vrot.lane.b32.xlu0 %v945, 95
        %v1368 = vpop.permute.xlu0 %1367
        %1369 = vrot.lane.b32.xlu0 %v1014, 95
        %v1370 = vpop.permute.xlu0 %1369
        %1371 = vrot.lane.b32.xlu0 %v1016, 95
        %v1372 = vpop.permute.xlu0 %1371
        %1373 = vrot.lane.b32.xlu0 %v1085, 95
        %v1374 = vpop.permute.xlu0 %1373
        %vm1375 = vcmask 777216
        %v1376 = vsel %vm1375, %v1358, %v1360
        %v1377 = vsel %vm1375, %v1360, %v1362
        %v1378 = vsel %vm1375, %v1362, %v1364
        %v1379 = vsel %vm1375, %v1364, %v1366
        %v1380 = vsel %vm1375, %v1366, %v1368
        %v1381 = vsel %vm1375, %v1368, %v1370
        %v1382 = vsel %vm1375, %v1370, %v1372
        %v1383 = vsel %vm1375, %v1372, %v1374
        %1393 = vst [vmem:[#allocation2 + $0xd8] sm:$0xf] %v1376
        %1394 = vst [vmem:[#allocation2 + $0xe0] sm:$0xf] %v1377
        %1395 = vst [vmem:[#allocation2 + $0xe8] sm:$0xf] %v1378
        %1396 = vst [vmem:[#allocation2 + $0xf0] sm:$0xf] %v1379
        %1397 = vst [vmem:[#allocation2 + $0xf8] sm:$0xf] %v1380
        %1398 = vst [vmem:[#allocation2 + $0x100] sm:$0xf] %v1381
        %1399 = vst [vmem:[#allocation2 + $0x108] sm:$0xf] %v1382
        %1400 = vst [vmem:[#allocation2 + $0x110] sm:$0xf] %v1383
        %vm1401 = vcmask 248832
        %1402 = vst.msk [vmem:[#allocation2 + $0x118] sm:$0xf] %vm1401, %v1374
        %vm1403 = vcmask 519416
        %1404 = vst.msk [vmem:[#allocation2 + $0x118] sm:$0xf] %vm1403, 0.0
        %1405 = vrot.lane.b32.xlu0 %v1148, 94
        %v1406 = vpop.permute.xlu0 %1405
        %1407 = vrot.lane.b32.xlu0 %v1149, 94
        %v1408 = vpop.permute.xlu0 %1407
        %1409 = vrot.lane.b32.xlu0 %v1150, 94
        %v1410 = vpop.permute.xlu0 %1409
        %1411 = vrot.lane.b32.xlu0 %v1151, 94
        %v1412 = vpop.permute.xlu0 %1411
        %1413 = vrot.lane.b32.xlu0 %v1152, 94
        %v1414 = vpop.permute.xlu0 %1413
        %1415 = vrot.lane.b32.xlu0 %v1153, 94
        %v1416 = vpop.permute.xlu0 %1415
        %1417 = vrot.lane.b32.xlu0 %v1154, 94
        %v1418 = vpop.permute.xlu0 %1417
        %1419 = vrot.lane.b32.xlu0 %v1155, 94
        %v1420 = vpop.permute.xlu0 %1419
        %1421 = vrot.lane.b32.xlu0 %v1156, 94
        %v1422 = vpop.permute.xlu0 %1421
        %vm1423 = vcmask 769024
        %v1424 = vsel %vm1423, %v1406, %v1408
        %v1425 = vsel %vm1423, %v1408, %v1410
        %v1426 = vsel %vm1423, %v1410, %v1412
        %v1427 = vsel %vm1423, %v1412, %v1414
        %v1428 = vsel %vm1423, %v1414, %v1416
        %v1429 = vsel %vm1423, %v1416, %v1418
        %v1430 = vsel %vm1423, %v1418, %v1420
        %v1431 = vsel %vm1423, %v1420, %v1422
        %1441 = vst [vmem:[#allocation2 + $0xd8] sm:$0xf0] %v1424
        %1442 = vst [vmem:[#allocation2 + $0xe0] sm:$0xf0] %v1425
        %1443 = vst [vmem:[#allocation2 + $0xe8] sm:$0xf0] %v1426
        %1444 = vst [vmem:[#allocation2 + $0xf0] sm:$0xf0] %v1427
        %1445 = vst [vmem:[#allocation2 + $0xf8] sm:$0xf0] %v1428
        %1446 = vst [vmem:[#allocation2 + $0x100] sm:$0xf0] %v1429
        %1447 = vst [vmem:[#allocation2 + $0x108] sm:$0xf0] %v1430
        %1448 = vst [vmem:[#allocation2 + $0x110] sm:$0xf0] %v1431
        %vm1449 = vcmask 244740
        %1450 = vst.msk [vmem:[#allocation2 + $0x118] sm:$0xf0] %vm1449, %v1422
        %vm1451 = vcmask 523508
        %1452 = vst.msk [vmem:[#allocation2 + $0x118] sm:$0xf0] %vm1451, 0.0
        %1453 = vrot.lane.b32.xlu0 %v801, 93
        %v1454 = vpop.permute.xlu0 %1453
        %1455 = vrot.lane.b32.xlu0 %v803, 93
        %v1456 = vpop.permute.xlu0 %1455
        %1457 = vrot.lane.b32.xlu0 %v872, 93
        %v1458 = vpop.permute.xlu0 %1457
        %1459 = vrot.lane.b32.xlu0 %v874, 93
        %v1460 = vpop.permute.xlu0 %1459
        %1461 = vrot.lane.b32.xlu0 %v943, 93
        %v1462 = vpop.permute.xlu0 %1461
        %1463 = vrot.lane.b32.xlu0 %v945, 93
        %v1464 = vpop.permute.xlu0 %1463
        %1465 = vrot.lane.b32.xlu0 %v1014, 93
        %v1466 = vpop.permute.xlu0 %1465
        %1467 = vrot.lane.b32.xlu0 %v1016, 93
        %v1468 = vpop.permute.xlu0 %1467
        %1469 = vrot.lane.b32.xlu0 %v1085, 93
        %v1470 = vpop.permute.xlu0 %1469
        %vm1471 = vcmask 760832
        %v1472 = vsel %vm1471, %v1454, %v1456
        %v1473 = vsel %vm1471, %v1456, %v1458
        %v1474 = vsel %vm1471, %v1458, %v1460
        %v1475 = vsel %vm1471, %v1460, %v1462
        %v1476 = vsel %vm1471, %v1462, %v1464
        %v1477 = vsel %vm1471, %v1464, %v1466
        %v1478 = vsel %vm1471, %v1466, %v1468
        %v1479 = vsel %vm1471, %v1468, %v1470
        %1489 = vst [vmem:[#allocation2 + $0x120] sm:$0xf] %v1472
        %1490 = vst [vmem:[#allocation2 + $0x128] sm:$0xf] %v1473
        %1491 = vst [vmem:[#allocation2 + $0x130] sm:$0xf] %v1474
        %1492 = vst [vmem:[#allocation2 + $0x138] sm:$0xf] %v1475
        %1493 = vst [vmem:[#allocation2 + $0x140] sm:$0xf] %v1476
        %1494 = vst [vmem:[#allocation2 + $0x148] sm:$0xf] %v1477
        %1495 = vst [vmem:[#allocation2 + $0x150] sm:$0xf] %v1478
        %1496 = vst [vmem:[#allocation2 + $0x158] sm:$0xf] %v1479
        %vm1497 = vcmask 232448
        %1498 = vst.msk [vmem:[#allocation2 + $0x160] sm:$0xf] %vm1497, %v1470
        %vm1499 = vcmask 519400
        %1500 = vst.msk [vmem:[#allocation2 + $0x160] sm:$0xf] %vm1499, 0.0
        %v1501 = vld [vmem:[#allocation5] sm:$0xff]
        %v1502 = vld [vmem:[#allocation2] sm:$0xff]
        %v1503 = vld [vmem:[#allocation2 + $0x8] sm:$0xff]
        %v1504 = vld [vmem:[#allocation2 + $0x10] sm:$0xff]
        %v1505 = vld [vmem:[#allocation2 + $0x18] sm:$0xff]
        %v1506 = vld [vmem:[#allocation2 + $0x20] sm:$0xff]
        %v1507 = vld [vmem:[#allocation2 + $0x28] sm:$0xff]
        %v1508 = vld [vmem:[#allocation2 + $0x30] sm:$0xff]
        %v1509 = vld [vmem:[#allocation2 + $0x38] sm:$0xff]
        %v1510 = vld [vmem:[#allocation2 + $0x40] sm:$0xff]
        %v1511 = vld [vmem:[#allocation2 + $0x48] sm:$0xff]
        %v1512 = vld [vmem:[#allocation2 + $0x50] sm:$0xff]
        %v1513 = vld [vmem:[#allocation2 + $0x58] sm:$0xff]
        %v1514 = vld [vmem:[#allocation2 + $0x60] sm:$0xff]
        %v1515 = vld [vmem:[#allocation2 + $0x68] sm:$0xff]
        %v1516 = vld [vmem:[#allocation2 + $0x70] sm:$0xff]
        %v1517 = vld [vmem:[#allocation2 + $0x78] sm:$0xff]
        %v1518 = vld [vmem:[#allocation2 + $0x80] sm:$0xff]
        %v1519 = vld [vmem:[#allocation2 + $0x88] sm:$0xff]
        %v1520 = vld [vmem:[#allocation2 + $0x90] sm:$0xff]
        %v1521 = vld [vmem:[#allocation2 + $0x98] sm:$0xff]
        %v1522 = vld [vmem:[#allocation2 + $0xa0] sm:$0xff]
        %v1523 = vld [vmem:[#allocation2 + $0xa8] sm:$0xff]
        %v1524 = vld [vmem:[#allocation2 + $0xb0] sm:$0xff]
        %v1525 = vld [vmem:[#allocation2 + $0xb8] sm:$0xff]
        %v1526 = vld [vmem:[#allocation2 + $0xc0] sm:$0xff]
        %v1527 = vld [vmem:[#allocation2 + $0xc8] sm:$0xff]
        %v1528 = vld [vmem:[#allocation2 + $0xd0] sm:$0xff]
        %v1529 = vld [vmem:[#allocation2 + $0xd8] sm:$0xff]
        %v1530 = vld [vmem:[#allocation2 + $0xe0] sm:$0xff]
        %v1531 = vld [vmem:[#allocation2 + $0xe8] sm:$0xff]
        %v1532 = vld [vmem:[#allocation2 + $0xf0] sm:$0xff]
        %v1533 = vld [vmem:[#allocation2 + $0xf8] sm:$0xff]
        %v1534 = vld [vmem:[#allocation2 + $0x100] sm:$0xff]
        %v1535 = vld [vmem:[#allocation2 + $0x108] sm:$0xff]
        %v1536 = vld [vmem:[#allocation2 + $0x110] sm:$0xff]
        %v1537 = vld [vmem:[#allocation2 + $0x118] sm:$0xff]
        %v1538 = vld [vmem:[#allocation2 + $0x120] sm:$0xf]
        %v1539 = vld [vmem:[#allocation2 + $0x128] sm:$0xf]
        %v1540 = vld [vmem:[#allocation2 + $0x130] sm:$0xf]
        %v1541 = vld [vmem:[#allocation2 + $0x138] sm:$0xf]
        %v1542 = vld [vmem:[#allocation2 + $0x140] sm:$0xf]
        %v1543 = vld [vmem:[#allocation2 + $0x148] sm:$0xf]
        %v1544 = vld [vmem:[#allocation2 + $0x150] sm:$0xf]
        %v1545 = vld [vmem:[#allocation2 + $0x158] sm:$0xf]
        %v1546 = vld [vmem:[#allocation2 + $0x160] sm:$0xf]
        %v1547 = vld [vmem:[%s3] sm:$0xff]
        %1549 = vset.pattern.permute.xlu0 0
        %1550 = vperm.xlu0 %1549, %v1547
        %v1551 = vpop.permute.xlu0 %1550
        %vm1553 = vcmask 293888
        %v1555 = vsel %vm1553, %v1501, 0
        %vm1557 = vcmask 1043456
        %v1559 = vsel %vm1557, %v1538, 0
        %v1562 = vsel %vm1557, %v1539, 0
        %v1565 = vsel %vm1557, %v1540, 0
        %v1568 = vsel %vm1557, %v1541, 0
        %v1571 = vsel %vm1557, %v1542, 0
        %v1574 = vsel %vm1557, %v1543, 0
        %v1577 = vsel %vm1557, %v1544, 0
        %v1580 = vsel %vm1557, %v1545, 0
        %v1583 = vsel %vm1557, %v1546, 0
        %1585 = vmatprep.subr.mxu0 0.0
        %1586 = vmatpush1.msra.mxu0 0.0
        %1587 = vmatprep.subr.mxu0 0.0
        %1588 = vmatpush1.msra.mxu0 0.0
        %1589 = vmatprep.subr.mxu0 0.0
        %1590 = vmatpush1.msra.mxu0 0.0
        %1591 = vmatprep.subr.mxu0 0.0
        %1592 = vmatpush1.msra.mxu0 0.0
        %1593 = vmatprep.subr.mxu0 0.0
        %1594 = vmatpush1.msra.mxu0 0.0
        %1595 = vmatprep.subr.mxu0 0.0
        %1596 = vmatpush1.msra.mxu0 0.0
        %1597 = vmatprep.subr.mxu0 0.0
        %1598 = vmatpush1.msra.mxu0 0.0
        %1599 = vmatprep.subr.mxu0 0.0
        %1600 = vmatpush1.msra.mxu0 0.0
        %1601 = vmatprep.subr.mxu0 0.0
        %1602 = vmatpush1.msra.mxu0 0.0
        %1603 = vmatprep.subr.mxu0 0.0
        %1604 = vmatpush1.msra.mxu0 0.0
        %1605 = vmatprep.subr.mxu0 0.0
        %1606 = vmatpush1.msra.mxu0 0.0
        %1607 = vmatprep.subr.mxu0 %v1562
        %1608 = vmatpush1.msra.mxu0 %v1559
        %1609 = vmatprep.subr.mxu0 %v1530
        %1610 = vmatpush1.msra.mxu0 %v1529
        %1611 = vmatprep.subr.mxu0 %v1521
        %1612 = vmatpush1.msra.mxu0 %v1520
        %1613 = vmatprep.subr.mxu0 %v1512
        %1614 = vmatpush1.msra.mxu0 %v1511
        %1615 = vmatprep.subr.mxu0 %v1503
        %1616 = vmatpush1.msra.mxu0 %v1502
        %1617 = vmatprep.subr.mxu0 0.0
        %1618 = vmatpush2.msra.mxu0 0.0
        %1619 = vmatprep.subr.mxu0 0.0
        %1620 = vmatpush2.msra.mxu0 0.0
        %1621 = vmatprep.subr.mxu0 0.0
        %1622 = vmatpush2.msra.mxu0 0.0
        %1623 = vmatprep.subr.mxu0 0.0
        %1624 = vmatpush2.msra.mxu0 0.0
        %1625 = vmatprep.subr.mxu0 0.0
        %1626 = vmatpush2.msra.mxu0 0.0
        %1627 = vmatprep.subr.mxu0 0.0
        %1628 = vmatpush2.msra.mxu0 0.0
        %1629 = vmatprep.subr.mxu0 0.0
        %1630 = vmatpush2.msra.mxu0 0.0
        %1631 = vmatprep.subr.mxu0 0.0
        %1632 = vmatpush2.msra.mxu0 0.0
        %1633 = vmatprep.subr.mxu0 0.0
        %1634 = vmatpush2.msra.mxu0 0.0
        %1635 = vmatprep.subr.mxu0 0.0
        %1636 = vmatpush2.msra.mxu0 0.0
        %1637 = vmatprep.subr.mxu0 0.0
        %1638 = vmatpush2.msra.mxu0 0.0
        %1639 = vmatprep.subr.mxu0 0.0
        %1640 = vmatpush2.msra.mxu0 0.0
        %1641 = vmatprep.subr.mxu0 0.0
        %1642 = vmatpush2.msra.mxu0 0.0
        %1643 = vmatprep.subr.mxu0 0.0
        %1644 = vmatpush2.msra.mxu0 0.0
        %1645 = vmatprep.subr.mxu0 0.0
        %1646 = vmatpush2.msra.mxu0 0.0
        %1647 = vmatprep.subr.mxu0 0.0
        %1648 = vmatpush2.msra.mxu0 0.0
        %1649 = vmatprep.mubr.f32.mxu0 0.0
        %1650 = vmatmul.mubr.f32.gmra.mxu0 %v1555
        %v1651 = vpop.f32.mrf.mxu0
        %v1652 = vadd.f32 %v1551, %v1651
        %v1653 = vpop.f32.mrf.mxu0
        %v1654 = vadd.f32 %v1551, %v1653
        %1655 = vdwg.mxu0
        %1656 = vmatprep.subr.mxu0 0.0
        %1657 = vmatpush1.msra.mxu0 0.0
        %1658 = vmatprep.subr.mxu0 0.0
        %1659 = vmatpush1.msra.mxu0 0.0
        %1660 = vmatprep.subr.mxu0 0.0
        %1661 = vmatpush1.msra.mxu0 0.0
        %1662 = vmatprep.subr.mxu0 0.0
        %1663 = vmatpush1.msra.mxu0 0.0
        %1664 = vmatprep.subr.mxu0 0.0
        %1665 = vmatpush1.msra.mxu0 0.0
        %1666 = vmatprep.subr.mxu0 0.0
        %1667 = vmatpush1.msra.mxu0 0.0
        %1668 = vmatprep.subr.mxu0 0.0
        %1669 = vmatpush1.msra.mxu0 0.0
        %1670 = vmatprep.subr.mxu0 0.0
        %1671 = vmatpush1.msra.mxu0 0.0
        %1672 = vmatprep.subr.mxu0 0.0
        %1673 = vmatpush1.msra.mxu0 0.0
        %1674 = vmatprep.subr.mxu0 0.0
        %1675 = vmatpush1.msra.mxu0 0.0
        %1676 = vmatprep.subr.mxu0 0.0
        %1677 = vmatpush1.msra.mxu0 0.0
        %1678 = vmatprep.subr.mxu0 %v1568
        %1679 = vmatpush1.msra.mxu0 %v1565
        %1680 = vmatprep.subr.mxu0 %v1532
        %1681 = vmatpush1.msra.mxu0 %v1531
        %1682 = vmatprep.subr.mxu0 %v1523
        %1683 = vmatpush1.msra.mxu0 %v1522
        %1684 = vmatprep.subr.mxu0 %v1514
        %1685 = vmatpush1.msra.mxu0 %v1513
        %1686 = vmatprep.subr.mxu0 %v1505
        %1687 = vmatpush1.msra.mxu0 %v1504
        %1688 = vmatprep.subr.mxu0 0.0
        %1689 = vmatpush2.msra.mxu0 0.0
        %1690 = vmatprep.subr.mxu0 0.0
        %1691 = vmatpush2.msra.mxu0 0.0
        %1692 = vmatprep.subr.mxu0 0.0
        %1693 = vmatpush2.msra.mxu0 0.0
        %1694 = vmatprep.subr.mxu0 0.0
        %1695 = vmatpush2.msra.mxu0 0.0
        %1696 = vmatprep.subr.mxu0 0.0
        %1697 = vmatpush2.msra.mxu0 0.0
        %1698 = vmatprep.subr.mxu0 0.0
        %1699 = vmatpush2.msra.mxu0 0.0
        %1700 = vmatprep.subr.mxu0 0.0
        %1701 = vmatpush2.msra.mxu0 0.0
        %1702 = vmatprep.subr.mxu0 0.0
        %1703 = vmatpush2.msra.mxu0 0.0
        %1704 = vmatprep.subr.mxu0 0.0
        %1705 = vmatpush2.msra.mxu0 0.0
        %1706 = vmatprep.subr.mxu0 0.0
        %1707 = vmatpush2.msra.mxu0 0.0
        %1708 = vmatprep.subr.mxu0 0.0
        %1709 = vmatpush2.msra.mxu0 0.0
        %1710 = vmatprep.subr.mxu0 0.0
        %1711 = vmatpush2.msra.mxu0 0.0
        %1712 = vmatprep.subr.mxu0 0.0
        %1713 = vmatpush2.msra.mxu0 0.0
        %1714 = vmatprep.subr.mxu0 0.0
        %1715 = vmatpush2.msra.mxu0 0.0
        %1716 = vmatprep.subr.mxu0 0.0
        %1717 = vmatpush2.msra.mxu0 0.0
        %1718 = vmatprep.subr.mxu0 0.0
        %1719 = vmatpush2.msra.mxu0 0.0
        %1720 = vmatprep.mubr.f32.mxu0 0.0
        %1721 = vmatmul.mubr.f32.gmra.mxu0 %v1555
        %v1722 = vpop.f32.mrf.mxu0
        %v1723 = vadd.f32 %v1551, %v1722
        %v1724 = vpop.f32.mrf.mxu0
        %v1725 = vadd.f32 %v1551, %v1724
        %1726 = vdwg.mxu0
        %1727 = vmatprep.subr.mxu0 0.0
        %1728 = vmatpush1.msra.mxu0 0.0
        %1729 = vmatprep.subr.mxu0 0.0
        %1730 = vmatpush1.msra.mxu0 0.0
        %1731 = vmatprep.subr.mxu0 0.0
        %1732 = vmatpush1.msra.mxu0 0.0
        %1733 = vmatprep.subr.mxu0 0.0
        %1734 = vmatpush1.msra.mxu0 0.0
        %1735 = vmatprep.subr.mxu0 0.0
        %1736 = vmatpush1.msra.mxu0 0.0
        %1737 = vmatprep.subr.mxu0 0.0
        %1738 = vmatpush1.msra.mxu0 0.0
        %1739 = vmatprep.subr.mxu0 0.0
        %1740 = vmatpush1.msra.mxu0 0.0
        %1741 = vmatprep.subr.mxu0 0.0
        %1742 = vmatpush1.msra.mxu0 0.0
        %1743 = vmatprep.subr.mxu0 0.0
        %1744 = vmatpush1.msra.mxu0 0.0
        %1745 = vmatprep.subr.mxu0 0.0
        %1746 = vmatpush1.msra.mxu0 0.0
        %1747 = vmatprep.subr.mxu0 0.0
        %1748 = vmatpush1.msra.mxu0 0.0
        %1749 = vmatprep.subr.mxu0 %v1574
        %1750 = vmatpush1.msra.mxu0 %v1571
        %1751 = vmatprep.subr.mxu0 %v1534
        %1752 = vmatpush1.msra.mxu0 %v1533
        %1753 = vmatprep.subr.mxu0 %v1525
        %1754 = vmatpush1.msra.mxu0 %v1524
        %1755 = vmatprep.subr.mxu0 %v1516
        %1756 = vmatpush1.msra.mxu0 %v1515
        %1757 = vmatprep.subr.mxu0 %v1507
        %1758 = vmatpush1.msra.mxu0 %v1506
        %1759 = vmatprep.subr.mxu0 0.0
        %1760 = vmatpush2.msra.mxu0 0.0
        %1761 = vmatprep.subr.mxu0 0.0
        %1762 = vmatpush2.msra.mxu0 0.0
        %1763 = vmatprep.subr.mxu0 0.0
        %1764 = vmatpush2.msra.mxu0 0.0
        %1765 = vmatprep.subr.mxu0 0.0
        %1766 = vmatpush2.msra.mxu0 0.0
        %1767 = vmatprep.subr.mxu0 0.0
        %1768 = vmatpush2.msra.mxu0 0.0
        %1769 = vmatprep.subr.mxu0 0.0
        %1770 = vmatpush2.msra.mxu0 0.0
        %1771 = vmatprep.subr.mxu0 0.0
        %1772 = vmatpush2.msra.mxu0 0.0
        %1773 = vmatprep.subr.mxu0 0.0
        %1774 = vmatpush2.msra.mxu0 0.0
        %1775 = vmatprep.subr.mxu0 0.0
        %1776 = vmatpush2.msra.mxu0 0.0
        %1777 = vmatprep.subr.mxu0 0.0
        %1778 = vmatpush2.msra.mxu0 0.0
        %1779 = vmatprep.subr.mxu0 0.0
        %1780 = vmatpush2.msra.mxu0 0.0
        %1781 = vmatprep.subr.mxu0 0.0
        %1782 = vmatpush2.msra.mxu0 0.0
        %1783 = vmatprep.subr.mxu0 0.0
        %1784 = vmatpush2.msra.mxu0 0.0
        %1785 = vmatprep.subr.mxu0 0.0
        %1786 = vmatpush2.msra.mxu0 0.0
        %1787 = vmatprep.subr.mxu0 0.0
        %1788 = vmatpush2.msra.mxu0 0.0
        %1789 = vmatprep.subr.mxu0 0.0
        %1790 = vmatpush2.msra.mxu0 0.0
        %1791 = vmatprep.mubr.f32.mxu0 0.0
        %1792 = vmatmul.mubr.f32.gmra.mxu0 %v1555
        %v1793 = vpop.f32.mrf.mxu0
        %v1794 = vadd.f32 %v1551, %v1793
        %v1795 = vpop.f32.mrf.mxu0
        %v1796 = vadd.f32 %v1551, %v1795
        %1797 = vdwg.mxu0
        %1798 = vmatprep.subr.mxu0 0.0
        %1799 = vmatpush1.msra.mxu0 0.0
        %1800 = vmatprep.subr.mxu0 0.0
        %1801 = vmatpush1.msra.mxu0 0.0
        %1802 = vmatprep.subr.mxu0 0.0
        %1803 = vmatpush1.msra.mxu0 0.0
        %1804 = vmatprep.subr.mxu0 0.0
        %1805 = vmatpush1.msra.mxu0 0.0
        %1806 = vmatprep.subr.mxu0 0.0
        %1807 = vmatpush1.msra.mxu0 0.0
        %1808 = vmatprep.subr.mxu0 0.0
        %1809 = vmatpush1.msra.mxu0 0.0
        %1810 = vmatprep.subr.mxu0 0.0
        %1811 = vmatpush1.msra.mxu0 0.0
        %1812 = vmatprep.subr.mxu0 0.0
        %1813 = vmatpush1.msra.mxu0 0.0
        %1814 = vmatprep.subr.mxu0 0.0
        %1815 = vmatpush1.msra.mxu0 0.0
        %1816 = vmatprep.subr.mxu0 0.0
        %1817 = vmatpush1.msra.mxu0 0.0
        %1818 = vmatprep.subr.mxu0 0.0
        %1819 = vmatpush1.msra.mxu0 0.0
        %1820 = vmatprep.subr.mxu0 %v1580
        %1821 = vmatpush1.msra.mxu0 %v1577
        %1822 = vmatprep.subr.mxu0 %v1536
        %1823 = vmatpush1.msra.mxu0 %v1535
        %1824 = vmatprep.subr.mxu0 %v1527
        %1825 = vmatpush1.msra.mxu0 %v1526
        %1826 = vmatprep.subr.mxu0 %v1518
        %1827 = vmatpush1.msra.mxu0 %v1517
        %1828 = vmatprep.subr.mxu0 %v1509
        %1829 = vmatpush1.msra.mxu0 %v1508
        %1830 = vmatprep.subr.mxu0 0.0
        %1831 = vmatpush2.msra.mxu0 0.0
        %1832 = vmatprep.subr.mxu0 0.0
        %1833 = vmatpush2.msra.mxu0 0.0
        %1834 = vmatprep.subr.mxu0 0.0
        %1835 = vmatpush2.msra.mxu0 0.0
        %1836 = vmatprep.subr.mxu0 0.0
        %1837 = vmatpush2.msra.mxu0 0.0
        %1838 = vmatprep.subr.mxu0 0.0
        %1839 = vmatpush2.msra.mxu0 0.0
        %1840 = vmatprep.subr.mxu0 0.0
        %1841 = vmatpush2.msra.mxu0 0.0
        %1842 = vmatprep.subr.mxu0 0.0
        %1843 = vmatpush2.msra.mxu0 0.0
        %1844 = vmatprep.subr.mxu0 0.0
        %1845 = vmatpush2.msra.mxu0 0.0
        %1846 = vmatprep.subr.mxu0 0.0
        %1847 = vmatpush2.msra.mxu0 0.0
        %1848 = vmatprep.subr.mxu0 0.0
        %1849 = vmatpush2.msra.mxu0 0.0
        %1850 = vmatprep.subr.mxu0 0.0
        %1851 = vmatpush2.msra.mxu0 0.0
        %1852 = vmatprep.subr.mxu0 0.0
        %1853 = vmatpush2.msra.mxu0 0.0
        %1854 = vmatprep.subr.mxu0 0.0
        %1855 = vmatpush2.msra.mxu0 0.0
        %1856 = vmatprep.subr.mxu0 0.0
        %1857 = vmatpush2.msra.mxu0 0.0
        %1858 = vmatprep.subr.mxu0 0.0
        %1859 = vmatpush2.msra.mxu0 0.0
        %1860 = vmatprep.subr.mxu0 0.0
        %1861 = vmatpush2.msra.mxu0 0.0
        %1862 = vmatprep.mubr.f32.mxu0 0.0
        %1863 = vmatmul.mubr.f32.gmra.mxu0 %v1555
        %v1864 = vpop.f32.mrf.mxu0
        %v1865 = vadd.f32 %v1551, %v1864
        %v1866 = vpop.f32.mrf.mxu0
        %v1867 = vadd.f32 %v1551, %v1866
        %1868 = vdwg.mxu0
        %1869 = vmatprep.subr.mxu0 0.0
        %1870 = vmatpush1.msra.mxu0 0.0
        %1871 = vmatprep.subr.mxu0 0.0
        %1872 = vmatpush1.msra.mxu0 0.0
        %1873 = vmatprep.subr.mxu0 0.0
        %1874 = vmatpush1.msra.mxu0 0.0
        %1875 = vmatprep.subr.mxu0 0.0
        %1876 = vmatpush1.msra.mxu0 0.0
        %1877 = vmatprep.subr.mxu0 0.0
        %1878 = vmatpush1.msra.mxu0 0.0
        %1879 = vmatprep.subr.mxu0 0.0
        %1880 = vmatpush1.msra.mxu0 0.0
        %1881 = vmatprep.subr.mxu0 0.0
        %1882 = vmatpush1.msra.mxu0 0.0
        %1883 = vmatprep.subr.mxu0 0.0
        %1884 = vmatpush1.msra.mxu0 0.0
        %1885 = vmatprep.subr.mxu0 0.0
        %1886 = vmatpush1.msra.mxu0 0.0
        %1887 = vmatprep.subr.mxu0 0.0
        %1888 = vmatpush1.msra.mxu0 0.0
        %1889 = vmatprep.subr.mxu0 0.0
        %1890 = vmatpush1.msra.mxu0 0.0
        %1891 = vmatprep.subr.mxu0 0.0
        %1892 = vmatpush1.msra.mxu0 %v1583
        %1893 = vmatprep.subr.mxu0 0.0
        %1894 = vmatpush1.msra.mxu0 %v1537
        %1895 = vmatprep.subr.mxu0 0.0
        %1896 = vmatpush1.msra.mxu0 %v1528
        %1897 = vmatprep.subr.mxu0 0.0
        %1898 = vmatpush1.msra.mxu0 %v1519
        %1899 = vmatprep.subr.mxu0 0.0
        %1900 = vmatpush1.msra.mxu0 %v1510
        %1901 = vmatprep.subr.mxu0 0.0
        %1902 = vmatpush2.msra.mxu0 0.0
        %1903 = vmatprep.subr.mxu0 0.0
        %1904 = vmatpush2.msra.mxu0 0.0
        %1905 = vmatprep.subr.mxu0 0.0
        %1906 = vmatpush2.msra.mxu0 0.0
        %1907 = vmatprep.subr.mxu0 0.0
        %1908 = vmatpush2.msra.mxu0 0.0
        %1909 = vmatprep.subr.mxu0 0.0
        %1910 = vmatpush2.msra.mxu0 0.0
        %1911 = vmatprep.subr.mxu0 0.0
        %1912 = vmatpush2.msra.mxu0 0.0
        %1913 = vmatprep.subr.mxu0 0.0
        %1914 = vmatpush2.msra.mxu0 0.0
        %1915 = vmatprep.subr.mxu0 0.0
        %1916 = vmatpush2.msra.mxu0 0.0
        %1917 = vmatprep.subr.mxu0 0.0
        %1918 = vmatpush2.msra.mxu0 0.0
        %1919 = vmatprep.subr.mxu0 0.0
        %1920 = vmatpush2.msra.mxu0 0.0
        %1921 = vmatprep.subr.mxu0 0.0
        %1922 = vmatpush2.msra.mxu0 0.0
        %1923 = vmatprep.subr.mxu0 0.0
        %1924 = vmatpush2.msra.mxu0 0.0
        %1925 = vmatprep.subr.mxu0 0.0
        %1926 = vmatpush2.msra.mxu0 0.0
        %1927 = vmatprep.subr.mxu0 0.0
        %1928 = vmatpush2.msra.mxu0 0.0
        %1929 = vmatprep.subr.mxu0 0.0
        %1930 = vmatpush2.msra.mxu0 0.0
        %1931 = vmatprep.subr.mxu0 0.0
        %1932 = vmatpush2.msra.mxu0 0.0
        %1933 = vmatprep.mubr.f32.mxu0 0.0
        %1934 = vmatmul.mubr.f32.gmra.mxu0 %v1555
        %v1935 = vpop.f32.mrf.mxu0
        %v1936 = vadd.f32 %v1551, %v1935
        %v1937 = vpop.f32.mrf.mxu0
        %1938 = vdwg.mxu0
        %v1939 = vmax.f32 %v1652, 0.0
        %v1940 = vmax.f32 %v1654, 0.0
        %v1941 = vmax.f32 %v1723, 0.0
        %v1942 = vmax.f32 %v1725, 0.0
        %v1943 = vmax.f32 %v1794, 0.0
        %v1944 = vmax.f32 %v1796, 0.0
        %v1945 = vmax.f32 %v1865, 0.0
        %v1946 = vmax.f32 %v1867, 0.0
        %v1947 = vmax.f32 %v1936, 0.0
        %1948 = vst [vmem:[%s429] sm:$0xff] %v1939
        %1949 = vst [vmem:[%s429 + $0x8] sm:$0xff] %v1940
        %1950 = vst [vmem:[%s429 + $0x10] sm:$0xff] %v1941
        %1951 = vst [vmem:[%s429 + $0x18] sm:$0xff] %v1942
        %1952 = vst [vmem:[%s429 + $0x20] sm:$0xff] %v1943
        %1953 = vst [vmem:[%s429 + $0x28] sm:$0xff] %v1944
        %1954 = vst [vmem:[%s429 + $0x30] sm:$0xff] %v1945
        %1955 = vst [vmem:[%s429 + $0x38] sm:$0xff] %v1946
        %vm1956 = vcmask 523264
        %1957 = vst.msk [vmem:[%s429 + $0x40] sm:$0xff] %vm1956, %v1947
        %v1960 = vlaneseq
        %v1961 = vshrl.u32 %v1960, 7
        %v1962 = vsub.s32 0, %v1961
        %v1963 = vrot.slane %v440, %v1962
        %v1964 = vlaneseq
        %v1965 = vshrl.u32 %v1964, 7
        %v1966 = vsub.s32 1, %v1965
        %v1967 = vrot.slane %v440, %v1966
        %v1968 = vlaneseq
        %v1969 = vshrl.u32 %v1968, 7
        %v1970 = vsub.s32 2, %v1969
        %v1971 = vrot.slane %v440, %v1970
        %v1972 = vlaneseq
        %v1973 = vshrl.u32 %v1972, 7
        %v1974 = vsub.s32 3, %v1973
        %v1975 = vrot.slane %v440, %v1974
        %v1976 = vlaneseq
        %v1977 = vshrl.u32 %v1976, 7
        %v1978 = vsub.s32 4, %v1977
        %v1979 = vrot.slane %v440, %v1978
        %v1980 = vlaneseq
        %v1981 = vshrl.u32 %v1980, 7
        %v1982 = vsub.s32 5, %v1981
        %v1983 = vrot.slane %v440, %v1982
        %v1984 = vlaneseq
        %v1985 = vshrl.u32 %v1984, 7
        %v1986 = vsub.s32 6, %v1985
        %v1987 = vrot.slane %v440, %v1986
        %v1988 = vlaneseq
        %v1989 = vshrl.u32 %v1988, 7
        %v1990 = vsub.s32 7, %v1989
        %v1991 = vrot.slane %v440, %v1990
        %v1992 = vlaneseq
        %v1993 = vshrl.u32 %v1992, 7
        %v1994 = vsub.s32 0, %v1993
        %v1995 = vrot.slane %v441, %v1994
        %v2005 = vmul.f32 %v1939, %v1963
        %v2006 = vmul.f32 %v1940, %v1967
        %v2007 = vmul.f32 %v1941, %v1971
        %v2008 = vmul.f32 %v1942, %v1975
        %v2009 = vmul.f32 %v1943, %v1979
        %v2010 = vmul.f32 %v1944, %v1983
        %v2011 = vmul.f32 %v1945, %v1987
        %v2012 = vmul.f32 %v1946, %v1991
        %v2013 = vmul.f32 %v1947, %v1995
        %2014 = vst.msk [vmem:[#allocation3] sm:$0xff] %vm1117, 0.0
        %2024 = vrot.lane.b32.xlu0 %v2005, 35
        %v2025 = vpop.permute.xlu0 %2024
        %2026 = vrot.lane.b32.xlu0 %v2006, 35
        %v2027 = vpop.permute.xlu0 %2026
        %2028 = vrot.lane.b32.xlu0 %v2007, 35
        %v2029 = vpop.permute.xlu0 %2028
        %2030 = vrot.lane.b32.xlu0 %v2008, 35
        %v2031 = vpop.permute.xlu0 %2030
        %2032 = vrot.lane.b32.xlu0 %v2009, 35
        %v2033 = vpop.permute.xlu0 %2032
        %2034 = vrot.lane.b32.xlu0 %v2010, 35
        %v2035 = vpop.permute.xlu0 %2034
        %2036 = vrot.lane.b32.xlu0 %v2011, 35
        %v2037 = vpop.permute.xlu0 %2036
        %2038 = vrot.lane.b32.xlu0 %v2012, 35
        %v2039 = vpop.permute.xlu0 %2038
        %2040 = vrot.lane.b32.xlu0 %v2013, 35
        %v2041 = vpop.permute.xlu0 %2040
        %v2042 = vsel %vm1117, %v2025, %v2027
        %v2043 = vsel %vm1117, %v2027, %v2029
        %v2044 = vsel %vm1117, %v2029, %v2031
        %v2045 = vsel %vm1117, %v2031, %v2033
        %v2046 = vsel %vm1117, %v2033, %v2035
        %v2047 = vsel %vm1117, %v2035, %v2037
        %v2048 = vsel %vm1117, %v2037, %v2039
        %v2049 = vsel %vm1117, %v2039, %v2041
        %vm2059 = vcmask 1047832
        %2060 = vst.msk [vmem:[#allocation3] sm:$0xff] %vm2059, %v2025
        %2061 = vst [vmem:[#allocation3 + $0x8] sm:$0xff] %v2042
        %2062 = vst [vmem:[#allocation3 + $0x10] sm:$0xff] %v2043
        %2063 = vst [vmem:[#allocation3 + $0x18] sm:$0xff] %v2044
        %2064 = vst [vmem:[#allocation3 + $0x20] sm:$0xff] %v2045
        %2065 = vst [vmem:[#allocation3 + $0x28] sm:$0xff] %v2046
        %2066 = vst [vmem:[#allocation3 + $0x30] sm:$0xff] %v2047
        %2067 = vst [vmem:[#allocation3 + $0x38] sm:$0xff] %v2048
        %2068 = vst.msk [vmem:[#allocation3 + $0x40] sm:$0xff] %vm1956, %v2049
        %2069 = vst.msk [vmem:[#allocation3 + $0x48] sm:$0xff] %vm1175, 0.0
        %2070 = vrot.lane.b32.xlu0 %v2005, 34
        %v2071 = vpop.permute.xlu0 %2070
        %2072 = vrot.lane.b32.xlu0 %v2006, 34
        %v2073 = vpop.permute.xlu0 %2072
        %2074 = vrot.lane.b32.xlu0 %v2007, 34
        %v2075 = vpop.permute.xlu0 %2074
        %2076 = vrot.lane.b32.xlu0 %v2008, 34
        %v2077 = vpop.permute.xlu0 %2076
        %2078 = vrot.lane.b32.xlu0 %v2009, 34
        %v2079 = vpop.permute.xlu0 %2078
        %2080 = vrot.lane.b32.xlu0 %v2010, 34
        %v2081 = vpop.permute.xlu0 %2080
        %2082 = vrot.lane.b32.xlu0 %v2011, 34
        %v2083 = vpop.permute.xlu0 %2082
        %2084 = vrot.lane.b32.xlu0 %v2012, 34
        %v2085 = vpop.permute.xlu0 %2084
        %2086 = vrot.lane.b32.xlu0 %v2013, 34
        %v2087 = vpop.permute.xlu0 %2086
        %v2088 = vsel %vm1175, %v2071, %v2073
        %v2089 = vsel %vm1175, %v2073, %v2075
        %v2090 = vsel %vm1175, %v2075, %v2077
        %v2091 = vsel %vm1175, %v2077, %v2079
        %v2092 = vsel %vm1175, %v2079, %v2081
        %v2093 = vsel %vm1175, %v2081, %v2083
        %v2094 = vsel %vm1175, %v2083, %v2085
        %v2095 = vsel %vm1175, %v2085, %v2087
        %vm2105 = vcmask 1047824
        %2106 = vst.msk [vmem:[#allocation3 + $0x48] sm:$0xff] %vm2105, %v2071
        %2107 = vst [vmem:[#allocation3 + $0x50] sm:$0xff] %v2088
        %2108 = vst [vmem:[#allocation3 + $0x58] sm:$0xff] %v2089
        %2109 = vst [vmem:[#allocation3 + $0x60] sm:$0xff] %v2090
        %2110 = vst [vmem:[#allocation3 + $0x68] sm:$0xff] %v2091
        %2111 = vst [vmem:[#allocation3 + $0x70] sm:$0xff] %v2092
        %2112 = vst [vmem:[#allocation3 + $0x78] sm:$0xff] %v2093
        %2113 = vst [vmem:[#allocation3 + $0x80] sm:$0xff] %v2094
        %2114 = vst.msk [vmem:[#allocation3 + $0x88] sm:$0xff] %vm1956, %v2095
        %2115 = vst.msk [vmem:[#allocation3 + $0x90] sm:$0xff] %vm1224, 0.0
        %2116 = vrot.lane.b32.xlu0 %v2005, 33
        %v2117 = vpop.permute.xlu0 %2116
        %2118 = vrot.lane.b32.xlu0 %v2006, 33
        %v2119 = vpop.permute.xlu0 %2118
        %2120 = vrot.lane.b32.xlu0 %v2007, 33
        %v2121 = vpop.permute.xlu0 %2120
        %2122 = vrot.lane.b32.xlu0 %v2008, 33
        %v2123 = vpop.permute.xlu0 %2122
        %2124 = vrot.lane.b32.xlu0 %v2009, 33
        %v2125 = vpop.permute.xlu0 %2124
        %2126 = vrot.lane.b32.xlu0 %v2010, 33
        %v2127 = vpop.permute.xlu0 %2126
        %2128 = vrot.lane.b32.xlu0 %v2011, 33
        %v2129 = vpop.permute.xlu0 %2128
        %2130 = vrot.lane.b32.xlu0 %v2012, 33
        %v2131 = vpop.permute.xlu0 %2130
        %2132 = vrot.lane.b32.xlu0 %v2013, 33
        %v2133 = vpop.permute.xlu0 %2132
        %v2134 = vsel %vm1224, %v2117, %v2119
        %v2135 = vsel %vm1224, %v2119, %v2121
        %v2136 = vsel %vm1224, %v2121, %v2123
        %v2137 = vsel %vm1224, %v2123, %v2125
        %v2138 = vsel %vm1224, %v2125, %v2127
        %v2139 = vsel %vm1224, %v2127, %v2129
        %v2140 = vsel %vm1224, %v2129, %v2131
        %v2141 = vsel %vm1224, %v2131, %v2133
        %vm2151 = vcmask 1047816
        %2152 = vst.msk [vmem:[#allocation3 + $0x90] sm:$0xff] %vm2151, %v2117
        %2153 = vst [vmem:[#allocation3 + $0x98] sm:$0xff] %v2134
        %2154 = vst [vmem:[#allocation3 + $0xa0] sm:$0xff] %v2135
        %2155 = vst [vmem:[#allocation3 + $0xa8] sm:$0xff] %v2136
        %2156 = vst [vmem:[#allocation3 + $0xb0] sm:$0xff] %v2137
        %2157 = vst [vmem:[#allocation3 + $0xb8] sm:$0xff] %v2138
        %2158 = vst [vmem:[#allocation3 + $0xc0] sm:$0xff] %v2139
        %2159 = vst [vmem:[#allocation3 + $0xc8] sm:$0xff] %v2140
        %2160 = vst.msk [vmem:[#allocation3 + $0xd0] sm:$0xff] %vm1956, %v2141
        %2161 = vst.msk [vmem:[#allocation3 + $0xd8] sm:$0xff] %vm1272, 0.0
        %2162 = vrot.lane.b32.xlu0 %v2005, 1
        %v2163 = vpop.permute.xlu0 %2162
        %2164 = vrot.lane.b32.xlu0 %v2006, 1
        %v2165 = vpop.permute.xlu0 %2164
        %2166 = vrot.lane.b32.xlu0 %v2007, 1
        %v2167 = vpop.permute.xlu0 %2166
        %2168 = vrot.lane.b32.xlu0 %v2008, 1
        %v2169 = vpop.permute.xlu0 %2168
        %2170 = vrot.lane.b32.xlu0 %v2009, 1
        %v2171 = vpop.permute.xlu0 %2170
        %2172 = vrot.lane.b32.xlu0 %v2010, 1
        %v2173 = vpop.permute.xlu0 %2172
        %2174 = vrot.lane.b32.xlu0 %v2011, 1
        %v2175 = vpop.permute.xlu0 %2174
        %2176 = vrot.lane.b32.xlu0 %v2012, 1
        %v2177 = vpop.permute.xlu0 %2176
        %2178 = vrot.lane.b32.xlu0 %v2013, 1
        %v2179 = vpop.permute.xlu0 %2178
        %v2180 = vsel %vm1272, %v2163, %v2165
        %v2181 = vsel %vm1272, %v2165, %v2167
        %v2182 = vsel %vm1272, %v2167, %v2169
        %v2183 = vsel %vm1272, %v2169, %v2171
        %v2184 = vsel %vm1272, %v2171, %v2173
        %v2185 = vsel %vm1272, %v2173, %v2175
        %v2186 = vsel %vm1272, %v2175, %v2177
        %v2187 = vsel %vm1272, %v2177, %v2179
        %vm2197 = vcmask 1047560
        %2198 = vst.msk [vmem:[#allocation3 + $0xd8] sm:$0xff] %vm2197, %v2163
        %2199 = vst [vmem:[#allocation3 + $0xe0] sm:$0xff] %v2180
        %2200 = vst [vmem:[#allocation3 + $0xe8] sm:$0xff] %v2181
        %2201 = vst [vmem:[#allocation3 + $0xf0] sm:$0xff] %v2182
        %2202 = vst [vmem:[#allocation3 + $0xf8] sm:$0xff] %v2183
        %2203 = vst [vmem:[#allocation3 + $0x100] sm:$0xff] %v2184
        %2204 = vst [vmem:[#allocation3 + $0x108] sm:$0xff] %v2185
        %2205 = vst [vmem:[#allocation3 + $0x110] sm:$0xff] %v2186
        %2206 = vst.msk [vmem:[#allocation3 + $0x118] sm:$0xff] %vm1956, %v2187
        %2207 = vst [vmem:[#allocation3 + $0x120] sm:$0xff] %v2005
        %2208 = vst [vmem:[#allocation3 + $0x128] sm:$0xff] %v2006
        %2209 = vst [vmem:[#allocation3 + $0x130] sm:$0xff] %v2007
        %2210 = vst [vmem:[#allocation3 + $0x138] sm:$0xff] %v2008
        %2211 = vst [vmem:[#allocation3 + $0x140] sm:$0xff] %v2009
        %2212 = vst [vmem:[#allocation3 + $0x148] sm:$0xff] %v2010
        %2213 = vst [vmem:[#allocation3 + $0x150] sm:$0xff] %v2011
        %2214 = vst [vmem:[#allocation3 + $0x158] sm:$0xff] %v2012
        %2215 = vst.msk [vmem:[#allocation3 + $0x160] sm:$0xff] %vm1956, %v2013
        %2216 = vrot.lane.b32.xlu0 %v2005, 127
        %v2217 = vpop.permute.xlu0 %2216
        %2218 = vrot.lane.b32.xlu0 %v2006, 127
        %v2219 = vpop.permute.xlu0 %2218
        %2220 = vrot.lane.b32.xlu0 %v2007, 127
        %v2221 = vpop.permute.xlu0 %2220
        %2222 = vrot.lane.b32.xlu0 %v2008, 127
        %v2223 = vpop.permute.xlu0 %2222
        %2224 = vrot.lane.b32.xlu0 %v2009, 127
        %v2225 = vpop.permute.xlu0 %2224
        %2226 = vrot.lane.b32.xlu0 %v2010, 127
        %v2227 = vpop.permute.xlu0 %2226
        %2228 = vrot.lane.b32.xlu0 %v2011, 127
        %v2229 = vpop.permute.xlu0 %2228
        %2230 = vrot.lane.b32.xlu0 %v2012, 127
        %v2231 = vpop.permute.xlu0 %2230
        %2232 = vrot.lane.b32.xlu0 %v2013, 127
        %v2233 = vpop.permute.xlu0 %2232
        %v2234 = vsel %vm1327, %v2217, %v2219
        %v2235 = vsel %vm1327, %v2219, %v2221
        %v2236 = vsel %vm1327, %v2221, %v2223
        %v2237 = vsel %vm1327, %v2223, %v2225
        %v2238 = vsel %vm1327, %v2225, %v2227
        %v2239 = vsel %vm1327, %v2227, %v2229
        %v2240 = vsel %vm1327, %v2229, %v2231
        %v2241 = vsel %vm1327, %v2231, %v2233
        %2251 = vst [vmem:[#allocation3 + $0x168] sm:$0xff] %v2234
        %2252 = vst [vmem:[#allocation3 + $0x170] sm:$0xff] %v2235
        %2253 = vst [vmem:[#allocation3 + $0x178] sm:$0xff] %v2236
        %2254 = vst [vmem:[#allocation3 + $0x180] sm:$0xff] %v2237
        %2255 = vst [vmem:[#allocation3 + $0x188] sm:$0xff] %v2238
        %2256 = vst [vmem:[#allocation3 + $0x190] sm:$0xff] %v2239
        %2257 = vst [vmem:[#allocation3 + $0x198] sm:$0xff] %v2240
        %2258 = vst [vmem:[#allocation3 + $0x1a0] sm:$0xff] %v2241
        %vm2259 = vcmask 515072
        %2260 = vst.msk [vmem:[#allocation3 + $0x1a8] sm:$0xff] %vm2259, %v2233
        %vm2261 = vcmask 523768
        %2262 = vst.msk [vmem:[#allocation3 + $0x1a8] sm:$0xff] %vm2261, 0.0
        %2263 = vrot.lane.b32.xlu0 %v2005, 95
        %v2264 = vpop.permute.xlu0 %2263
        %2265 = vrot.lane.b32.xlu0 %v2006, 95
        %v2266 = vpop.permute.xlu0 %2265
        %2267 = vrot.lane.b32.xlu0 %v2007, 95
        %v2268 = vpop.permute.xlu0 %2267
        %2269 = vrot.lane.b32.xlu0 %v2008, 95
        %v2270 = vpop.permute.xlu0 %2269
        %2271 = vrot.lane.b32.xlu0 %v2009, 95
        %v2272 = vpop.permute.xlu0 %2271
        %2273 = vrot.lane.b32.xlu0 %v2010, 95
        %v2274 = vpop.permute.xlu0 %2273
        %2275 = vrot.lane.b32.xlu0 %v2011, 95
        %v2276 = vpop.permute.xlu0 %2275
        %2277 = vrot.lane.b32.xlu0 %v2012, 95
        %v2278 = vpop.permute.xlu0 %2277
        %2279 = vrot.lane.b32.xlu0 %v2013, 95
        %v2280 = vpop.permute.xlu0 %2279
        %v2281 = vsel %vm1375, %v2264, %v2266
        %v2282 = vsel %vm1375, %v2266, %v2268
        %v2283 = vsel %vm1375, %v2268, %v2270
        %v2284 = vsel %vm1375, %v2270, %v2272
        %v2285 = vsel %vm1375, %v2272, %v2274
        %v2286 = vsel %vm1375, %v2274, %v2276
        %v2287 = vsel %vm1375, %v2276, %v2278
        %v2288 = vsel %vm1375, %v2278, %v2280
        %2298 = vst [vmem:[#allocation3 + $0x1b0] sm:$0xff] %v2281
        %2299 = vst [vmem:[#allocation3 + $0x1b8] sm:$0xff] %v2282
        %2300 = vst [vmem:[#allocation3 + $0x1c0] sm:$0xff] %v2283
        %2301 = vst [vmem:[#allocation3 + $0x1c8] sm:$0xff] %v2284
        %2302 = vst [vmem:[#allocation3 + $0x1d0] sm:$0xff] %v2285
        %2303 = vst [vmem:[#allocation3 + $0x1d8] sm:$0xff] %v2286
        %2304 = vst [vmem:[#allocation3 + $0x1e0] sm:$0xff] %v2287
        %2305 = vst [vmem:[#allocation3 + $0x1e8] sm:$0xff] %v2288
        %vm2306 = vcmask 252928
        %2307 = vst.msk [vmem:[#allocation3 + $0x1f0] sm:$0xff] %vm2306, %v2280
        %vm2308 = vcmask 523512
        %2309 = vst.msk [vmem:[#allocation3 + $0x1f0] sm:$0xff] %vm2308, 0.0
        %2310 = vrot.lane.b32.xlu0 %v2005, 94
        %v2311 = vpop.permute.xlu0 %2310
        %2312 = vrot.lane.b32.xlu0 %v2006, 94
        %v2313 = vpop.permute.xlu0 %2312
        %2314 = vrot.lane.b32.xlu0 %v2007, 94
        %v2315 = vpop.permute.xlu0 %2314
        %2316 = vrot.lane.b32.xlu0 %v2008, 94
        %v2317 = vpop.permute.xlu0 %2316
        %2318 = vrot.lane.b32.xlu0 %v2009, 94
        %v2319 = vpop.permute.xlu0 %2318
        %2320 = vrot.lane.b32.xlu0 %v2010, 94
        %v2321 = vpop.permute.xlu0 %2320
        %2322 = vrot.lane.b32.xlu0 %v2011, 94
        %v2323 = vpop.permute.xlu0 %2322
        %2324 = vrot.lane.b32.xlu0 %v2012, 94
        %v2325 = vpop.permute.xlu0 %2324
        %2326 = vrot.lane.b32.xlu0 %v2013, 94
        %v2327 = vpop.permute.xlu0 %2326
        %v2328 = vsel %vm1423, %v2311, %v2313
        %v2329 = vsel %vm1423, %v2313, %v2315
        %v2330 = vsel %vm1423, %v2315, %v2317
        %v2331 = vsel %vm1423, %v2317, %v2319
        %v2332 = vsel %vm1423, %v2319, %v2321
        %v2333 = vsel %vm1423, %v2321, %v2323
        %v2334 = vsel %vm1423, %v2323, %v2325
        %v2335 = vsel %vm1423, %v2325, %v2327
        %2345 = vst [vmem:[#allocation3 + $0x1f8] sm:$0xff] %v2328
        %2346 = vst [vmem:[#allocation3 + $0x200] sm:$0xff] %v2329
        %2347 = vst [vmem:[#allocation3 + $0x208] sm:$0xff] %v2330
        %2348 = vst [vmem:[#allocation3 + $0x210] sm:$0xff] %v2331
        %2349 = vst [vmem:[#allocation3 + $0x218] sm:$0xff] %v2332
        %2350 = vst [vmem:[#allocation3 + $0x220] sm:$0xff] %v2333
        %2351 = vst [vmem:[#allocation3 + $0x228] sm:$0xff] %v2334
        %2352 = vst [vmem:[#allocation3 + $0x230] sm:$0xff] %v2335
        %vm2353 = vcmask 244736
        %2354 = vst.msk [vmem:[#allocation3 + $0x238] sm:$0xff] %vm2353, %v2327
        %vm2355 = vcmask 523504
        %2356 = vst.msk [vmem:[#allocation3 + $0x238] sm:$0xff] %vm2355, 0.0
        %2357 = vrot.lane.b32.xlu0 %v2005, 93
        %v2358 = vpop.permute.xlu0 %2357
        %2359 = vrot.lane.b32.xlu0 %v2006, 93
        %v2360 = vpop.permute.xlu0 %2359
        %2361 = vrot.lane.b32.xlu0 %v2007, 93
        %v2362 = vpop.permute.xlu0 %2361
        %2363 = vrot.lane.b32.xlu0 %v2008, 93
        %v2364 = vpop.permute.xlu0 %2363
        %2365 = vrot.lane.b32.xlu0 %v2009, 93
        %v2366 = vpop.permute.xlu0 %2365
        %2367 = vrot.lane.b32.xlu0 %v2010, 93
        %v2368 = vpop.permute.xlu0 %2367
        %2369 = vrot.lane.b32.xlu0 %v2011, 93
        %v2370 = vpop.permute.xlu0 %2369
        %2371 = vrot.lane.b32.xlu0 %v2012, 93
        %v2372 = vpop.permute.xlu0 %2371
        %2373 = vrot.lane.b32.xlu0 %v2013, 93
        %v2374 = vpop.permute.xlu0 %2373
        %v2375 = vsel %vm1471, %v2358, %v2360
        %v2376 = vsel %vm1471, %v2360, %v2362
        %v2377 = vsel %vm1471, %v2362, %v2364
        %v2378 = vsel %vm1471, %v2364, %v2366
        %v2379 = vsel %vm1471, %v2366, %v2368
        %v2380 = vsel %vm1471, %v2368, %v2370
        %v2381 = vsel %vm1471, %v2370, %v2372
        %v2382 = vsel %vm1471, %v2372, %v2374
        %2392 = vst [vmem:[#allocation3 + $0x240] sm:$0xff] %v2375
        %2393 = vst [vmem:[#allocation3 + $0x248] sm:$0xff] %v2376
        %2394 = vst [vmem:[#allocation3 + $0x250] sm:$0xff] %v2377
        %2395 = vst [vmem:[#allocation3 + $0x258] sm:$0xff] %v2378
        %2396 = vst [vmem:[#allocation3 + $0x260] sm:$0xff] %v2379
        %2397 = vst [vmem:[#allocation3 + $0x268] sm:$0xff] %v2380
        %2398 = vst [vmem:[#allocation3 + $0x270] sm:$0xff] %v2381
        %2399 = vst [vmem:[#allocation3 + $0x278] sm:$0xff] %v2382
        %vm2400 = vcmask 236544
        %2401 = vst.msk [vmem:[#allocation3 + $0x280] sm:$0xff] %vm2400, %v2374
        %vm2402 = vcmask 523496
        %2403 = vst.msk [vmem:[#allocation3 + $0x280] sm:$0xff] %vm2402, 0.0
        %v2404 = vld [vmem:[#allocation7] sm:$0xff]
        %v2405 = vld [vmem:[#allocation7 + $0x8] sm:$0xff]
        %v2406 = vld [vmem:[#allocation3] sm:$0xff]
        %v2407 = vld [vmem:[#allocation3 + $0x8] sm:$0xff]
        %v2408 = vld [vmem:[#allocation3 + $0x10] sm:$0xff]
        %v2409 = vld [vmem:[#allocation3 + $0x18] sm:$0xff]
        %v2410 = vld [vmem:[#allocation3 + $0x20] sm:$0xff]
        %v2411 = vld [vmem:[#allocation3 + $0x28] sm:$0xff]
        %v2412 = vld [vmem:[#allocation3 + $0x30] sm:$0xff]
        %v2413 = vld [vmem:[#allocation3 + $0x38] sm:$0xff]
        %v2414 = vld [vmem:[#allocation3 + $0x40] sm:$0xff]
        %v2415 = vld [vmem:[#allocation3 + $0x48] sm:$0xff]
        %v2416 = vld [vmem:[#allocation3 + $0x50] sm:$0xff]
        %v2417 = vld [vmem:[#allocation3 + $0x58] sm:$0xff]
        %v2418 = vld [vmem:[#allocation3 + $0x60] sm:$0xff]
        %v2419 = vld [vmem:[#allocation3 + $0x68] sm:$0xff]
        %v2420 = vld [vmem:[#allocation3 + $0x70] sm:$0xff]
        %v2421 = vld [vmem:[#allocation3 + $0x78] sm:$0xff]
        %v2422 = vld [vmem:[#allocation3 + $0x80] sm:$0xff]
        %v2423 = vld [vmem:[#allocation3 + $0x88] sm:$0xff]
        %v2424 = vld [vmem:[#allocation3 + $0x90] sm:$0xff]
        %v2425 = vld [vmem:[#allocation3 + $0x98] sm:$0xff]
        %v2426 = vld [vmem:[#allocation3 + $0xa0] sm:$0xff]
        %v2427 = vld [vmem:[#allocation3 + $0xa8] sm:$0xff]
        %v2428 = vld [vmem:[#allocation3 + $0xb0] sm:$0xff]
        %v2429 = vld [vmem:[#allocation3 + $0xb8] sm:$0xff]
        %v2430 = vld [vmem:[#allocation3 + $0xc0] sm:$0xff]
        %v2431 = vld [vmem:[#allocation3 + $0xc8] sm:$0xff]
        %v2432 = vld [vmem:[#allocation3 + $0xd0] sm:$0xff]
        %v2433 = vld [vmem:[#allocation3 + $0xd8] sm:$0xff]
        %v2434 = vld [vmem:[#allocation3 + $0xe0] sm:$0xff]
        %v2435 = vld [vmem:[#allocation3 + $0xe8] sm:$0xff]
        %v2436 = vld [vmem:[#allocation3 + $0xf0] sm:$0xff]
        %v2437 = vld [vmem:[#allocation3 + $0xf8] sm:$0xff]
        %v2438 = vld [vmem:[#allocation3 + $0x100] sm:$0xff]
        %v2439 = vld [vmem:[#allocation3 + $0x108] sm:$0xff]
        %v2440 = vld [vmem:[#allocation3 + $0x110] sm:$0xff]
        %v2441 = vld [vmem:[#allocation3 + $0x118] sm:$0xff]
        %v2442 = vld [vmem:[#allocation3 + $0x120] sm:$0xff]
        %v2443 = vld [vmem:[#allocation3 + $0x128] sm:$0xff]
        %v2444 = vld [vmem:[#allocation3 + $0x130] sm:$0xff]
        %v2445 = vld [vmem:[#allocation3 + $0x138] sm:$0xff]
        %v2446 = vld [vmem:[#allocation3 + $0x140] sm:$0xff]
        %v2447 = vld [vmem:[#allocation3 + $0x148] sm:$0xff]
        %v2448 = vld [vmem:[#allocation3 + $0x150] sm:$0xff]
        %v2449 = vld [vmem:[#allocation3 + $0x158] sm:$0xff]
        %v2450 = vld [vmem:[#allocation3 + $0x160] sm:$0xff]
        %v2451 = vld [vmem:[#allocation3 + $0x168] sm:$0xff]
        %v2452 = vld [vmem:[#allocation3 + $0x170] sm:$0xff]
        %v2453 = vld [vmem:[#allocation3 + $0x178] sm:$0xff]
        %v2454 = vld [vmem:[#allocation3 + $0x180] sm:$0xff]
        %v2455 = vld [vmem:[#allocation3 + $0x188] sm:$0xff]
        %v2456 = vld [vmem:[#allocation3 + $0x190] sm:$0xff]
        %v2457 = vld [vmem:[#allocation3 + $0x198] sm:$0xff]
        %v2458 = vld [vmem:[#allocation3 + $0x1a0] sm:$0xff]
        %v2459 = vld [vmem:[#allocation3 + $0x1a8] sm:$0xff]
        %v2460 = vld [vmem:[#allocation3 + $0x1b0] sm:$0xff]
        %v2461 = vld [vmem:[#allocation3 + $0x1b8] sm:$0xff]
        %v2462 = vld [vmem:[#allocation3 + $0x1c0] sm:$0xff]
        %v2463 = vld [vmem:[#allocation3 + $0x1c8] sm:$0xff]
        %v2464 = vld [vmem:[#allocation3 + $0x1d0] sm:$0xff]
        %v2465 = vld [vmem:[#allocation3 + $0x1d8] sm:$0xff]
        %v2466 = vld [vmem:[#allocation3 + $0x1e0] sm:$0xff]
        %v2467 = vld [vmem:[#allocation3 + $0x1e8] sm:$0xff]
        %v2468 = vld [vmem:[#allocation3 + $0x1f0] sm:$0xff]
        %v2469 = vld [vmem:[#allocation3 + $0x1f8] sm:$0xff]
        %v2470 = vld [vmem:[#allocation3 + $0x200] sm:$0xff]
        %v2471 = vld [vmem:[#allocation3 + $0x208] sm:$0xff]
        %v2472 = vld [vmem:[#allocation3 + $0x210] sm:$0xff]
        %v2473 = vld [vmem:[#allocation3 + $0x218] sm:$0xff]
        %v2474 = vld [vmem:[#allocation3 + $0x220] sm:$0xff]
        %v2475 = vld [vmem:[#allocation3 + $0x228] sm:$0xff]
        %v2476 = vld [vmem:[#allocation3 + $0x230] sm:$0xff]
        %v2477 = vld [vmem:[#allocation3 + $0x238] sm:$0xff]
        %v2478 = vld [vmem:[#allocation3 + $0x240] sm:$0xff]
        %v2479 = vld [vmem:[#allocation3 + $0x248] sm:$0xff]
        %v2480 = vld [vmem:[#allocation3 + $0x250] sm:$0xff]
        %v2481 = vld [vmem:[#allocation3 + $0x258] sm:$0xff]
        %v2482 = vld [vmem:[#allocation3 + $0x260] sm:$0xff]
        %v2483 = vld [vmem:[#allocation3 + $0x268] sm:$0xff]
        %v2484 = vld [vmem:[#allocation3 + $0x270] sm:$0xff]
        %v2485 = vld [vmem:[#allocation3 + $0x278] sm:$0xff]
        %v2486 = vld [vmem:[#allocation3 + $0x280] sm:$0xff]
        %vm2487 = vcmask 588800
        %v2489 = vsel %vm2487, %v2404, 0
        %v2492 = vsel %vm2487, %v2405, 0
        %2494 = vmatprep.subr.mxu0 0.0
        %2495 = vmatpush1.msra.mxu0 0.0
        %2496 = vmatprep.subr.mxu0 0.0
        %2497 = vmatpush1.msra.mxu0 0.0
        %2498 = vmatprep.subr.mxu0 0.0
        %2499 = vmatpush1.msra.mxu0 0.0
        %2500 = vmatprep.subr.mxu0 0.0
        %2501 = vmatpush1.msra.mxu0 0.0
        %2502 = vmatprep.subr.mxu0 0.0
        %2503 = vmatpush1.msra.mxu0 0.0
        %2504 = vmatprep.subr.mxu0 0.0
        %2505 = vmatpush1.msra.mxu0 0.0
        %2506 = vmatprep.subr.mxu0 0.0
        %2507 = vmatpush1.msra.mxu0 0.0
        %2508 = vmatprep.subr.mxu0 %v2479
        %2509 = vmatpush1.msra.mxu0 %v2478
        %2510 = vmatprep.subr.mxu0 %v2470
        %2511 = vmatpush1.msra.mxu0 %v2469
        %2512 = vmatprep.subr.mxu0 %v2461
        %2513 = vmatpush1.msra.mxu0 %v2460
        %2514 = vmatprep.subr.mxu0 %v2452
        %2515 = vmatpush1.msra.mxu0 %v2451
        %2516 = vmatprep.subr.mxu0 %v2443
        %2517 = vmatpush1.msra.mxu0 %v2442
        %2518 = vmatprep.subr.mxu0 %v2434
        %2519 = vmatpush1.msra.mxu0 %v2433
        %2520 = vmatprep.subr.mxu0 %v2425
        %2521 = vmatpush1.msra.mxu0 %v2424
        %2522 = vmatprep.subr.mxu0 %v2416
        %2523 = vmatpush1.msra.mxu0 %v2415
        %2524 = vmatprep.subr.mxu0 %v2407
        %2525 = vmatpush1.msra.mxu0 %v2406
        %2526 = vmatprep.subr.mxu0 0.0
        %2527 = vmatpush2.msra.mxu0 0.0
        %2528 = vmatprep.subr.mxu0 0.0
        %2529 = vmatpush2.msra.mxu0 0.0
        %2530 = vmatprep.subr.mxu0 0.0
        %2531 = vmatpush2.msra.mxu0 0.0
        %2532 = vmatprep.subr.mxu0 0.0
        %2533 = vmatpush2.msra.mxu0 0.0
        %2534 = vmatprep.subr.mxu0 0.0
        %2535 = vmatpush2.msra.mxu0 0.0
        %2536 = vmatprep.subr.mxu0 0.0
        %2537 = vmatpush2.msra.mxu0 0.0
        %2538 = vmatprep.subr.mxu0 0.0
        %2539 = vmatpush2.msra.mxu0 0.0
        %2540 = vmatprep.subr.mxu0 0.0
        %2541 = vmatpush2.msra.mxu0 0.0
        %2542 = vmatprep.subr.mxu0 0.0
        %2543 = vmatpush2.msra.mxu0 0.0
        %2544 = vmatprep.subr.mxu0 0.0
        %2545 = vmatpush2.msra.mxu0 0.0
        %2546 = vmatprep.subr.mxu0 0.0
        %2547 = vmatpush2.msra.mxu0 0.0
        %2548 = vmatprep.subr.mxu0 0.0
        %2549 = vmatpush2.msra.mxu0 0.0
        %2550 = vmatprep.subr.mxu0 0.0
        %2551 = vmatpush2.msra.mxu0 0.0
        %2552 = vmatprep.subr.mxu0 0.0
        %2553 = vmatpush2.msra.mxu0 0.0
        %2554 = vmatprep.subr.mxu0 0.0
        %2555 = vmatpush2.msra.mxu0 0.0
        %2556 = vmatprep.subr.mxu0 0.0
        %2557 = vmatpush2.msra.mxu0 0.0
        %2558 = vmatprep.mubr.f32.mxu0 0.0
        %2559 = vmatmul.mubr.f32.gmra.mxu0 %v2489
        %v2560 = vpop.f32.mrf.mxu0
        %v2561 = vadd.f32 0.0, %v2560
        %v2562 = vpop.f32.mrf.mxu0
        %v2563 = vadd.f32 0.0, %v2562
        %2564 = vmatprep.mubr.f32.mxu0 0.0
        %2565 = vmatmul.mubr.f32.gmra.mxu0 %v2492
        %v2566 = vpop.f32.mrf.mxu0
        %v2567 = vadd.f32 0.0, %v2566
        %v2568 = vpop.f32.mrf.mxu0
        %v2569 = vadd.f32 0.0, %v2568
        %2570 = vdwg.mxu0
        %2571 = vmatprep.subr.mxu0 0.0
        %2572 = vmatpush1.msra.mxu0 0.0
        %2573 = vmatprep.subr.mxu0 0.0
        %2574 = vmatpush1.msra.mxu0 0.0
        %2575 = vmatprep.subr.mxu0 0.0
        %2576 = vmatpush1.msra.mxu0 0.0
        %2577 = vmatprep.subr.mxu0 0.0
        %2578 = vmatpush1.msra.mxu0 0.0
        %2579 = vmatprep.subr.mxu0 0.0
        %2580 = vmatpush1.msra.mxu0 0.0
        %2581 = vmatprep.subr.mxu0 0.0
        %2582 = vmatpush1.msra.mxu0 0.0
        %2583 = vmatprep.subr.mxu0 0.0
        %2584 = vmatpush1.msra.mxu0 0.0
        %2585 = vmatprep.subr.mxu0 %v2481
        %2586 = vmatpush1.msra.mxu0 %v2480
        %2587 = vmatprep.subr.mxu0 %v2472
        %2588 = vmatpush1.msra.mxu0 %v2471
        %2589 = vmatprep.subr.mxu0 %v2463
        %2590 = vmatpush1.msra.mxu0 %v2462
        %2591 = vmatprep.subr.mxu0 %v2454
        %2592 = vmatpush1.msra.mxu0 %v2453
        %2593 = vmatprep.subr.mxu0 %v2445
        %2594 = vmatpush1.msra.mxu0 %v2444
        %2595 = vmatprep.subr.mxu0 %v2436
        %2596 = vmatpush1.msra.mxu0 %v2435
        %2597 = vmatprep.subr.mxu0 %v2427
        %2598 = vmatpush1.msra.mxu0 %v2426
        %2599 = vmatprep.subr.mxu0 %v2418
        %2600 = vmatpush1.msra.mxu0 %v2417
        %2601 = vmatprep.subr.mxu0 %v2409
        %2602 = vmatpush1.msra.mxu0 %v2408
        %2603 = vmatprep.subr.mxu0 0.0
        %2604 = vmatpush2.msra.mxu0 0.0
        %2605 = vmatprep.subr.mxu0 0.0
        %2606 = vmatpush2.msra.mxu0 0.0
        %2607 = vmatprep.subr.mxu0 0.0
        %2608 = vmatpush2.msra.mxu0 0.0
        %2609 = vmatprep.subr.mxu0 0.0
        %2610 = vmatpush2.msra.mxu0 0.0
        %2611 = vmatprep.subr.mxu0 0.0
        %2612 = vmatpush2.msra.mxu0 0.0
        %2613 = vmatprep.subr.mxu0 0.0
        %2614 = vmatpush2.msra.mxu0 0.0
        %2615 = vmatprep.subr.mxu0 0.0
        %2616 = vmatpush2.msra.mxu0 0.0
        %2617 = vmatprep.subr.mxu0 0.0
        %2618 = vmatpush2.msra.mxu0 0.0
        %2619 = vmatprep.subr.mxu0 0.0
        %2620 = vmatpush2.msra.mxu0 0.0
        %2621 = vmatprep.subr.mxu0 0.0
        %2622 = vmatpush2.msra.mxu0 0.0
        %2623 = vmatprep.subr.mxu0 0.0
        %2624 = vmatpush2.msra.mxu0 0.0
        %2625 = vmatprep.subr.mxu0 0.0
        %2626 = vmatpush2.msra.mxu0 0.0
        %2627 = vmatprep.subr.mxu0 0.0
        %2628 = vmatpush2.msra.mxu0 0.0
        %2629 = vmatprep.subr.mxu0 0.0
        %2630 = vmatpush2.msra.mxu0 0.0
        %2631 = vmatprep.subr.mxu0 0.0
        %2632 = vmatpush2.msra.mxu0 0.0
        %2633 = vmatprep.subr.mxu0 0.0
        %2634 = vmatpush2.msra.mxu0 0.0
        %2635 = vmatprep.mubr.f32.mxu0 0.0
        %2636 = vmatmul.mubr.f32.gmra.mxu0 %v2489
        %v2637 = vpop.f32.mrf.mxu0
        %v2638 = vadd.f32 0.0, %v2637
        %v2639 = vpop.f32.mrf.mxu0
        %v2640 = vadd.f32 0.0, %v2639
        %2641 = vmatprep.mubr.f32.mxu0 0.0
        %2642 = vmatmul.mubr.f32.gmra.mxu0 %v2492
        %v2643 = vpop.f32.mrf.mxu0
        %v2644 = vadd.f32 0.0, %v2643
        %v2645 = vpop.f32.mrf.mxu0
        %v2646 = vadd.f32 0.0, %v2645
        %2647 = vdwg.mxu0
        %2648 = vmatprep.subr.mxu0 0.0
        %2649 = vmatpush1.msra.mxu0 0.0
        %2650 = vmatprep.subr.mxu0 0.0
        %2651 = vmatpush1.msra.mxu0 0.0
        %2652 = vmatprep.subr.mxu0 0.0
        %2653 = vmatpush1.msra.mxu0 0.0
        %2654 = vmatprep.subr.mxu0 0.0
        %2655 = vmatpush1.msra.mxu0 0.0
        %2656 = vmatprep.subr.mxu0 0.0
        %2657 = vmatpush1.msra.mxu0 0.0
        %2658 = vmatprep.subr.mxu0 0.0
        %2659 = vmatpush1.msra.mxu0 0.0
        %2660 = vmatprep.subr.mxu0 0.0
        %2661 = vmatpush1.msra.mxu0 0.0
        %2662 = vmatprep.subr.mxu0 %v2483
        %2663 = vmatpush1.msra.mxu0 %v2482
        %2664 = vmatprep.subr.mxu0 %v2474
        %2665 = vmatpush1.msra.mxu0 %v2473
        %2666 = vmatprep.subr.mxu0 %v2465
        %2667 = vmatpush1.msra.mxu0 %v2464
        %2668 = vmatprep.subr.mxu0 %v2456
        %2669 = vmatpush1.msra.mxu0 %v2455
        %2670 = vmatprep.subr.mxu0 %v2447
        %2671 = vmatpush1.msra.mxu0 %v2446
        %2672 = vmatprep.subr.mxu0 %v2438
        %2673 = vmatpush1.msra.mxu0 %v2437
        %2674 = vmatprep.subr.mxu0 %v2429
        %2675 = vmatpush1.msra.mxu0 %v2428
        %2676 = vmatprep.subr.mxu0 %v2420
        %2677 = vmatpush1.msra.mxu0 %v2419
        %2678 = vmatprep.subr.mxu0 %v2411
        %2679 = vmatpush1.msra.mxu0 %v2410
        %2680 = vmatprep.subr.mxu0 0.0
        %2681 = vmatpush2.msra.mxu0 0.0
        %2682 = vmatprep.subr.mxu0 0.0
        %2683 = vmatpush2.msra.mxu0 0.0
        %2684 = vmatprep.subr.mxu0 0.0
        %2685 = vmatpush2.msra.mxu0 0.0
        %2686 = vmatprep.subr.mxu0 0.0
        %2687 = vmatpush2.msra.mxu0 0.0
        %2688 = vmatprep.subr.mxu0 0.0
        %2689 = vmatpush2.msra.mxu0 0.0
        %2690 = vmatprep.subr.mxu0 0.0
        %2691 = vmatpush2.msra.mxu0 0.0
        %2692 = vmatprep.subr.mxu0 0.0
        %2693 = vmatpush2.msra.mxu0 0.0
        %2694 = vmatprep.subr.mxu0 0.0
        %2695 = vmatpush2.msra.mxu0 0.0
        %2696 = vmatprep.subr.mxu0 0.0
        %2697 = vmatpush2.msra.mxu0 0.0
        %2698 = vmatprep.subr.mxu0 0.0
        %2699 = vmatpush2.msra.mxu0 0.0
        %2700 = vmatprep.subr.mxu0 0.0
        %2701 = vmatpush2.msra.mxu0 0.0
        %2702 = vmatprep.subr.mxu0 0.0
        %2703 = vmatpush2.msra.mxu0 0.0
        %2704 = vmatprep.subr.mxu0 0.0
        %2705 = vmatpush2.msra.mxu0 0.0
        %2706 = vmatprep.subr.mxu0 0.0
        %2707 = vmatpush2.msra.mxu0 0.0
        %2708 = vmatprep.subr.mxu0 0.0
        %2709 = vmatpush2.msra.mxu0 0.0
        %2710 = vmatprep.subr.mxu0 0.0
        %2711 = vmatpush2.msra.mxu0 0.0
        %2712 = vmatprep.mubr.f32.mxu0 0.0
        %2713 = vmatmul.mubr.f32.gmra.mxu0 %v2489
        %v2714 = vpop.f32.mrf.mxu0
        %v2715 = vadd.f32 0.0, %v2714
        %v2716 = vpop.f32.mrf.mxu0
        %v2717 = vadd.f32 0.0, %v2716
        %2718 = vmatprep.mubr.f32.mxu0 0.0
        %2719 = vmatmul.mubr.f32.gmra.mxu0 %v2492
        %v2720 = vpop.f32.mrf.mxu0
        %v2721 = vadd.f32 0.0, %v2720
        %v2722 = vpop.f32.mrf.mxu0
        %v2723 = vadd.f32 0.0, %v2722
        %2724 = vdwg.mxu0
        %2725 = vmatprep.subr.mxu0 0.0
        %2726 = vmatpush1.msra.mxu0 0.0
        %2727 = vmatprep.subr.mxu0 0.0
        %2728 = vmatpush1.msra.mxu0 0.0
        %2729 = vmatprep.subr.mxu0 0.0
        %2730 = vmatpush1.msra.mxu0 0.0
        %2731 = vmatprep.subr.mxu0 0.0
        %2732 = vmatpush1.msra.mxu0 0.0
        %2733 = vmatprep.subr.mxu0 0.0
        %2734 = vmatpush1.msra.mxu0 0.0
        %2735 = vmatprep.subr.mxu0 0.0
        %2736 = vmatpush1.msra.mxu0 0.0
        %2737 = vmatprep.subr.mxu0 0.0
        %2738 = vmatpush1.msra.mxu0 0.0
        %2739 = vmatprep.subr.mxu0 %v2485
        %2740 = vmatpush1.msra.mxu0 %v2484
        %2741 = vmatprep.subr.mxu0 %v2476
        %2742 = vmatpush1.msra.mxu0 %v2475
        %2743 = vmatprep.subr.mxu0 %v2467
        %2744 = vmatpush1.msra.mxu0 %v2466
        %2745 = vmatprep.subr.mxu0 %v2458
        %2746 = vmatpush1.msra.mxu0 %v2457
        %2747 = vmatprep.subr.mxu0 %v2449
        %2748 = vmatpush1.msra.mxu0 %v2448
        %2749 = vmatprep.subr.mxu0 %v2440
        %2750 = vmatpush1.msra.mxu0 %v2439
        %2751 = vmatprep.subr.mxu0 %v2431
        %2752 = vmatpush1.msra.mxu0 %v2430
        %2753 = vmatprep.subr.mxu0 %v2422
        %2754 = vmatpush1.msra.mxu0 %v2421
        %2755 = vmatprep.subr.mxu0 %v2413
        %2756 = vmatpush1.msra.mxu0 %v2412
        %2757 = vmatprep.subr.mxu0 0.0
        %2758 = vmatpush2.msra.mxu0 0.0
        %2759 = vmatprep.subr.mxu0 0.0
        %2760 = vmatpush2.msra.mxu0 0.0
        %2761 = vmatprep.subr.mxu0 0.0
        %2762 = vmatpush2.msra.mxu0 0.0
        %2763 = vmatprep.subr.mxu0 0.0
        %2764 = vmatpush2.msra.mxu0 0.0
        %2765 = vmatprep.subr.mxu0 0.0
        %2766 = vmatpush2.msra.mxu0 0.0
        %2767 = vmatprep.subr.mxu0 0.0
        %2768 = vmatpush2.msra.mxu0 0.0
        %2769 = vmatprep.subr.mxu0 0.0
        %2770 = vmatpush2.msra.mxu0 0.0
        %2771 = vmatprep.subr.mxu0 0.0
        %2772 = vmatpush2.msra.mxu0 0.0
        %2773 = vmatprep.subr.mxu0 0.0
        %2774 = vmatpush2.msra.mxu0 0.0
        %2775 = vmatprep.subr.mxu0 0.0
        %2776 = vmatpush2.msra.mxu0 0.0
        %2777 = vmatprep.subr.mxu0 0.0
        %2778 = vmatpush2.msra.mxu0 0.0
        %2779 = vmatprep.subr.mxu0 0.0
        %2780 = vmatpush2.msra.mxu0 0.0
        %2781 = vmatprep.subr.mxu0 0.0
        %2782 = vmatpush2.msra.mxu0 0.0
        %2783 = vmatprep.subr.mxu0 0.0
        %2784 = vmatpush2.msra.mxu0 0.0
        %2785 = vmatprep.subr.mxu0 0.0
        %2786 = vmatpush2.msra.mxu0 0.0
        %2787 = vmatprep.subr.mxu0 0.0
        %2788 = vmatpush2.msra.mxu0 0.0
        %2789 = vmatprep.mubr.f32.mxu0 0.0
        %2790 = vmatmul.mubr.f32.gmra.mxu0 %v2489
        %v2791 = vpop.f32.mrf.mxu0
        %v2792 = vadd.f32 0.0, %v2791
        %v2793 = vpop.f32.mrf.mxu0
        %v2794 = vadd.f32 0.0, %v2793
        %2795 = vmatprep.mubr.f32.mxu0 0.0
        %2796 = vmatmul.mubr.f32.gmra.mxu0 %v2492
        %v2797 = vpop.f32.mrf.mxu0
        %v2798 = vadd.f32 0.0, %v2797
        %v2799 = vpop.f32.mrf.mxu0
        %v2800 = vadd.f32 0.0, %v2799
        %2801 = vdwg.mxu0
        %2802 = vmatprep.subr.mxu0 0.0
        %2803 = vmatpush1.msra.mxu0 0.0
        %2804 = vmatprep.subr.mxu0 0.0
        %2805 = vmatpush1.msra.mxu0 0.0
        %2806 = vmatprep.subr.mxu0 0.0
        %2807 = vmatpush1.msra.mxu0 0.0
        %2808 = vmatprep.subr.mxu0 0.0
        %2809 = vmatpush1.msra.mxu0 0.0
        %2810 = vmatprep.subr.mxu0 0.0
        %2811 = vmatpush1.msra.mxu0 0.0
        %2812 = vmatprep.subr.mxu0 0.0
        %2813 = vmatpush1.msra.mxu0 0.0
        %2814 = vmatprep.subr.mxu0 0.0
        %2815 = vmatpush1.msra.mxu0 0.0
        %2816 = vmatprep.subr.mxu0 0.0
        %2817 = vmatpush1.msra.mxu0 %v2486
        %2818 = vmatprep.subr.mxu0 0.0
        %2819 = vmatpush1.msra.mxu0 %v2477
        %2820 = vmatprep.subr.mxu0 0.0
        %2821 = vmatpush1.msra.mxu0 %v2468
        %2822 = vmatprep.subr.mxu0 0.0
        %2823 = vmatpush1.msra.mxu0 %v2459
        %2824 = vmatprep.subr.mxu0 0.0
        %2825 = vmatpush1.msra.mxu0 %v2450
        %2826 = vmatprep.subr.mxu0 0.0
        %2827 = vmatpush1.msra.mxu0 %v2441
        %2828 = vmatprep.subr.mxu0 0.0
        %2829 = vmatpush1.msra.mxu0 %v2432
        %2830 = vmatprep.subr.mxu0 0.0
        %2831 = vmatpush1.msra.mxu0 %v2423
        %2832 = vmatprep.subr.mxu0 0.0
        %2833 = vmatpush1.msra.mxu0 %v2414
        %2834 = vmatprep.subr.mxu0 0.0
        %2835 = vmatpush2.msra.mxu0 0.0
        %2836 = vmatprep.subr.mxu0 0.0
        %2837 = vmatpush2.msra.mxu0 0.0
        %2838 = vmatprep.subr.mxu0 0.0
        %2839 = vmatpush2.msra.mxu0 0.0
        %2840 = vmatprep.subr.mxu0 0.0
        %2841 = vmatpush2.msra.mxu0 0.0
        %2842 = vmatprep.subr.mxu0 0.0
        %2843 = vmatpush2.msra.mxu0 0.0
        %2844 = vmatprep.subr.mxu0 0.0
        %2845 = vmatpush2.msra.mxu0 0.0
        %2846 = vmatprep.subr.mxu0 0.0
        %2847 = vmatpush2.msra.mxu0 0.0
        %2848 = vmatprep.subr.mxu0 0.0
        %2849 = vmatpush2.msra.mxu0 0.0
        %2850 = vmatprep.subr.mxu0 0.0
        %2851 = vmatpush2.msra.mxu0 0.0
        %2852 = vmatprep.subr.mxu0 0.0
        %2853 = vmatpush2.msra.mxu0 0.0
        %2854 = vmatprep.subr.mxu0 0.0
        %2855 = vmatpush2.msra.mxu0 0.0
        %2856 = vmatprep.subr.mxu0 0.0
        %2857 = vmatpush2.msra.mxu0 0.0
        %2858 = vmatprep.subr.mxu0 0.0
        %2859 = vmatpush2.msra.mxu0 0.0
        %2860 = vmatprep.subr.mxu0 0.0
        %2861 = vmatpush2.msra.mxu0 0.0
        %2862 = vmatprep.subr.mxu0 0.0
        %2863 = vmatpush2.msra.mxu0 0.0
        %2864 = vmatprep.subr.mxu0 0.0
        %2865 = vmatpush2.msra.mxu0 0.0
        %2866 = vmatprep.mubr.f32.mxu0 0.0
        %2867 = vmatmul.mubr.f32.gmra.mxu0 %v2489
        %v2868 = vpop.f32.mrf.mxu0
        %v2869 = vadd.f32 0.0, %v2868
        %v2870 = vpop.f32.mrf.mxu0
        %2871 = vmatprep.mubr.f32.mxu0 0.0
        %2872 = vmatmul.mubr.f32.gmra.mxu0 %v2492
        %v2873 = vpop.f32.mrf.mxu0
        %v2874 = vadd.f32 0.0, %v2873
        %v2875 = vpop.f32.mrf.mxu0
        %2876 = vdwg.mxu0
        %v2877 = vmax.f32 %v2561, 0.0
        %v2878 = vmax.f32 %v2563, 0.0
        %v2879 = vmax.f32 %v2638, 0.0
        %v2880 = vmax.f32 %v2640, 0.0
        %v2881 = vmax.f32 %v2715, 0.0
        %v2882 = vmax.f32 %v2717, 0.0
        %v2883 = vmax.f32 %v2792, 0.0
        %v2884 = vmax.f32 %v2794, 0.0
        %v2885 = vmax.f32 %v2869, 0.0
        %v2886 = vmax.f32 %v2567, 0.0
        %v2887 = vmax.f32 %v2569, 0.0
        %v2888 = vmax.f32 %v2644, 0.0
        %v2889 = vmax.f32 %v2646, 0.0
        %v2890 = vmax.f32 %v2721, 0.0
        %v2891 = vmax.f32 %v2723, 0.0
        %v2892 = vmax.f32 %v2798, 0.0
        %v2893 = vmax.f32 %v2800, 0.0
        %v2894 = vmax.f32 %v2874, 0.0
        %2895 = vst [vmem:[%s434] sm:$0xff] %v2877
        %2896 = vst [vmem:[%s434 + $0x8] sm:$0xff] %v2878
        %2897 = vst [vmem:[%s434 + $0x10] sm:$0xff] %v2879
        %2898 = vst [vmem:[%s434 + $0x18] sm:$0xff] %v2880
        %2899 = vst [vmem:[%s434 + $0x20] sm:$0xff] %v2881
        %2900 = vst [vmem:[%s434 + $0x28] sm:$0xff] %v2882
        %2901 = vst [vmem:[%s434 + $0x30] sm:$0xff] %v2883
        %2902 = vst [vmem:[%s434 + $0x38] sm:$0xff] %v2884
        %2903 = vst.msk [vmem:[%s434 + $0x40] sm:$0xff] %vm1956, %v2885
        %2904 = vst [vmem:[%s434 + $0x48] sm:$0xff] %v2886
        %2905 = vst [vmem:[%s434 + $0x50] sm:$0xff] %v2887
        %2906 = vst [vmem:[%s434 + $0x58] sm:$0xff] %v2888
        %2907 = vst [vmem:[%s434 + $0x60] sm:$0xff] %v2889
        %2908 = vst [vmem:[%s434 + $0x68] sm:$0xff] %v2890
        %2909 = vst [vmem:[%s434 + $0x70] sm:$0xff] %v2891
        %2910 = vst [vmem:[%s434 + $0x78] sm:$0xff] %v2892
        %2911 = vst [vmem:[%s434 + $0x80] sm:$0xff] %v2893
        %2912 = vst.msk [vmem:[%s434 + $0x88] sm:$0xff] %vm1956, %v2894
        %v2913 = vmul.f32 %v2877, %v1963
        %v2914 = vmul.f32 %v2878, %v1967
        %v2915 = vmul.f32 %v2879, %v1971
        %v2916 = vmul.f32 %v2880, %v1975
        %v2917 = vmul.f32 %v2881, %v1979
        %v2918 = vmul.f32 %v2882, %v1983
        %v2919 = vmul.f32 %v2883, %v1987
        %v2920 = vmul.f32 %v2884, %v1991
        %v2921 = vmul.f32 %v2885, %v1995
        %v2922 = vmul.f32 %v2886, %v1963
        %v2923 = vmul.f32 %v2887, %v1967
        %v2924 = vmul.f32 %v2888, %v1971
        %v2925 = vmul.f32 %v2889, %v1975
        %v2926 = vmul.f32 %v2890, %v1979
        %v2927 = vmul.f32 %v2891, %v1983
        %v2928 = vmul.f32 %v2892, %v1987
        %v2929 = vmul.f32 %v2893, %v1991
        %v2930 = vmul.f32 %v2894, %v1995
        %2931 = vst.msk [vmem:[#allocation4] sm:$0xff] %vm1117, 0.0
        %2932 = vst.msk [vmem:[#allocation4 + $0x48] sm:$0xff] %vm1117, 0.0
        %2951 = vrot.lane.b32.xlu0 %v2913, 35
        %v2952 = vpop.permute.xlu0 %2951
        %2953 = vrot.lane.b32.xlu0 %v2914, 35
        %v2954 = vpop.permute.xlu0 %2953
        %2955 = vrot.lane.b32.xlu0 %v2915, 35
        %v2956 = vpop.permute.xlu0 %2955
        %2957 = vrot.lane.b32.xlu0 %v2916, 35
        %v2958 = vpop.permute.xlu0 %2957
        %2959 = vrot.lane.b32.xlu0 %v2917, 35
        %v2960 = vpop.permute.xlu0 %2959
        %2961 = vrot.lane.b32.xlu0 %v2918, 35
        %v2962 = vpop.permute.xlu0 %2961
        %2963 = vrot.lane.b32.xlu0 %v2919, 35
        %v2964 = vpop.permute.xlu0 %2963
        %2965 = vrot.lane.b32.xlu0 %v2920, 35
        %v2966 = vpop.permute.xlu0 %2965
        %2967 = vrot.lane.b32.xlu0 %v2921, 35
        %v2968 = vpop.permute.xlu0 %2967
        %2969 = vrot.lane.b32.xlu0 %v2922, 35
        %v2970 = vpop.permute.xlu0 %2969
        %2971 = vrot.lane.b32.xlu0 %v2923, 35
        %v2972 = vpop.permute.xlu0 %2971
        %2973 = vrot.lane.b32.xlu0 %v2924, 35
        %v2974 = vpop.permute.xlu0 %2973
        %2975 = vrot.lane.b32.xlu0 %v2925, 35
        %v2976 = vpop.permute.xlu0 %2975
        %2977 = vrot.lane.b32.xlu0 %v2926, 35
        %v2978 = vpop.permute.xlu0 %2977
        %2979 = vrot.lane.b32.xlu0 %v2927, 35
        %v2980 = vpop.permute.xlu0 %2979
        %2981 = vrot.lane.b32.xlu0 %v2928, 35
        %v2982 = vpop.permute.xlu0 %2981
        %2983 = vrot.lane.b32.xlu0 %v2929, 35
        %v2984 = vpop.permute.xlu0 %2983
        %2985 = vrot.lane.b32.xlu0 %v2930, 35
        %v2986 = vpop.permute.xlu0 %2985
        %v2987 = vsel %vm1117, %v2952, %v2954
        %v2988 = vsel %vm1117, %v2954, %v2956
        %v2989 = vsel %vm1117, %v2956, %v2958
        %v2990 = vsel %vm1117, %v2958, %v2960
        %v2991 = vsel %vm1117, %v2960, %v2962
        %v2992 = vsel %vm1117, %v2962, %v2964
        %v2993 = vsel %vm1117, %v2964, %v2966
        %v2994 = vsel %vm1117, %v2966, %v2968
        %v2995 = vsel %vm1117, %v2970, %v2972
        %v2996 = vsel %vm1117, %v2972, %v2974
        %v2997 = vsel %vm1117, %v2974, %v2976
        %v2998 = vsel %vm1117, %v2976, %v2978
        %v2999 = vsel %vm1117, %v2978, %v2980
        %v3000 = vsel %vm1117, %v2980, %v2982
        %v3001 = vsel %vm1117, %v2982, %v2984
        %v3002 = vsel %vm1117, %v2984, %v2986
        %3021 = vst.msk [vmem:[#allocation4] sm:$0xff] %vm2059, %v2952
        %3022 = vst [vmem:[#allocation4 + $0x8] sm:$0xff] %v2987
        %3023 = vst [vmem:[#allocation4 + $0x10] sm:$0xff] %v2988
        %3024 = vst [vmem:[#allocation4 + $0x18] sm:$0xff] %v2989
        %3025 = vst [vmem:[#allocation4 + $0x20] sm:$0xff] %v2990
        %3026 = vst [vmem:[#allocation4 + $0x28] sm:$0xff] %v2991
        %3027 = vst [vmem:[#allocation4 + $0x30] sm:$0xff] %v2992
        %3028 = vst [vmem:[#allocation4 + $0x38] sm:$0xff] %v2993
        %3029 = vst.msk [vmem:[#allocation4 + $0x40] sm:$0xff] %vm1956, %v2994
        %3030 = vst.msk [vmem:[#allocation4 + $0x48] sm:$0xff] %vm2059, %v2970
        %3031 = vst [vmem:[#allocation4 + $0x50] sm:$0xff] %v2995
        %3032 = vst [vmem:[#allocation4 + $0x58] sm:$0xff] %v2996
        %3033 = vst [vmem:[#allocation4 + $0x60] sm:$0xff] %v2997
        %3034 = vst [vmem:[#allocation4 + $0x68] sm:$0xff] %v2998
        %3035 = vst [vmem:[#allocation4 + $0x70] sm:$0xff] %v2999
        %3036 = vst [vmem:[#allocation4 + $0x78] sm:$0xff] %v3000
        %3037 = vst [vmem:[#allocation4 + $0x80] sm:$0xff] %v3001
        %3038 = vst.msk [vmem:[#allocation4 + $0x88] sm:$0xff] %vm1956, %v3002
        %3039 = vst.msk [vmem:[#allocation4 + $0x90] sm:$0xff] %vm1175, 0.0
        %3040 = vst.msk [vmem:[#allocation4 + $0xd8] sm:$0xff] %vm1175, 0.0
        %3041 = vrot.lane.b32.xlu0 %v2913, 34
        %v3042 = vpop.permute.xlu0 %3041
        %3043 = vrot.lane.b32.xlu0 %v2914, 34
        %v3044 = vpop.permute.xlu0 %3043
        %3045 = vrot.lane.b32.xlu0 %v2915, 34
        %v3046 = vpop.permute.xlu0 %3045
        %3047 = vrot.lane.b32.xlu0 %v2916, 34
        %v3048 = vpop.permute.xlu0 %3047
        %3049 = vrot.lane.b32.xlu0 %v2917, 34
        %v3050 = vpop.permute.xlu0 %3049
        %3051 = vrot.lane.b32.xlu0 %v2918, 34
        %v3052 = vpop.permute.xlu0 %3051
        %3053 = vrot.lane.b32.xlu0 %v2919, 34
        %v3054 = vpop.permute.xlu0 %3053
        %3055 = vrot.lane.b32.xlu0 %v2920, 34
        %v3056 = vpop.permute.xlu0 %3055
        %3057 = vrot.lane.b32.xlu0 %v2921, 34
        %v3058 = vpop.permute.xlu0 %3057
        %3059 = vrot.lane.b32.xlu0 %v2922, 34
        %v3060 = vpop.permute.xlu0 %3059
        %3061 = vrot.lane.b32.xlu0 %v2923, 34
        %v3062 = vpop.permute.xlu0 %3061
        %3063 = vrot.lane.b32.xlu0 %v2924, 34
        %v3064 = vpop.permute.xlu0 %3063
        %3065 = vrot.lane.b32.xlu0 %v2925, 34
        %v3066 = vpop.permute.xlu0 %3065
        %3067 = vrot.lane.b32.xlu0 %v2926, 34
        %v3068 = vpop.permute.xlu0 %3067
        %3069 = vrot.lane.b32.xlu0 %v2927, 34
        %v3070 = vpop.permute.xlu0 %3069
        %3071 = vrot.lane.b32.xlu0 %v2928, 34
        %v3072 = vpop.permute.xlu0 %3071
        %3073 = vrot.lane.b32.xlu0 %v2929, 34
        %v3074 = vpop.permute.xlu0 %3073
        %3075 = vrot.lane.b32.xlu0 %v2930, 34
        %v3076 = vpop.permute.xlu0 %3075
        %v3077 = vsel %vm1175, %v3042, %v3044
        %v3078 = vsel %vm1175, %v3044, %v3046
        %v3079 = vsel %vm1175, %v3046, %v3048
        %v3080 = vsel %vm1175, %v3048, %v3050
        %v3081 = vsel %vm1175, %v3050, %v3052
        %v3082 = vsel %vm1175, %v3052, %v3054
        %v3083 = vsel %vm1175, %v3054, %v3056
        %v3084 = vsel %vm1175, %v3056, %v3058
        %v3085 = vsel %vm1175, %v3060, %v3062
        %v3086 = vsel %vm1175, %v3062, %v3064
        %v3087 = vsel %vm1175, %v3064, %v3066
        %v3088 = vsel %vm1175, %v3066, %v3068
        %v3089 = vsel %vm1175, %v3068, %v3070
        %v3090 = vsel %vm1175, %v3070, %v3072
        %v3091 = vsel %vm1175, %v3072, %v3074
        %v3092 = vsel %vm1175, %v3074, %v3076
        %3111 = vst.msk [vmem:[#allocation4 + $0x90] sm:$0xff] %vm2105, %v3042
        %3112 = vst [vmem:[#allocation4 + $0x98] sm:$0xff] %v3077
        %3113 = vst [vmem:[#allocation4 + $0xa0] sm:$0xff] %v3078
        %3114 = vst [vmem:[#allocation4 + $0xa8] sm:$0xff] %v3079
        %3115 = vst [vmem:[#allocation4 + $0xb0] sm:$0xff] %v3080
        %3116 = vst [vmem:[#allocation4 + $0xb8] sm:$0xff] %v3081
        %3117 = vst [vmem:[#allocation4 + $0xc0] sm:$0xff] %v3082
        %3118 = vst [vmem:[#allocation4 + $0xc8] sm:$0xff] %v3083
        %3119 = vst.msk [vmem:[#allocation4 + $0xd0] sm:$0xff] %vm1956, %v3084
        %3120 = vst.msk [vmem:[#allocation4 + $0xd8] sm:$0xff] %vm2105, %v3060
        %3121 = vst [vmem:[#allocation4 + $0xe0] sm:$0xff] %v3085
        %3122 = vst [vmem:[#allocation4 + $0xe8] sm:$0xff] %v3086
        %3123 = vst [vmem:[#allocation4 + $0xf0] sm:$0xff] %v3087
        %3124 = vst [vmem:[#allocation4 + $0xf8] sm:$0xff] %v3088
        %3125 = vst [vmem:[#allocation4 + $0x100] sm:$0xff] %v3089
        %3126 = vst [vmem:[#allocation4 + $0x108] sm:$0xff] %v3090
        %3127 = vst [vmem:[#allocation4 + $0x110] sm:$0xff] %v3091
        %3128 = vst.msk [vmem:[#allocation4 + $0x118] sm:$0xff] %vm1956, %v3092
        %3129 = vst.msk [vmem:[#allocation4 + $0x120] sm:$0xff] %vm1224, 0.0
        %3130 = vst.msk [vmem:[#allocation4 + $0x168] sm:$0xff] %vm1224, 0.0
        %3131 = vrot.lane.b32.xlu0 %v2913, 33
        %v3132 = vpop.permute.xlu0 %3131
        %3133 = vrot.lane.b32.xlu0 %v2914, 33
        %v3134 = vpop.permute.xlu0 %3133
        %3135 = vrot.lane.b32.xlu0 %v2915, 33
        %v3136 = vpop.permute.xlu0 %3135
        %3137 = vrot.lane.b32.xlu0 %v2916, 33
        %v3138 = vpop.permute.xlu0 %3137
        %3139 = vrot.lane.b32.xlu0 %v2917, 33
        %v3140 = vpop.permute.xlu0 %3139
        %3141 = vrot.lane.b32.xlu0 %v2918, 33
        %v3142 = vpop.permute.xlu0 %3141
        %3143 = vrot.lane.b32.xlu0 %v2919, 33
        %v3144 = vpop.permute.xlu0 %3143
        %3145 = vrot.lane.b32.xlu0 %v2920, 33
        %v3146 = vpop.permute.xlu0 %3145
        %3147 = vrot.lane.b32.xlu0 %v2921, 33
        %v3148 = vpop.permute.xlu0 %3147
        %3149 = vrot.lane.b32.xlu0 %v2922, 33
        %v3150 = vpop.permute.xlu0 %3149
        %3151 = vrot.lane.b32.xlu0 %v2923, 33
        %v3152 = vpop.permute.xlu0 %3151
        %3153 = vrot.lane.b32.xlu0 %v2924, 33
        %v3154 = vpop.permute.xlu0 %3153
        %3155 = vrot.lane.b32.xlu0 %v2925, 33
        %v3156 = vpop.permute.xlu0 %3155
        %3157 = vrot.lane.b32.xlu0 %v2926, 33
        %v3158 = vpop.permute.xlu0 %3157
        %3159 = vrot.lane.b32.xlu0 %v2927, 33
        %v3160 = vpop.permute.xlu0 %3159
        %3161 = vrot.lane.b32.xlu0 %v2928, 33
        %v3162 = vpop.permute.xlu0 %3161
        %3163 = vrot.lane.b32.xlu0 %v2929, 33
        %v3164 = vpop.permute.xlu0 %3163
        %3165 = vrot.lane.b32.xlu0 %v2930, 33
        %v3166 = vpop.permute.xlu0 %3165
        %v3167 = vsel %vm1224, %v3132, %v3134
        %v3168 = vsel %vm1224, %v3134, %v3136
        %v3169 = vsel %vm1224, %v3136, %v3138
        %v3170 = vsel %vm1224, %v3138, %v3140
        %v3171 = vsel %vm1224, %v3140, %v3142
        %v3172 = vsel %vm1224, %v3142, %v3144
        %v3173 = vsel %vm1224, %v3144, %v3146
        %v3174 = vsel %vm1224, %v3146, %v3148
        %v3175 = vsel %vm1224, %v3150, %v3152
        %v3176 = vsel %vm1224, %v3152, %v3154
        %v3177 = vsel %vm1224, %v3154, %v3156
        %v3178 = vsel %vm1224, %v3156, %v3158
        %v3179 = vsel %vm1224, %v3158, %v3160
        %v3180 = vsel %vm1224, %v3160, %v3162
        %v3181 = vsel %vm1224, %v3162, %v3164
        %v3182 = vsel %vm1224, %v3164, %v3166
        %3201 = vst.msk [vmem:[#allocation4 + $0x120] sm:$0xff] %vm2151, %v3132
        %3202 = vst [vmem:[#allocation4 + $0x128] sm:$0xff] %v3167
        %3203 = vst [vmem:[#allocation4 + $0x130] sm:$0xff] %v3168
        %3204 = vst [vmem:[#allocation4 + $0x138] sm:$0xff] %v3169
        %3205 = vst [vmem:[#allocation4 + $0x140] sm:$0xff] %v3170
        %3206 = vst [vmem:[#allocation4 + $0x148] sm:$0xff] %v3171
        %3207 = vst [vmem:[#allocation4 + $0x150] sm:$0xff] %v3172
        %3208 = vst [vmem:[#allocation4 + $0x158] sm:$0xff] %v3173
        %3209 = vst.msk [vmem:[#allocation4 + $0x160] sm:$0xff] %vm1956, %v3174
        %3210 = vst.msk [vmem:[#allocation4 + $0x168] sm:$0xff] %vm2151, %v3150
        %3211 = vst [vmem:[#allocation4 + $0x170] sm:$0xff] %v3175
        %3212 = vst [vmem:[#allocation4 + $0x178] sm:$0xff] %v3176
        %3213 = vst [vmem:[#allocation4 + $0x180] sm:$0xff] %v3177
        %3214 = vst [vmem:[#allocation4 + $0x188] sm:$0xff] %v3178
        %3215 = vst [vmem:[#allocation4 + $0x190] sm:$0xff] %v3179
        %3216 = vst [vmem:[#allocation4 + $0x198] sm:$0xff] %v3180
        %3217 = vst [vmem:[#allocation4 + $0x1a0] sm:$0xff] %v3181
        %3218 = vst.msk [vmem:[#allocation4 + $0x1a8] sm:$0xff] %vm1956, %v3182
        %3219 = vst.msk [vmem:[#allocation4 + $0x1b0] sm:$0xff] %vm1272, 0.0
        %3220 = vst.msk [vmem:[#allocation4 + $0x1f8] sm:$0xff] %vm1272, 0.0
        %3221 = vrot.lane.b32.xlu0 %v2913, 1
        %v3222 = vpop.permute.xlu0 %3221
        %3223 = vrot.lane.b32.xlu0 %v2914, 1
        %v3224 = vpop.permute.xlu0 %3223
        %3225 = vrot.lane.b32.xlu0 %v2915, 1
        %v3226 = vpop.permute.xlu0 %3225
        %3227 = vrot.lane.b32.xlu0 %v2916, 1
        %v3228 = vpop.permute.xlu0 %3227
        %3229 = vrot.lane.b32.xlu0 %v2917, 1
        %v3230 = vpop.permute.xlu0 %3229
        %3231 = vrot.lane.b32.xlu0 %v2918, 1
        %v3232 = vpop.permute.xlu0 %3231
        %3233 = vrot.lane.b32.xlu0 %v2919, 1
        %v3234 = vpop.permute.xlu0 %3233
        %3235 = vrot.lane.b32.xlu0 %v2920, 1
        %v3236 = vpop.permute.xlu0 %3235
        %3237 = vrot.lane.b32.xlu0 %v2921, 1
        %v3238 = vpop.permute.xlu0 %3237
        %3239 = vrot.lane.b32.xlu0 %v2922, 1
        %v3240 = vpop.permute.xlu0 %3239
        %3241 = vrot.lane.b32.xlu0 %v2923, 1
        %v3242 = vpop.permute.xlu0 %3241
        %3243 = vrot.lane.b32.xlu0 %v2924, 1
        %v3244 = vpop.permute.xlu0 %3243
        %3245 = vrot.lane.b32.xlu0 %v2925, 1
        %v3246 = vpop.permute.xlu0 %3245
        %3247 = vrot.lane.b32.xlu0 %v2926, 1
        %v3248 = vpop.permute.xlu0 %3247
        %3249 = vrot.lane.b32.xlu0 %v2927, 1
        %v3250 = vpop.permute.xlu0 %3249
        %3251 = vrot.lane.b32.xlu0 %v2928, 1
        %v3252 = vpop.permute.xlu0 %3251
        %3253 = vrot.lane.b32.xlu0 %v2929, 1
        %v3254 = vpop.permute.xlu0 %3253
        %3255 = vrot.lane.b32.xlu0 %v2930, 1
        %v3256 = vpop.permute.xlu0 %3255
        %v3257 = vsel %vm1272, %v3222, %v3224
        %v3258 = vsel %vm1272, %v3224, %v3226
        %v3259 = vsel %vm1272, %v3226, %v3228
        %v3260 = vsel %vm1272, %v3228, %v3230
        %v3261 = vsel %vm1272, %v3230, %v3232
        %v3262 = vsel %vm1272, %v3232, %v3234
        %v3263 = vsel %vm1272, %v3234, %v3236
        %v3264 = vsel %vm1272, %v3236, %v3238
        %v3265 = vsel %vm1272, %v3240, %v3242
        %v3266 = vsel %vm1272, %v3242, %v3244
        %v3267 = vsel %vm1272, %v3244, %v3246
        %v3268 = vsel %vm1272, %v3246, %v3248
        %v3269 = vsel %vm1272, %v3248, %v3250
        %v3270 = vsel %vm1272, %v3250, %v3252
        %v3271 = vsel %vm1272, %v3252, %v3254
        %v3272 = vsel %vm1272, %v3254, %v3256
        %3291 = vst.msk [vmem:[#allocation4 + $0x1b0] sm:$0xff] %vm2197, %v3222
        %3292 = vst [vmem:[#allocation4 + $0x1b8] sm:$0xff] %v3257
        %3293 = vst [vmem:[#allocation4 + $0x1c0] sm:$0xff] %v3258
        %3294 = vst [vmem:[#allocation4 + $0x1c8] sm:$0xff] %v3259
        %3295 = vst [vmem:[#allocation4 + $0x1d0] sm:$0xff] %v3260
        %3296 = vst [vmem:[#allocation4 + $0x1d8] sm:$0xff] %v3261
        %3297 = vst [vmem:[#allocation4 + $0x1e0] sm:$0xff] %v3262
        %3298 = vst [vmem:[#allocation4 + $0x1e8] sm:$0xff] %v3263
        %3299 = vst.msk [vmem:[#allocation4 + $0x1f0] sm:$0xff] %vm1956, %v3264
        %3300 = vst.msk [vmem:[#allocation4 + $0x1f8] sm:$0xff] %vm2197, %v3240
        %3301 = vst [vmem:[#allocation4 + $0x200] sm:$0xff] %v3265
        %3302 = vst [vmem:[#allocation4 + $0x208] sm:$0xff] %v3266
        %3303 = vst [vmem:[#allocation4 + $0x210] sm:$0xff] %v3267
        %3304 = vst [vmem:[#allocation4 + $0x218] sm:$0xff] %v3268
        %3305 = vst [vmem:[#allocation4 + $0x220] sm:$0xff] %v3269
        %3306 = vst [vmem:[#allocation4 + $0x228] sm:$0xff] %v3270
        %3307 = vst [vmem:[#allocation4 + $0x230] sm:$0xff] %v3271
        %3308 = vst.msk [vmem:[#allocation4 + $0x238] sm:$0xff] %vm1956, %v3272
        %3309 = vst [vmem:[#allocation4 + $0x240] sm:$0xff] %v2913
        %3310 = vst [vmem:[#allocation4 + $0x248] sm:$0xff] %v2914
        %3311 = vst [vmem:[#allocation4 + $0x250] sm:$0xff] %v2915
        %3312 = vst [vmem:[#allocation4 + $0x258] sm:$0xff] %v2916
        %3313 = vst [vmem:[#allocation4 + $0x260] sm:$0xff] %v2917
        %3314 = vst [vmem:[#allocation4 + $0x268] sm:$0xff] %v2918
        %3315 = vst [vmem:[#allocation4 + $0x270] sm:$0xff] %v2919
        %3316 = vst [vmem:[#allocation4 + $0x278] sm:$0xff] %v2920
        %3317 = vst.msk [vmem:[#allocation4 + $0x280] sm:$0xff] %vm1956, %v2921
        %3318 = vst [vmem:[#allocation4 + $0x288] sm:$0xff] %v2922
        %3319 = vst [vmem:[#allocation4 + $0x290] sm:$0xff] %v2923
        %3320 = vst [vmem:[#allocation4 + $0x298] sm:$0xff] %v2924
        %3321 = vst [vmem:[#allocation4 + $0x2a0] sm:$0xff] %v2925
        %3322 = vst [vmem:[#allocation4 + $0x2a8] sm:$0xff] %v2926
        %3323 = vst [vmem:[#allocation4 + $0x2b0] sm:$0xff] %v2927
        %3324 = vst [vmem:[#allocation4 + $0x2b8] sm:$0xff] %v2928
        %3325 = vst [vmem:[#allocation4 + $0x2c0] sm:$0xff] %v2929
        %3326 = vst.msk [vmem:[#allocation4 + $0x2c8] sm:$0xff] %vm1956, %v2930
        %3327 = vrot.lane.b32.xlu0 %v2913, 127
        %v3328 = vpop.permute.xlu0 %3327
        %3329 = vrot.lane.b32.xlu0 %v2914, 127
        %v3330 = vpop.permute.xlu0 %3329
        %3331 = vrot.lane.b32.xlu0 %v2915, 127
        %v3332 = vpop.permute.xlu0 %3331
        %3333 = vrot.lane.b32.xlu0 %v2916, 127
        %v3334 = vpop.permute.xlu0 %3333
        %3335 = vrot.lane.b32.xlu0 %v2917, 127
        %v3336 = vpop.permute.xlu0 %3335
        %3337 = vrot.lane.b32.xlu0 %v2918, 127
        %v3338 = vpop.permute.xlu0 %3337
        %3339 = vrot.lane.b32.xlu0 %v2919, 127
        %v3340 = vpop.permute.xlu0 %3339
        %3341 = vrot.lane.b32.xlu0 %v2920, 127
        %v3342 = vpop.permute.xlu0 %3341
        %3343 = vrot.lane.b32.xlu0 %v2921, 127
        %v3344 = vpop.permute.xlu0 %3343
        %3345 = vrot.lane.b32.xlu0 %v2922, 127
        %v3346 = vpop.permute.xlu0 %3345
        %3347 = vrot.lane.b32.xlu0 %v2923, 127
        %v3348 = vpop.permute.xlu0 %3347
        %3349 = vrot.lane.b32.xlu0 %v2924, 127
        %v3350 = vpop.permute.xlu0 %3349
        %3351 = vrot.lane.b32.xlu0 %v2925, 127
        %v3352 = vpop.permute.xlu0 %3351
        %3353 = vrot.lane.b32.xlu0 %v2926, 127
        %v3354 = vpop.permute.xlu0 %3353
        %3355 = vrot.lane.b32.xlu0 %v2927, 127
        %v3356 = vpop.permute.xlu0 %3355
        %3357 = vrot.lane.b32.xlu0 %v2928, 127
        %v3358 = vpop.permute.xlu0 %3357
        %3359 = vrot.lane.b32.xlu0 %v2929, 127
        %v3360 = vpop.permute.xlu0 %3359
        %3361 = vrot.lane.b32.xlu0 %v2930, 127
        %v3362 = vpop.permute.xlu0 %3361
        %v3363 = vsel %vm1327, %v3328, %v3330
        %v3364 = vsel %vm1327, %v3330, %v3332
        %v3365 = vsel %vm1327, %v3332, %v3334
        %v3366 = vsel %vm1327, %v3334, %v3336
        %v3367 = vsel %vm1327, %v3336, %v3338
        %v3368 = vsel %vm1327, %v3338, %v3340
        %v3369 = vsel %vm1327, %v3340, %v3342
        %v3370 = vsel %vm1327, %v3342, %v3344
        %v3371 = vsel %vm1327, %v3346, %v3348
        %v3372 = vsel %vm1327, %v3348, %v3350
        %v3373 = vsel %vm1327, %v3350, %v3352
        %v3374 = vsel %vm1327, %v3352, %v3354
        %v3375 = vsel %vm1327, %v3354, %v3356
        %v3376 = vsel %vm1327, %v3356, %v3358
        %v3377 = vsel %vm1327, %v3358, %v3360
        %v3378 = vsel %vm1327, %v3360, %v3362
        %3397 = vst [vmem:[#allocation4 + $0x2d0] sm:$0xff] %v3363
        %3398 = vst [vmem:[#allocation4 + $0x2d8] sm:$0xff] %v3364
        %3399 = vst [vmem:[#allocation4 + $0x2e0] sm:$0xff] %v3365
        %3400 = vst [vmem:[#allocation4 + $0x2e8] sm:$0xff] %v3366
        %3401 = vst [vmem:[#allocation4 + $0x2f0] sm:$0xff] %v3367
        %3402 = vst [vmem:[#allocation4 + $0x2f8] sm:$0xff] %v3368
        %3403 = vst [vmem:[#allocation4 + $0x300] sm:$0xff] %v3369
        %3404 = vst [vmem:[#allocation4 + $0x308] sm:$0xff] %v3370
        %3405 = vst.msk [vmem:[#allocation4 + $0x310] sm:$0xff] %vm2259, %v3344
        %3406 = vst [vmem:[#allocation4 + $0x318] sm:$0xff] %v3371
        %3407 = vst [vmem:[#allocation4 + $0x320] sm:$0xff] %v3372
        %3408 = vst [vmem:[#allocation4 + $0x328] sm:$0xff] %v3373
        %3409 = vst [vmem:[#allocation4 + $0x330] sm:$0xff] %v3374
        %3410 = vst [vmem:[#allocation4 + $0x338] sm:$0xff] %v3375
        %3411 = vst [vmem:[#allocation4 + $0x340] sm:$0xff] %v3376
        %3412 = vst [vmem:[#allocation4 + $0x348] sm:$0xff] %v3377
        %3413 = vst [vmem:[#allocation4 + $0x350] sm:$0xff] %v3378
        %3414 = vst.msk [vmem:[#allocation4 + $0x358] sm:$0xff] %vm2259, %v3362
        %3415 = vst.msk [vmem:[#allocation4 + $0x310] sm:$0xff] %vm2261, 0.0
        %3416 = vst.msk [vmem:[#allocation4 + $0x358] sm:$0xff] %vm2261, 0.0
        %3417 = vrot.lane.b32.xlu0 %v2913, 95
        %v3418 = vpop.permute.xlu0 %3417
        %3419 = vrot.lane.b32.xlu0 %v2914, 95
        %v3420 = vpop.permute.xlu0 %3419
        %3421 = vrot.lane.b32.xlu0 %v2915, 95
        %v3422 = vpop.permute.xlu0 %3421
        %3423 = vrot.lane.b32.xlu0 %v2916, 95
        %v3424 = vpop.permute.xlu0 %3423
        %3425 = vrot.lane.b32.xlu0 %v2917, 95
        %v3426 = vpop.permute.xlu0 %3425
        %3427 = vrot.lane.b32.xlu0 %v2918, 95
        %v3428 = vpop.permute.xlu0 %3427
        %3429 = vrot.lane.b32.xlu0 %v2919, 95
        %v3430 = vpop.permute.xlu0 %3429
        %3431 = vrot.lane.b32.xlu0 %v2920, 95
        %v3432 = vpop.permute.xlu0 %3431
        %3433 = vrot.lane.b32.xlu0 %v2921, 95
        %v3434 = vpop.permute.xlu0 %3433
        %3435 = vrot.lane.b32.xlu0 %v2922, 95
        %v3436 = vpop.permute.xlu0 %3435
        %3437 = vrot.lane.b32.xlu0 %v2923, 95
        %v3438 = vpop.permute.xlu0 %3437
        %3439 = vrot.lane.b32.xlu0 %v2924, 95
        %v3440 = vpop.permute.xlu0 %3439
        %3441 = vrot.lane.b32.xlu0 %v2925, 95
        %v3442 = vpop.permute.xlu0 %3441
        %3443 = vrot.lane.b32.xlu0 %v2926, 95
        %v3444 = vpop.permute.xlu0 %3443
        %3445 = vrot.lane.b32.xlu0 %v2927, 95
        %v3446 = vpop.permute.xlu0 %3445
        %3447 = vrot.lane.b32.xlu0 %v2928, 95
        %v3448 = vpop.permute.xlu0 %3447
        %3449 = vrot.lane.b32.xlu0 %v2929, 95
        %v3450 = vpop.permute.xlu0 %3449
        %3451 = vrot.lane.b32.xlu0 %v2930, 95
        %v3452 = vpop.permute.xlu0 %3451
        %v3453 = vsel %vm1375, %v3418, %v3420
        %v3454 = vsel %vm1375, %v3420, %v3422
        %v3455 = vsel %vm1375, %v3422, %v3424
        %v3456 = vsel %vm1375, %v3424, %v3426
        %v3457 = vsel %vm1375, %v3426, %v3428
        %v3458 = vsel %vm1375, %v3428, %v3430
        %v3459 = vsel %vm1375, %v3430, %v3432
        %v3460 = vsel %vm1375, %v3432, %v3434
        %v3461 = vsel %vm1375, %v3436, %v3438
        %v3462 = vsel %vm1375, %v3438, %v3440
        %v3463 = vsel %vm1375, %v3440, %v3442
        %v3464 = vsel %vm1375, %v3442, %v3444
        %v3465 = vsel %vm1375, %v3444, %v3446
        %v3466 = vsel %vm1375, %v3446, %v3448
        %v3467 = vsel %vm1375, %v3448, %v3450
        %v3468 = vsel %vm1375, %v3450, %v3452
        %3487 = vst [vmem:[#allocation4 + $0x360] sm:$0xff] %v3453
        %3488 = vst [vmem:[#allocation4 + $0x368] sm:$0xff] %v3454
        %3489 = vst [vmem:[#allocation4 + $0x370] sm:$0xff] %v3455
        %3490 = vst [vmem:[#allocation4 + $0x378] sm:$0xff] %v3456
        %3491 = vst [vmem:[#allocation4 + $0x380] sm:$0xff] %v3457
        %3492 = vst [vmem:[#allocation4 + $0x388] sm:$0xff] %v3458
        %3493 = vst [vmem:[#allocation4 + $0x390] sm:$0xff] %v3459
        %3494 = vst [vmem:[#allocation4 + $0x398] sm:$0xff] %v3460
        %3495 = vst.msk [vmem:[#allocation4 + $0x3a0] sm:$0xff] %vm2306, %v3434
        %3496 = vst [vmem:[#allocation4 + $0x3a8] sm:$0xff] %v3461
        %3497 = vst [vmem:[#allocation4 + $0x3b0] sm:$0xff] %v3462
        %3498 = vst [vmem:[#allocation4 + $0x3b8] sm:$0xff] %v3463
        %3499 = vst [vmem:[#allocation4 + $0x3c0] sm:$0xff] %v3464
        %3500 = vst [vmem:[#allocation4 + $0x3c8] sm:$0xff] %v3465
        %3501 = vst [vmem:[#allocation4 + $0x3d0] sm:$0xff] %v3466
        %3502 = vst [vmem:[#allocation4 + $0x3d8] sm:$0xff] %v3467
        %3503 = vst [vmem:[#allocation4 + $0x3e0] sm:$0xff] %v3468
        %3504 = vst.msk [vmem:[#allocation4 + $0x3e8] sm:$0xff] %vm2306, %v3452
        %3505 = vst.msk [vmem:[#allocation4 + $0x3a0] sm:$0xff] %vm2308, 0.0
        %3506 = vst.msk [vmem:[#allocation4 + $0x3e8] sm:$0xff] %vm2308, 0.0
        %3507 = vrot.lane.b32.xlu0 %v2913, 94
        %v3508 = vpop.permute.xlu0 %3507
        %3509 = vrot.lane.b32.xlu0 %v2914, 94
        %v3510 = vpop.permute.xlu0 %3509
        %3511 = vrot.lane.b32.xlu0 %v2915, 94
        %v3512 = vpop.permute.xlu0 %3511
        %3513 = vrot.lane.b32.xlu0 %v2916, 94
        %v3514 = vpop.permute.xlu0 %3513
        %3515 = vrot.lane.b32.xlu0 %v2917, 94
        %v3516 = vpop.permute.xlu0 %3515
        %3517 = vrot.lane.b32.xlu0 %v2918, 94
        %v3518 = vpop.permute.xlu0 %3517
        %3519 = vrot.lane.b32.xlu0 %v2919, 94
        %v3520 = vpop.permute.xlu0 %3519
        %3521 = vrot.lane.b32.xlu0 %v2920, 94
        %v3522 = vpop.permute.xlu0 %3521
        %3523 = vrot.lane.b32.xlu0 %v2921, 94
        %v3524 = vpop.permute.xlu0 %3523
        %3525 = vrot.lane.b32.xlu0 %v2922, 94
        %v3526 = vpop.permute.xlu0 %3525
        %3527 = vrot.lane.b32.xlu0 %v2923, 94
        %v3528 = vpop.permute.xlu0 %3527
        %3529 = vrot.lane.b32.xlu0 %v2924, 94
        %v3530 = vpop.permute.xlu0 %3529
        %3531 = vrot.lane.b32.xlu0 %v2925, 94
        %v3532 = vpop.permute.xlu0 %3531
        %3533 = vrot.lane.b32.xlu0 %v2926, 94
        %v3534 = vpop.permute.xlu0 %3533
        %3535 = vrot.lane.b32.xlu0 %v2927, 94
        %v3536 = vpop.permute.xlu0 %3535
        %3537 = vrot.lane.b32.xlu0 %v2928, 94
        %v3538 = vpop.permute.xlu0 %3537
        %3539 = vrot.lane.b32.xlu0 %v2929, 94
        %v3540 = vpop.permute.xlu0 %3539
        %3541 = vrot.lane.b32.xlu0 %v2930, 94
        %v3542 = vpop.permute.xlu0 %3541
        %v3543 = vsel %vm1423, %v3508, %v3510
        %v3544 = vsel %vm1423, %v3510, %v3512
        %v3545 = vsel %vm1423, %v3512, %v3514
        %v3546 = vsel %vm1423, %v3514, %v3516
        %v3547 = vsel %vm1423, %v3516, %v3518
        %v3548 = vsel %vm1423, %v3518, %v3520
        %v3549 = vsel %vm1423, %v3520, %v3522
        %v3550 = vsel %vm1423, %v3522, %v3524
        %v3551 = vsel %vm1423, %v3526, %v3528
        %v3552 = vsel %vm1423, %v3528, %v3530
        %v3553 = vsel %vm1423, %v3530, %v3532
        %v3554 = vsel %vm1423, %v3532, %v3534
        %v3555 = vsel %vm1423, %v3534, %v3536
        %v3556 = vsel %vm1423, %v3536, %v3538
        %v3557 = vsel %vm1423, %v3538, %v3540
        %v3558 = vsel %vm1423, %v3540, %v3542
        %3577 = vst [vmem:[#allocation4 + $0x3f0] sm:$0xff] %v3543
        %3578 = vst [vmem:[#allocation4 + $0x3f8] sm:$0xff] %v3544
        %3579 = vst [vmem:[#allocation4 + $0x400] sm:$0xff] %v3545
        %3580 = vst [vmem:[#allocation4 + $0x408] sm:$0xff] %v3546
        %3581 = vst [vmem:[#allocation4 + $0x410] sm:$0xff] %v3547
        %3582 = vst [vmem:[#allocation4 + $0x418] sm:$0xff] %v3548
        %3583 = vst [vmem:[#allocation4 + $0x420] sm:$0xff] %v3549
        %3584 = vst [vmem:[#allocation4 + $0x428] sm:$0xff] %v3550
        %3585 = vst.msk [vmem:[#allocation4 + $0x430] sm:$0xff] %vm2353, %v3524
        %3586 = vst [vmem:[#allocation4 + $0x438] sm:$0xff] %v3551
        %3587 = vst [vmem:[#allocation4 + $0x440] sm:$0xff] %v3552
        %3588 = vst [vmem:[#allocation4 + $0x448] sm:$0xff] %v3553
        %3589 = vst [vmem:[#allocation4 + $0x450] sm:$0xff] %v3554
        %3590 = vst [vmem:[#allocation4 + $0x458] sm:$0xff] %v3555
        %3591 = vst [vmem:[#allocation4 + $0x460] sm:$0xff] %v3556
        %3592 = vst [vmem:[#allocation4 + $0x468] sm:$0xff] %v3557
        %3593 = vst [vmem:[#allocation4 + $0x470] sm:$0xff] %v3558
        %3594 = vst.msk [vmem:[#allocation4 + $0x478] sm:$0xff] %vm2353, %v3542
        %3595 = vst.msk [vmem:[#allocation4 + $0x430] sm:$0xff] %vm2355, 0.0
        %3596 = vst.msk [vmem:[#allocation4 + $0x478] sm:$0xff] %vm2355, 0.0
        %3597 = vrot.lane.b32.xlu0 %v2913, 93
        %v3598 = vpop.permute.xlu0 %3597
        %3599 = vrot.lane.b32.xlu0 %v2914, 93
        %v3600 = vpop.permute.xlu0 %3599
        %3601 = vrot.lane.b32.xlu0 %v2915, 93
        %v3602 = vpop.permute.xlu0 %3601
        %3603 = vrot.lane.b32.xlu0 %v2916, 93
        %v3604 = vpop.permute.xlu0 %3603
        %3605 = vrot.lane.b32.xlu0 %v2917, 93
        %v3606 = vpop.permute.xlu0 %3605
        %3607 = vrot.lane.b32.xlu0 %v2918, 93
        %v3608 = vpop.permute.xlu0 %3607
        %3609 = vrot.lane.b32.xlu0 %v2919, 93
        %v3610 = vpop.permute.xlu0 %3609
        %3611 = vrot.lane.b32.xlu0 %v2920, 93
        %v3612 = vpop.permute.xlu0 %3611
        %3613 = vrot.lane.b32.xlu0 %v2921, 93
        %v3614 = vpop.permute.xlu0 %3613
        %3615 = vrot.lane.b32.xlu0 %v2922, 93
        %v3616 = vpop.permute.xlu0 %3615
        %3617 = vrot.lane.b32.xlu0 %v2923, 93
        %v3618 = vpop.permute.xlu0 %3617
        %3619 = vrot.lane.b32.xlu0 %v2924, 93
        %v3620 = vpop.permute.xlu0 %3619
        %3621 = vrot.lane.b32.xlu0 %v2925, 93
        %v3622 = vpop.permute.xlu0 %3621
        %3623 = vrot.lane.b32.xlu0 %v2926, 93
        %v3624 = vpop.permute.xlu0 %3623
        %3625 = vrot.lane.b32.xlu0 %v2927, 93
        %v3626 = vpop.permute.xlu0 %3625
        %3627 = vrot.lane.b32.xlu0 %v2928, 93
        %v3628 = vpop.permute.xlu0 %3627
        %3629 = vrot.lane.b32.xlu0 %v2929, 93
        %v3630 = vpop.permute.xlu0 %3629
        %3631 = vrot.lane.b32.xlu0 %v2930, 93
        %v3632 = vpop.permute.xlu0 %3631
        %v3633 = vsel %vm1471, %v3598, %v3600
        %v3634 = vsel %vm1471, %v3600, %v3602
        %v3635 = vsel %vm1471, %v3602, %v3604
        %v3636 = vsel %vm1471, %v3604, %v3606
        %v3637 = vsel %vm1471, %v3606, %v3608
        %v3638 = vsel %vm1471, %v3608, %v3610
        %v3639 = vsel %vm1471, %v3610, %v3612
        %v3640 = vsel %vm1471, %v3612, %v3614
        %v3641 = vsel %vm1471, %v3616, %v3618
        %v3642 = vsel %vm1471, %v3618, %v3620
        %v3643 = vsel %vm1471, %v3620, %v3622
        %v3644 = vsel %vm1471, %v3622, %v3624
        %v3645 = vsel %vm1471, %v3624, %v3626
        %v3646 = vsel %vm1471, %v3626, %v3628
        %v3647 = vsel %vm1471, %v3628, %v3630
        %v3648 = vsel %vm1471, %v3630, %v3632
        %3667 = vst [vmem:[#allocation4 + $0x480] sm:$0xff] %v3633
        %3668 = vst [vmem:[#allocation4 + $0x488] sm:$0xff] %v3634
        %3669 = vst [vmem:[#allocation4 + $0x490] sm:$0xff] %v3635
        %3670 = vst [vmem:[#allocation4 + $0x498] sm:$0xff] %v3636
        %3671 = vst [vmem:[#allocation4 + $0x4a0] sm:$0xff] %v3637
        %3672 = vst [vmem:[#allocation4 + $0x4a8] sm:$0xff] %v3638
        %3673 = vst [vmem:[#allocation4 + $0x4b0] sm:$0xff] %v3639
        %3674 = vst [vmem:[#allocation4 + $0x4b8] sm:$0xff] %v3640
        %3675 = vst.msk [vmem:[#allocation4 + $0x4c0] sm:$0xff] %vm2400, %v3614
        %3676 = vst [vmem:[#allocation4 + $0x4c8] sm:$0xff] %v3641
        %3677 = vst [vmem:[#allocation4 + $0x4d0] sm:$0xff] %v3642
        %3678 = vst [vmem:[#allocation4 + $0x4d8] sm:$0xff] %v3643
        %3679 = vst [vmem:[#allocation4 + $0x4e0] sm:$0xff] %v3644
        %3680 = vst [vmem:[#allocation4 + $0x4e8] sm:$0xff] %v3645
        %3681 = vst [vmem:[#allocation4 + $0x4f0] sm:$0xff] %v3646
        %3682 = vst [vmem:[#allocation4 + $0x4f8] sm:$0xff] %v3647
        %3683 = vst [vmem:[#allocation4 + $0x500] sm:$0xff] %v3648
        %3684 = vst.msk [vmem:[#allocation4 + $0x508] sm:$0xff] %vm2400, %v3632
        %3685 = vst.msk [vmem:[#allocation4 + $0x4c0] sm:$0xff] %vm2402, 0.0
        %3686 = vst.msk [vmem:[#allocation4 + $0x508] sm:$0xff] %vm2402, 0.0
        %v3687 = vld [vmem:[#allocation9] sm:$0xff]
        %v3688 = vld [vmem:[#allocation9 + $0x8] sm:$0xff]
        %v3689 = vld [vmem:[#allocation9 + $0x10] sm:$0xff]
        %v3690 = vld [vmem:[#allocation9 + $0x18] sm:$0xff]
        %v3691 = vld [vmem:[#allocation4] sm:$0xff]
        %v3692 = vld [vmem:[#allocation4 + $0x8] sm:$0xff]
        %v3693 = vld [vmem:[#allocation4 + $0x10] sm:$0xff]
        %v3694 = vld [vmem:[#allocation4 + $0x18] sm:$0xff]
        %v3695 = vld [vmem:[#allocation4 + $0x20] sm:$0xff]
        %v3696 = vld [vmem:[#allocation4 + $0x28] sm:$0xff]
        %v3697 = vld [vmem:[#allocation4 + $0x30] sm:$0xff]
        %v3698 = vld [vmem:[#allocation4 + $0x38] sm:$0xff]
        %v3699 = vld [vmem:[#allocation4 + $0x40] sm:$0xff]
        %v3700 = vld [vmem:[#allocation4 + $0x48] sm:$0xff]
        %v3701 = vld [vmem:[#allocation4 + $0x50] sm:$0xff]
        %v3702 = vld [vmem:[#allocation4 + $0x58] sm:$0xff]
        %v3703 = vld [vmem:[#allocation4 + $0x60] sm:$0xff]
        %v3704 = vld [vmem:[#allocation4 + $0x68] sm:$0xff]
        %v3705 = vld [vmem:[#allocation4 + $0x70] sm:$0xff]
        %v3706 = vld [vmem:[#allocation4 + $0x78] sm:$0xff]
        %v3707 = vld [vmem:[#allocation4 + $0x80] sm:$0xff]
        %v3708 = vld [vmem:[#allocation4 + $0x88] sm:$0xff]
        %v3709 = vld [vmem:[#allocation4 + $0x90] sm:$0xff]
        %v3710 = vld [vmem:[#allocation4 + $0x98] sm:$0xff]
        %v3711 = vld [vmem:[#allocation4 + $0xa0] sm:$0xff]
        %v3712 = vld [vmem:[#allocation4 + $0xa8] sm:$0xff]
        %v3713 = vld [vmem:[#allocation4 + $0xb0] sm:$0xff]
        %v3714 = vld [vmem:[#allocation4 + $0xb8] sm:$0xff]
        %v3715 = vld [vmem:[#allocation4 + $0xc0] sm:$0xff]
        %v3716 = vld [vmem:[#allocation4 + $0xc8] sm:$0xff]
        %v3717 = vld [vmem:[#allocation4 + $0xd0] sm:$0xff]
        %v3718 = vld [vmem:[#allocation4 + $0xd8] sm:$0xff]
        %v3719 = vld [vmem:[#allocation4 + $0xe0] sm:$0xff]
        %v3720 = vld [vmem:[#allocation4 + $0xe8] sm:$0xff]
        %v3721 = vld [vmem:[#allocation4 + $0xf0] sm:$0xff]
        %v3722 = vld [vmem:[#allocation4 + $0xf8] sm:$0xff]
        %v3723 = vld [vmem:[#allocation4 + $0x100] sm:$0xff]
        %v3724 = vld [vmem:[#allocation4 + $0x108] sm:$0xff]
        %v3725 = vld [vmem:[#allocation4 + $0x110] sm:$0xff]
        %v3726 = vld [vmem:[#allocation4 + $0x118] sm:$0xff]
        %v3727 = vld [vmem:[#allocation4 + $0x120] sm:$0xff]
        %v3728 = vld [vmem:[#allocation4 + $0x128] sm:$0xff]
        %v3729 = vld [vmem:[#allocation4 + $0x130] sm:$0xff]
        %v3730 = vld [vmem:[#allocation4 + $0x138] sm:$0xff]
        %v3731 = vld [vmem:[#allocation4 + $0x140] sm:$0xff]
        %v3732 = vld [vmem:[#allocation4 + $0x148] sm:$0xff]
        %v3733 = vld [vmem:[#allocation4 + $0x150] sm:$0xff]
        %v3734 = vld [vmem:[#allocation4 + $0x158] sm:$0xff]
        %v3735 = vld [vmem:[#allocation4 + $0x160] sm:$0xff]
        %v3736 = vld [vmem:[#allocation4 + $0x168] sm:$0xff]
        %v3737 = vld [vmem:[#allocation4 + $0x170] sm:$0xff]
        %v3738 = vld [vmem:[#allocation4 + $0x178] sm:$0xff]
        %v3739 = vld [vmem:[#allocation4 + $0x180] sm:$0xff]
        %v3740 = vld [vmem:[#allocation4 + $0x188] sm:$0xff]
        %v3741 = vld [vmem:[#allocation4 + $0x190] sm:$0xff]
        %v3742 = vld [vmem:[#allocation4 + $0x198] sm:$0xff]
        %v3743 = vld [vmem:[#allocation4 + $0x1a0] sm:$0xff]
        %v3744 = vld [vmem:[#allocation4 + $0x1a8] sm:$0xff]
        %v3745 = vld [vmem:[#allocation4 + $0x1b0] sm:$0xff]
        %v3746 = vld [vmem:[#allocation4 + $0x1b8] sm:$0xff]
        %v3747 = vld [vmem:[#allocation4 + $0x1c0] sm:$0xff]
        %v3748 = vld [vmem:[#allocation4 + $0x1c8] sm:$0xff]
        %v3749 = vld [vmem:[#allocation4 + $0x1d0] sm:$0xff]
        %v3750 = vld [vmem:[#allocation4 + $0x1d8] sm:$0xff]
        %v3751 = vld [vmem:[#allocation4 + $0x1e0] sm:$0xff]
        %v3752 = vld [vmem:[#allocation4 + $0x1e8] sm:$0xff]
        %v3753 = vld [vmem:[#allocation4 + $0x1f0] sm:$0xff]
        %v3754 = vld [vmem:[#allocation4 + $0x1f8] sm:$0xff]
        %v3755 = vld [vmem:[#allocation4 + $0x200] sm:$0xff]
        %v3756 = vld [vmem:[#allocation4 + $0x208] sm:$0xff]
        %v3757 = vld [vmem:[#allocation4 + $0x210] sm:$0xff]
        %v3758 = vld [vmem:[#allocation4 + $0x218] sm:$0xff]
        %v3759 = vld [vmem:[#allocation4 + $0x220] sm:$0xff]
        %v3760 = vld [vmem:[#allocation4 + $0x228] sm:$0xff]
        %v3761 = vld [vmem:[#allocation4 + $0x230] sm:$0xff]
        %v3762 = vld [vmem:[#allocation4 + $0x238] sm:$0xff]
        %v3763 = vld [vmem:[#allocation4 + $0x240] sm:$0xff]
        %v3764 = vld [vmem:[#allocation4 + $0x248] sm:$0xff]
        %v3765 = vld [vmem:[#allocation4 + $0x250] sm:$0xff]
        %v3766 = vld [vmem:[#allocation4 + $0x258] sm:$0xff]
        %v3767 = vld [vmem:[#allocation4 + $0x260] sm:$0xff]
        %v3768 = vld [vmem:[#allocation4 + $0x268] sm:$0xff]
        %v3769 = vld [vmem:[#allocation4 + $0x270] sm:$0xff]
        %v3770 = vld [vmem:[#allocation4 + $0x278] sm:$0xff]
        %v3771 = vld [vmem:[#allocation4 + $0x280] sm:$0xff]
        %v3772 = vld [vmem:[#allocation4 + $0x288] sm:$0xff]
        %v3773 = vld [vmem:[#allocation4 + $0x290] sm:$0xff]
        %v3774 = vld [vmem:[#allocation4 + $0x298] sm:$0xff]
        %v3775 = vld [vmem:[#allocation4 + $0x2a0] sm:$0xff]
        %v3776 = vld [vmem:[#allocation4 + $0x2a8] sm:$0xff]
        %v3777 = vld [vmem:[#allocation4 + $0x2b0] sm:$0xff]
        %v3778 = vld [vmem:[#allocation4 + $0x2b8] sm:$0xff]
        %v3779 = vld [vmem:[#allocation4 + $0x2c0] sm:$0xff]
        %v3780 = vld [vmem:[#allocation4 + $0x2c8] sm:$0xff]
        %v3781 = vld [vmem:[#allocation4 + $0x2d0] sm:$0xff]
        %v3782 = vld [vmem:[#allocation4 + $0x2d8] sm:$0xff]
        %v3783 = vld [vmem:[#allocation4 + $0x2e0] sm:$0xff]
        %v3784 = vld [vmem:[#allocation4 + $0x2e8] sm:$0xff]
        %v3785 = vld [vmem:[#allocation4 + $0x2f0] sm:$0xff]
        %v3786 = vld [vmem:[#allocation4 + $0x2f8] sm:$0xff]
        %v3787 = vld [vmem:[#allocation4 + $0x300] sm:$0xff]
        %v3788 = vld [vmem:[#allocation4 + $0x308] sm:$0xff]
        %v3789 = vld [vmem:[#allocation4 + $0x310] sm:$0xff]
        %v3790 = vld [vmem:[#allocation4 + $0x318] sm:$0xff]
        %v3791 = vld [vmem:[#allocation4 + $0x320] sm:$0xff]
        %v3792 = vld [vmem:[#allocation4 + $0x328] sm:$0xff]
        %v3793 = vld [vmem:[#allocation4 + $0x330] sm:$0xff]
        %v3794 = vld [vmem:[#allocation4 + $0x338] sm:$0xff]
        %v3795 = vld [vmem:[#allocation4 + $0x340] sm:$0xff]
        %v3796 = vld [vmem:[#allocation4 + $0x348] sm:$0xff]
        %v3797 = vld [vmem:[#allocation4 + $0x350] sm:$0xff]
        %v3798 = vld [vmem:[#allocation4 + $0x358] sm:$0xff]
        %v3799 = vld [vmem:[#allocation4 + $0x360] sm:$0xff]
        %v3800 = vld [vmem:[#allocation4 + $0x368] sm:$0xff]
        %v3801 = vld [vmem:[#allocation4 + $0x370] sm:$0xff]
        %v3802 = vld [vmem:[#allocation4 + $0x378] sm:$0xff]
        %v3803 = vld [vmem:[#allocation4 + $0x380] sm:$0xff]
        %v3804 = vld [vmem:[#allocation4 + $0x388] sm:$0xff]
        %v3805 = vld [vmem:[#allocation4 + $0x390] sm:$0xff]
        %v3806 = vld [vmem:[#allocation4 + $0x398] sm:$0xff]
        %v3807 = vld [vmem:[#allocation4 + $0x3a0] sm:$0xff]
        %v3808 = vld [vmem:[#allocation4 + $0x3a8] sm:$0xff]
        %v3809 = vld [vmem:[#allocation4 + $0x3b0] sm:$0xff]
        %v3810 = vld [vmem:[#allocation4 + $0x3b8] sm:$0xff]
        %v3811 = vld [vmem:[#allocation4 + $0x3c0] sm:$0xff]
        %v3812 = vld [vmem:[#allocation4 + $0x3c8] sm:$0xff]
        %v3813 = vld [vmem:[#allocation4 + $0x3d0] sm:$0xff]
        %v3814 = vld [vmem:[#allocation4 + $0x3d8] sm:$0xff]
        %v3815 = vld [vmem:[#allocation4 + $0x3e0] sm:$0xff]
        %v3816 = vld [vmem:[#allocation4 + $0x3e8] sm:$0xff]
        %v3817 = vld [vmem:[#allocation4 + $0x3f0] sm:$0xff]
        %v3818 = vld [vmem:[#allocation4 + $0x3f8] sm:$0xff]
        %v3819 = vld [vmem:[#allocation4 + $0x400] sm:$0xff]
        %v3820 = vld [vmem:[#allocation4 + $0x408] sm:$0xff]
        %v3821 = vld [vmem:[#allocation4 + $0x410] sm:$0xff]
        %v3822 = vld [vmem:[#allocation4 + $0x418] sm:$0xff]
        %v3823 = vld [vmem:[#allocation4 + $0x420] sm:$0xff]
        %v3824 = vld [vmem:[#allocation4 + $0x428] sm:$0xff]
        %v3825 = vld [vmem:[#allocation4 + $0x430] sm:$0xff]
        %v3826 = vld [vmem:[#allocation4 + $0x438] sm:$0xff]
        %v3827 = vld [vmem:[#allocation4 + $0x440] sm:$0xff]
        %v3828 = vld [vmem:[#allocation4 + $0x448] sm:$0xff]
        %v3829 = vld [vmem:[#allocation4 + $0x450] sm:$0xff]
        %v3830 = vld [vmem:[#allocation4 + $0x458] sm:$0xff]
        %v3831 = vld [vmem:[#allocation4 + $0x460] sm:$0xff]
        %v3832 = vld [vmem:[#allocation4 + $0x468] sm:$0xff]
        %v3833 = vld [vmem:[#allocation4 + $0x470] sm:$0xff]
        %v3834 = vld [vmem:[#allocation4 + $0x478] sm:$0xff]
        %v3835 = vld [vmem:[#allocation4 + $0x480] sm:$0xff]
        %v3836 = vld [vmem:[#allocation4 + $0x488] sm:$0xff]
        %v3837 = vld [vmem:[#allocation4 + $0x490] sm:$0xff]
        %v3838 = vld [vmem:[#allocation4 + $0x498] sm:$0xff]
        %v3839 = vld [vmem:[#allocation4 + $0x4a0] sm:$0xff]
        %v3840 = vld [vmem:[#allocation4 + $0x4a8] sm:$0xff]
        %v3841 = vld [vmem:[#allocation4 + $0x4b0] sm:$0xff]
        %v3842 = vld [vmem:[#allocation4 + $0x4b8] sm:$0xff]
        %v3843 = vld [vmem:[#allocation4 + $0x4c0] sm:$0xff]
        %v3844 = vld [vmem:[#allocation4 + $0x4c8] sm:$0xff]
        %v3845 = vld [vmem:[#allocation4 + $0x4d0] sm:$0xff]
        %v3846 = vld [vmem:[#allocation4 + $0x4d8] sm:$0xff]
        %v3847 = vld [vmem:[#allocation4 + $0x4e0] sm:$0xff]
        %v3848 = vld [vmem:[#allocation4 + $0x4e8] sm:$0xff]
        %v3849 = vld [vmem:[#allocation4 + $0x4f0] sm:$0xff]
        %v3850 = vld [vmem:[#allocation4 + $0x4f8] sm:$0xff]
        %v3851 = vld [vmem:[#allocation4 + $0x500] sm:$0xff]
        %v3852 = vld [vmem:[#allocation4 + $0x508] sm:$0xff]
        %v3853 = vld [vmem:[%s6] sm:$0xff]
        %v3854 = vld [vmem:[%s6 + $0x8] sm:$0xff]
        %3856 = vset.pattern.permute.xlu0 0
        %3857 = vperm.xlu0 %3856, %v3853
        %v3858 = vpop.permute.xlu0 %3857
        %3861 = vset.pattern.permute.xlu0 0
        %3862 = vperm.xlu0 %3861, %v3854
        %v3863 = vpop.permute.xlu0 %3862
        %vm3865 = vcmask 130048
        %v3867 = vsel %vm3865, %v3688, 0
        %v3870 = vsel %vm3865, %v3690, 0
        %3872 = vmatprep.subr.mxu0 %v3827
        %3873 = vmatpush1.msra.mxu0 %v3826
        %3874 = vmatprep.subr.mxu0 %v3818
        %3875 = vmatpush1.msra.mxu0 %v3817
        %3876 = vmatprep.subr.mxu0 %v3809
        %3877 = vmatpush1.msra.mxu0 %v3808
        %3878 = vmatprep.subr.mxu0 %v3800
        %3879 = vmatpush1.msra.mxu0 %v3799
        %3880 = vmatprep.subr.mxu0 %v3791
        %3881 = vmatpush1.msra.mxu0 %v3790
        %3882 = vmatprep.subr.mxu0 %v3782
        %3883 = vmatpush1.msra.mxu0 %v3781
        %3884 = vmatprep.subr.mxu0 %v3773
        %3885 = vmatpush1.msra.mxu0 %v3772
        %3886 = vmatprep.subr.mxu0 %v3764
        %3887 = vmatpush1.msra.mxu0 %v3763
        %3888 = vmatprep.subr.mxu0 %v3755
        %3889 = vmatpush1.msra.mxu0 %v3754
        %3890 = vmatprep.subr.mxu0 %v3746
        %3891 = vmatpush1.msra.mxu0 %v3745
        %3892 = vmatprep.subr.mxu0 %v3737
        %3893 = vmatpush1.msra.mxu0 %v3736
        %3894 = vmatprep.subr.mxu0 %v3728
        %3895 = vmatpush1.msra.mxu0 %v3727
        %3896 = vmatprep.subr.mxu0 %v3719
        %3897 = vmatpush1.msra.mxu0 %v3718
        %3898 = vmatprep.subr.mxu0 %v3710
        %3899 = vmatpush1.msra.mxu0 %v3709
        %3900 = vmatprep.subr.mxu0 %v3701
        %3901 = vmatpush1.msra.mxu0 %v3700
        %3902 = vmatprep.subr.mxu0 %v3692
        %3903 = vmatpush1.msra.mxu0 %v3691
        %3904 = vmatprep.subr.mxu0 0.0
        %3905 = vmatpush2.msra.mxu0 0.0
        %3906 = vmatprep.subr.mxu0 0.0
        %3907 = vmatpush2.msra.mxu0 0.0
        %3908 = vmatprep.subr.mxu0 0.0
        %3909 = vmatpush2.msra.mxu0 0.0
        %3910 = vmatprep.subr.mxu0 0.0
        %3911 = vmatpush2.msra.mxu0 0.0
        %3912 = vmatprep.subr.mxu0 0.0
        %3913 = vmatpush2.msra.mxu0 0.0
        %3914 = vmatprep.subr.mxu0 0.0
        %3915 = vmatpush2.msra.mxu0 0.0
        %3916 = vmatprep.subr.mxu0 0.0
        %3917 = vmatpush2.msra.mxu0 0.0
        %3918 = vmatprep.subr.mxu0 0.0
        %3919 = vmatpush2.msra.mxu0 0.0
        %3920 = vmatprep.subr.mxu0 0.0
        %3921 = vmatpush2.msra.mxu0 0.0
        %3922 = vmatprep.subr.mxu0 0.0
        %3923 = vmatpush2.msra.mxu0 0.0
        %3924 = vmatprep.subr.mxu0 0.0
        %3925 = vmatpush2.msra.mxu0 0.0
        %3926 = vmatprep.subr.mxu0 0.0
        %3927 = vmatpush2.msra.mxu0 0.0
        %3928 = vmatprep.subr.mxu0 0.0
        %3929 = vmatpush2.msra.mxu0 0.0
        %3930 = vmatprep.subr.mxu0 0.0
        %3931 = vmatpush2.msra.mxu0 0.0
        %3932 = vmatprep.subr.mxu0 %v3845
        %3933 = vmatpush2.msra.mxu0 %v3844
        %3934 = vmatprep.subr.mxu0 %v3836
        %3935 = vmatpush2.msra.mxu0 %v3835
        %3936 = vmatprep.mubr.f32.mxu0 %v3867
        %3937 = vmatmul.mubr.f32.gmra.mxu0 %v3687
        %v3938 = vpop.f32.mrf.mxu0
        %v3939 = vadd.f32 %v3858, %v3938
        %v3940 = vpop.f32.mrf.mxu0
        %v3941 = vadd.f32 %v3858, %v3940
        %3942 = vmatprep.mubr.f32.mxu0 %v3870
        %3943 = vmatmul.mubr.f32.gmra.mxu0 %v3689
        %v3944 = vpop.f32.mrf.mxu0
        %v3945 = vadd.f32 %v3863, %v3944
        %v3946 = vpop.f32.mrf.mxu0
        %v3947 = vadd.f32 %v3863, %v3946
        %3948 = vdwg.mxu0
        %3949 = vmatprep.subr.mxu0 %v3829
        %3950 = vmatpush1.msra.mxu0 %v3828
        %3951 = vmatprep.subr.mxu0 %v3820
        %3952 = vmatpush1.msra.mxu0 %v3819
        %3953 = vmatprep.subr.mxu0 %v3811
        %3954 = vmatpush1.msra.mxu0 %v3810
        %3955 = vmatprep.subr.mxu0 %v3802
        %3956 = vmatpush1.msra.mxu0 %v3801
        %3957 = vmatprep.subr.mxu0 %v3793
        %3958 = vmatpush1.msra.mxu0 %v3792
        %3959 = vmatprep.subr.mxu0 %v3784
        %3960 = vmatpush1.msra.mxu0 %v3783
        %3961 = vmatprep.subr.mxu0 %v3775
        %3962 = vmatpush1.msra.mxu0 %v3774
        %3963 = vmatprep.subr.mxu0 %v3766
        %3964 = vmatpush1.msra.mxu0 %v3765
        %3965 = vmatprep.subr.mxu0 %v3757
        %3966 = vmatpush1.msra.mxu0 %v3756
        %3967 = vmatprep.subr.mxu0 %v3748
        %3968 = vmatpush1.msra.mxu0 %v3747
        %3969 = vmatprep.subr.mxu0 %v3739
        %3970 = vmatpush1.msra.mxu0 %v3738
        %3971 = vmatprep.subr.mxu0 %v3730
        %3972 = vmatpush1.msra.mxu0 %v3729
        %3973 = vmatprep.subr.mxu0 %v3721
        %3974 = vmatpush1.msra.mxu0 %v3720
        %3975 = vmatprep.subr.mxu0 %v3712
        %3976 = vmatpush1.msra.mxu0 %v3711
        %3977 = vmatprep.subr.mxu0 %v3703
        %3978 = vmatpush1.msra.mxu0 %v3702
        %3979 = vmatprep.subr.mxu0 %v3694
        %3980 = vmatpush1.msra.mxu0 %v3693
        %3981 = vmatprep.subr.mxu0 0.0
        %3982 = vmatpush2.msra.mxu0 0.0
        %3983 = vmatprep.subr.mxu0 0.0
        %3984 = vmatpush2.msra.mxu0 0.0
        %3985 = vmatprep.subr.mxu0 0.0
        %3986 = vmatpush2.msra.mxu0 0.0
        %3987 = vmatprep.subr.mxu0 0.0
        %3988 = vmatpush2.msra.mxu0 0.0
        %3989 = vmatprep.subr.mxu0 0.0
        %3990 = vmatpush2.msra.mxu0 0.0
        %3991 = vmatprep.subr.mxu0 0.0
        %3992 = vmatpush2.msra.mxu0 0.0
        %3993 = vmatprep.subr.mxu0 0.0
        %3994 = vmatpush2.msra.mxu0 0.0
        %3995 = vmatprep.subr.mxu0 0.0
        %3996 = vmatpush2.msra.mxu0 0.0
        %3997 = vmatprep.subr.mxu0 0.0
        %3998 = vmatpush2.msra.mxu0 0.0
        %3999 = vmatprep.subr.mxu0 0.0
        %4000 = vmatpush2.msra.mxu0 0.0
        %4001 = vmatprep.subr.mxu0 0.0
        %4002 = vmatpush2.msra.mxu0 0.0
        %4003 = vmatprep.subr.mxu0 0.0
        %4004 = vmatpush2.msra.mxu0 0.0
        %4005 = vmatprep.subr.mxu0 0.0
        %4006 = vmatpush2.msra.mxu0 0.0
        %4007 = vmatprep.subr.mxu0 0.0
        %4008 = vmatpush2.msra.mxu0 0.0
        %4009 = vmatprep.subr.mxu0 %v3847
        %4010 = vmatpush2.msra.mxu0 %v3846
        %4011 = vmatprep.subr.mxu0 %v3838
        %4012 = vmatpush2.msra.mxu0 %v3837
        %4013 = vmatprep.mubr.f32.mxu0 %v3867
        %4014 = vmatmul.mubr.f32.gmra.mxu0 %v3687
        %v4015 = vpop.f32.mrf.mxu0
        %v4016 = vadd.f32 %v3858, %v4015
        %v4017 = vpop.f32.mrf.mxu0
        %v4018 = vadd.f32 %v3858, %v4017
        %4019 = vmatprep.mubr.f32.mxu0 %v3870
        %4020 = vmatmul.mubr.f32.gmra.mxu0 %v3689
        %v4021 = vpop.f32.mrf.mxu0
        %v4022 = vadd.f32 %v3863, %v4021
        %v4023 = vpop.f32.mrf.mxu0
        %v4024 = vadd.f32 %v3863, %v4023
        %4025 = vdwg.mxu0
        %4026 = vmatprep.subr.mxu0 %v3831
        %4027 = vmatpush1.msra.mxu0 %v3830
        %4028 = vmatprep.subr.mxu0 %v3822
        %4029 = vmatpush1.msra.mxu0 %v3821
        %4030 = vmatprep.subr.mxu0 %v3813
        %4031 = vmatpush1.msra.mxu0 %v3812
        %4032 = vmatprep.subr.mxu0 %v3804
        %4033 = vmatpush1.msra.mxu0 %v3803
        %4034 = vmatprep.subr.mxu0 %v3795
        %4035 = vmatpush1.msra.mxu0 %v3794
        %4036 = vmatprep.subr.mxu0 %v3786
        %4037 = vmatpush1.msra.mxu0 %v3785
        %4038 = vmatprep.subr.mxu0 %v3777
        %4039 = vmatpush1.msra.mxu0 %v3776
        %4040 = vmatprep.subr.mxu0 %v3768
        %4041 = vmatpush1.msra.mxu0 %v3767
        %4042 = vmatprep.subr.mxu0 %v3759
        %4043 = vmatpush1.msra.mxu0 %v3758
        %4044 = vmatprep.subr.mxu0 %v3750
        %4045 = vmatpush1.msra.mxu0 %v3749
        %4046 = vmatprep.subr.mxu0 %v3741
        %4047 = vmatpush1.msra.mxu0 %v3740
        %4048 = vmatprep.subr.mxu0 %v3732
        %4049 = vmatpush1.msra.mxu0 %v3731
        %4050 = vmatprep.subr.mxu0 %v3723
        %4051 = vmatpush1.msra.mxu0 %v3722
        %4052 = vmatprep.subr.mxu0 %v3714
        %4053 = vmatpush1.msra.mxu0 %v3713
        %4054 = vmatprep.subr.mxu0 %v3705
        %4055 = vmatpush1.msra.mxu0 %v3704
        %4056 = vmatprep.subr.mxu0 %v3696
        %4057 = vmatpush1.msra.mxu0 %v3695
        %4058 = vmatprep.subr.mxu0 0.0
        %4059 = vmatpush2.msra.mxu0 0.0
        %4060 = vmatprep.subr.mxu0 0.0
        %4061 = vmatpush2.msra.mxu0 0.0
        %4062 = vmatprep.subr.mxu0 0.0
        %4063 = vmatpush2.msra.mxu0 0.0
        %4064 = vmatprep.subr.mxu0 0.0
        %4065 = vmatpush2.msra.mxu0 0.0
        %4066 = vmatprep.subr.mxu0 0.0
        %4067 = vmatpush2.msra.mxu0 0.0
        %4068 = vmatprep.subr.mxu0 0.0
        %4069 = vmatpush2.msra.mxu0 0.0
        %4070 = vmatprep.subr.mxu0 0.0
        %4071 = vmatpush2.msra.mxu0 0.0
        %4072 = vmatprep.subr.mxu0 0.0
        %4073 = vmatpush2.msra.mxu0 0.0
        %4074 = vmatprep.subr.mxu0 0.0
        %4075 = vmatpush2.msra.mxu0 0.0
        %4076 = vmatprep.subr.mxu0 0.0
        %4077 = vmatpush2.msra.mxu0 0.0
        %4078 = vmatprep.subr.mxu0 0.0
        %4079 = vmatpush2.msra.mxu0 0.0
        %4080 = vmatprep.subr.mxu0 0.0
        %4081 = vmatpush2.msra.mxu0 0.0
        %4082 = vmatprep.subr.mxu0 0.0
        %4083 = vmatpush2.msra.mxu0 0.0
        %4084 = vmatprep.subr.mxu0 0.0
        %4085 = vmatpush2.msra.mxu0 0.0
        %4086 = vmatprep.subr.mxu0 %v3849
        %4087 = vmatpush2.msra.mxu0 %v3848
        %4088 = vmatprep.subr.mxu0 %v3840
        %4089 = vmatpush2.msra.mxu0 %v3839
        %4090 = vmatprep.mubr.f32.mxu0 %v3867
        %4091 = vmatmul.mubr.f32.gmra.mxu0 %v3687
        %v4092 = vpop.f32.mrf.mxu0
        %v4093 = vadd.f32 %v3858, %v4092
        %v4094 = vpop.f32.mrf.mxu0
        %v4095 = vadd.f32 %v3858, %v4094
        %4096 = vmatprep.mubr.f32.mxu0 %v3870
        %4097 = vmatmul.mubr.f32.gmra.mxu0 %v3689
        %v4098 = vpop.f32.mrf.mxu0
        %v4099 = vadd.f32 %v3863, %v4098
        %v4100 = vpop.f32.mrf.mxu0
        %v4101 = vadd.f32 %v3863, %v4100
        %4102 = vdwg.mxu0
        %4103 = vmatprep.subr.mxu0 %v3833
        %4104 = vmatpush1.msra.mxu0 %v3832
        %4105 = vmatprep.subr.mxu0 %v3824
        %4106 = vmatpush1.msra.mxu0 %v3823
        %4107 = vmatprep.subr.mxu0 %v3815
        %4108 = vmatpush1.msra.mxu0 %v3814
        %4109 = vmatprep.subr.mxu0 %v3806
        %4110 = vmatpush1.msra.mxu0 %v3805
        %4111 = vmatprep.subr.mxu0 %v3797
        %4112 = vmatpush1.msra.mxu0 %v3796
        %4113 = vmatprep.subr.mxu0 %v3788
        %4114 = vmatpush1.msra.mxu0 %v3787
        %4115 = vmatprep.subr.mxu0 %v3779
        %4116 = vmatpush1.msra.mxu0 %v3778
        %4117 = vmatprep.subr.mxu0 %v3770
        %4118 = vmatpush1.msra.mxu0 %v3769
        %4119 = vmatprep.subr.mxu0 %v3761
        %4120 = vmatpush1.msra.mxu0 %v3760
        %4121 = vmatprep.subr.mxu0 %v3752
        %4122 = vmatpush1.msra.mxu0 %v3751
        %4123 = vmatprep.subr.mxu0 %v3743
        %4124 = vmatpush1.msra.mxu0 %v3742
        %4125 = vmatprep.subr.mxu0 %v3734
        %4126 = vmatpush1.msra.mxu0 %v3733
        %4127 = vmatprep.subr.mxu0 %v3725
        %4128 = vmatpush1.msra.mxu0 %v3724
        %4129 = vmatprep.subr.mxu0 %v3716
        %4130 = vmatpush1.msra.mxu0 %v3715
        %4131 = vmatprep.subr.mxu0 %v3707
        %4132 = vmatpush1.msra.mxu0 %v3706
        %4133 = vmatprep.subr.mxu0 %v3698
        %4134 = vmatpush1.msra.mxu0 %v3697
        %4135 = vmatprep.subr.mxu0 0.0
        %4136 = vmatpush2.msra.mxu0 0.0
        %4137 = vmatprep.subr.mxu0 0.0
        %4138 = vmatpush2.msra.mxu0 0.0
        %4139 = vmatprep.subr.mxu0 0.0
        %4140 = vmatpush2.msra.mxu0 0.0
        %4141 = vmatprep.subr.mxu0 0.0
        %4142 = vmatpush2.msra.mxu0 0.0
        %4143 = vmatprep.subr.mxu0 0.0
        %4144 = vmatpush2.msra.mxu0 0.0
        %4145 = vmatprep.subr.mxu0 0.0
        %4146 = vmatpush2.msra.mxu0 0.0
        %4147 = vmatprep.subr.mxu0 0.0
        %4148 = vmatpush2.msra.mxu0 0.0
        %4149 = vmatprep.subr.mxu0 0.0
        %4150 = vmatpush2.msra.mxu0 0.0
        %4151 = vmatprep.subr.mxu0 0.0
        %4152 = vmatpush2.msra.mxu0 0.0
        %4153 = vmatprep.subr.mxu0 0.0
        %4154 = vmatpush2.msra.mxu0 0.0
        %4155 = vmatprep.subr.mxu0 0.0
        %4156 = vmatpush2.msra.mxu0 0.0
        %4157 = vmatprep.subr.mxu0 0.0
        %4158 = vmatpush2.msra.mxu0 0.0
        %4159 = vmatprep.subr.mxu0 0.0
        %4160 = vmatpush2.msra.mxu0 0.0
        %4161 = vmatprep.subr.mxu0 0.0
        %4162 = vmatpush2.msra.mxu0 0.0
        %4163 = vmatprep.subr.mxu0 %v3851
        %4164 = vmatpush2.msra.mxu0 %v3850
        %4165 = vmatprep.subr.mxu0 %v3842
        %4166 = vmatpush2.msra.mxu0 %v3841
        %4167 = vmatprep.mubr.f32.mxu0 %v3867
        %4168 = vmatmul.mubr.f32.gmra.mxu0 %v3687
        %v4169 = vpop.f32.mrf.mxu0
        %v4170 = vadd.f32 %v3858, %v4169
        %v4171 = vpop.f32.mrf.mxu0
        %v4172 = vadd.f32 %v3858, %v4171
        %4173 = vmatprep.mubr.f32.mxu0 %v3870
        %4174 = vmatmul.mubr.f32.gmra.mxu0 %v3689
        %v4175 = vpop.f32.mrf.mxu0
        %v4176 = vadd.f32 %v3863, %v4175
        %v4177 = vpop.f32.mrf.mxu0
        %v4178 = vadd.f32 %v3863, %v4177
        %4179 = vdwg.mxu0
        %4180 = vmatprep.subr.mxu0 0.0
        %4181 = vmatpush1.msra.mxu0 %v3834
        %4182 = vmatprep.subr.mxu0 0.0
        %4183 = vmatpush1.msra.mxu0 %v3825
        %4184 = vmatprep.subr.mxu0 0.0
        %4185 = vmatpush1.msra.mxu0 %v3816
        %4186 = vmatprep.subr.mxu0 0.0
        %4187 = vmatpush1.msra.mxu0 %v3807
        %4188 = vmatprep.subr.mxu0 0.0
        %4189 = vmatpush1.msra.mxu0 %v3798
        %4190 = vmatprep.subr.mxu0 0.0
        %4191 = vmatpush1.msra.mxu0 %v3789
        %4192 = vmatprep.subr.mxu0 0.0
        %4193 = vmatpush1.msra.mxu0 %v3780
        %4194 = vmatprep.subr.mxu0 0.0
        %4195 = vmatpush1.msra.mxu0 %v3771
        %4196 = vmatprep.subr.mxu0 0.0
        %4197 = vmatpush1.msra.mxu0 %v3762
        %4198 = vmatprep.subr.mxu0 0.0
        %4199 = vmatpush1.msra.mxu0 %v3753
        %4200 = vmatprep.subr.mxu0 0.0
        %4201 = vmatpush1.msra.mxu0 %v3744
        %4202 = vmatprep.subr.mxu0 0.0
        %4203 = vmatpush1.msra.mxu0 %v3735
        %4204 = vmatprep.subr.mxu0 0.0
        %4205 = vmatpush1.msra.mxu0 %v3726
        %4206 = vmatprep.subr.mxu0 0.0
        %4207 = vmatpush1.msra.mxu0 %v3717
        %4208 = vmatprep.subr.mxu0 0.0
        %4209 = vmatpush1.msra.mxu0 %v3708
        %4210 = vmatprep.subr.mxu0 0.0
        %4211 = vmatpush1.msra.mxu0 %v3699
        %4212 = vmatprep.subr.mxu0 0.0
        %4213 = vmatpush2.msra.mxu0 0.0
        %4214 = vmatprep.subr.mxu0 0.0
        %4215 = vmatpush2.msra.mxu0 0.0
        %4216 = vmatprep.subr.mxu0 0.0
        %4217 = vmatpush2.msra.mxu0 0.0
        %4218 = vmatprep.subr.mxu0 0.0
        %4219 = vmatpush2.msra.mxu0 0.0
        %4220 = vmatprep.subr.mxu0 0.0
        %4221 = vmatpush2.msra.mxu0 0.0
        %4222 = vmatprep.subr.mxu0 0.0
        %4223 = vmatpush2.msra.mxu0 0.0
        %4224 = vmatprep.subr.mxu0 0.0
        %4225 = vmatpush2.msra.mxu0 0.0
        %4226 = vmatprep.subr.mxu0 0.0
        %4227 = vmatpush2.msra.mxu0 0.0
        %4228 = vmatprep.subr.mxu0 0.0
        %4229 = vmatpush2.msra.mxu0 0.0
        %4230 = vmatprep.subr.mxu0 0.0
        %4231 = vmatpush2.msra.mxu0 0.0
        %4232 = vmatprep.subr.mxu0 0.0
        %4233 = vmatpush2.msra.mxu0 0.0
        %4234 = vmatprep.subr.mxu0 0.0
        %4235 = vmatpush2.msra.mxu0 0.0
        %4236 = vmatprep.subr.mxu0 0.0
        %4237 = vmatpush2.msra.mxu0 0.0
        %4238 = vmatprep.subr.mxu0 0.0
        %4239 = vmatpush2.msra.mxu0 0.0
        %4240 = vmatprep.subr.mxu0 0.0
        %4241 = vmatpush2.msra.mxu0 %v3852
        %4242 = vmatprep.subr.mxu0 0.0
        %4243 = vmatpush2.msra.mxu0 %v3843
        %4244 = vmatprep.mubr.f32.mxu0 %v3867
        %4245 = vmatmul.mubr.f32.gmra.mxu0 %v3687
        %v4246 = vpop.f32.mrf.mxu0
        %v4247 = vadd.f32 %v3858, %v4246
        %v4248 = vpop.f32.mrf.mxu0
        %4249 = vmatprep.mubr.f32.mxu0 %v3870
        %4250 = vmatmul.mubr.f32.gmra.mxu0 %v3689
        %v4251 = vpop.f32.mrf.mxu0
        %v4252 = vadd.f32 %v3863, %v4251
        %v4253 = vpop.f32.mrf.mxu0
        %4254 = vdwg.mxu0
        %v4255 = vmax.f32 %v3939, 0.0
        %v4256 = vmax.f32 %v3941, 0.0
        %v4257 = vmax.f32 %v4016, 0.0
        %v4258 = vmax.f32 %v4018, 0.0
        %v4259 = vmax.f32 %v4093, 0.0
        %v4260 = vmax.f32 %v4095, 0.0
        %v4261 = vmax.f32 %v4170, 0.0
        %v4262 = vmax.f32 %v4172, 0.0
        %v4263 = vmax.f32 %v4247, 0.0
        %v4264 = vmax.f32 %v3945, 0.0
        %v4265 = vmax.f32 %v3947, 0.0
        %v4266 = vmax.f32 %v4022, 0.0
        %v4267 = vmax.f32 %v4024, 0.0
        %v4268 = vmax.f32 %v4099, 0.0
        %v4269 = vmax.f32 %v4101, 0.0
        %v4270 = vmax.f32 %v4176, 0.0
        %v4271 = vmax.f32 %v4178, 0.0
        %v4272 = vmax.f32 %v4252, 0.0
        %4273 = vst [vmem:[%s439] sm:$0xff] %v4255
        %4274 = vst [vmem:[%s439 + $0x8] sm:$0xff] %v4256
        %4275 = vst [vmem:[%s439 + $0x10] sm:$0xff] %v4257
        %4276 = vst [vmem:[%s439 + $0x18] sm:$0xff] %v4258
        %4277 = vst [vmem:[%s439 + $0x20] sm:$0xff] %v4259
        %4278 = vst [vmem:[%s439 + $0x28] sm:$0xff] %v4260
        %4279 = vst [vmem:[%s439 + $0x30] sm:$0xff] %v4261
        %4280 = vst [vmem:[%s439 + $0x38] sm:$0xff] %v4262
        %4281 = vst.msk [vmem:[%s439 + $0x40] sm:$0xff] %vm1956, %v4263
        %4282 = vst [vmem:[%s439 + $0x48] sm:$0xff] %v4264
        %4283 = vst [vmem:[%s439 + $0x50] sm:$0xff] %v4265
        %4284 = vst [vmem:[%s439 + $0x58] sm:$0xff] %v4266
        %4285 = vst [vmem:[%s439 + $0x60] sm:$0xff] %v4267
        %4286 = vst [vmem:[%s439 + $0x68] sm:$0xff] %v4268
        %4287 = vst [vmem:[%s439 + $0x70] sm:$0xff] %v4269
        %4288 = vst [vmem:[%s439 + $0x78] sm:$0xff] %v4270
        %4289 = vst [vmem:[%s439 + $0x80] sm:$0xff] %v4271
        %4290 = vst.msk [vmem:[%s439 + $0x88] sm:$0xff] %vm1956, %v4272
        %p4291 = scmp.lt.s32.totalorder %s25, 1
        %s4292 = scalar_select %p4291, %s25, 1
        %s4293 = smul.addr %s4292, 9
        %s4294 = smul.addr %s4293, 8
        %s4295 = scalar_lea.vmem %s8, %s4294
        %p4296 = scmp.lt.s32.totalorder %s25, 1
        %s4297 = scalar_select %p4296, %s25, 1
        %s4298 = smul.addr %s4297, 18
        %s4299 = smul.addr %s4298, 8
        %s4300 = scalar_lea.vmem %s9, %s4299
        %p4301 = scmp.lt.s32.totalorder %s25, 1
        %s4302 = scalar_select %p4301, %s25, 1
        %s4303 = smul.addr %s4302, 18
        %s4304 = smul.addr %s4303, 8
        %s4305 = scalar_lea.vmem %s10, %s4304
        // Predicated region
        $region69: #{vgg_upscaler_forward.1} parent=51 // pred_check
          %p4306 = pneg %p216
        $region70: #{vgg_upscaler_forward.1} parent=51 // pred_check_branch
          %4308 = sbr.rel (%p4306) target = $region72
        $region71: #{vgg_upscaler_forward.1} parent=51 // pred_region
          _
        $region72: #{vgg_upscaler_forward.1} parent=51 // pred_fallthru
          _
        // Predicated region
        $region73: #{vgg_upscaler_forward.1} parent=51 // pred_check
          %p4309 = pneg %p242
        $region74: #{vgg_upscaler_forward.1} parent=51 // pred_check_branch
          %4311 = sbr.rel (%p4309) target = $region76
        $region75: #{vgg_upscaler_forward.1} parent=51 // pred_region
          _
        $region76: #{vgg_upscaler_forward.1} parent=51 // pred_fallthru
          _
        // Predicated region
        $region77: #{vgg_upscaler_forward.1} parent=51 // pred_check
          %p4312 = pneg %p268
        $region78: #{vgg_upscaler_forward.1} parent=51 // pred_check_branch
          %4314 = sbr.rel (%p4312) target = $region80
        $region79: #{vgg_upscaler_forward.1} parent=51 // pred_region
          _
        $region80: #{vgg_upscaler_forward.1} parent=51 // pred_fallthru
          _
      $region52: #{vgg_upscaler_forward.1} parent=5 // pred_fallthru
        _
      %p4315 = scmp.le.s32.totalorder 2, %s20
      // Predicated region
      $region81: #{vgg_upscaler_forward.1} parent=5 // pred_check
        %p4316 = pneg %p4315
      $region82: #{vgg_upscaler_forward.1} parent=5 // pred_check_branch
        %4318 = sbr.rel (%p4316) target = $region84
      $region83: #{vgg_upscaler_forward.1} parent=5 // pred_region
        %s4319 = ssub.s32 %s20, 2
        // Predicated region
        $region85: #{vgg_upscaler_forward.1} parent=83 // pred_check
          %p4320 = pneg %p222
        $region86: #{vgg_upscaler_forward.1} parent=83 // pred_check_branch
          %4322 = sbr.rel (%p4320) target = $region88
        $region87: #{vgg_upscaler_forward.1} parent=83 // pred_region
          %p4323 = scmp.lt.s32.totalorder %s26, 1
          %s4324 = scalar_select %p4323, %s26, 1
          %s4325 = smul.addr %s4324, 9
          %s4326 = smul.addr %s4325, 8
          %s4327 = scalar_lea.vmem %s8, %s4326
        $region88: #{vgg_upscaler_forward.1} parent=83 // pred_fallthru
          _
        // Predicated region
        $region89: #{vgg_upscaler_forward.1} parent=83 // pred_check
          %p4328 = pneg %p248
        $region90: #{vgg_upscaler_forward.1} parent=83 // pred_check_branch
          %4330 = sbr.rel (%p4328) target = $region92
        $region91: #{vgg_upscaler_forward.1} parent=83 // pred_region
          %p4331 = scmp.lt.s32.totalorder %s26, 1
          %s4332 = scalar_select %p4331, %s26, 1
          %s4333 = smul.addr %s4332, 18
          %s4334 = smul.addr %s4333, 8
          %s4335 = scalar_lea.vmem %s9, %s4334
        $region92: #{vgg_upscaler_forward.1} parent=83 // pred_fallthru
          _
        // Predicated region
        $region93: #{vgg_upscaler_forward.1} parent=83 // pred_check
          %p4336 = pneg %p274
        $region94: #{vgg_upscaler_forward.1} parent=83 // pred_check_branch
          %4338 = sbr.rel (%p4336) target = $region96
        $region95: #{vgg_upscaler_forward.1} parent=83 // pred_region
          %p4339 = scmp.lt.s32.totalorder %s26, 1
          %s4340 = scalar_select %p4339, %s26, 1
          %s4341 = smul.addr %s4340, 18
          %s4342 = smul.addr %s4341, 8
          %s4343 = scalar_lea.vmem %s10, %s4342
        $region96: #{vgg_upscaler_forward.1} parent=83 // pred_fallthru
          _
      $region84: #{vgg_upscaler_forward.1} parent=5 // pred_fallthru
        _
    $region6: #{vgg_upscaler_forward.1} parent=1 // loop_footer
      %s24 = sadd.s32 1, %s20
    $region7: #{vgg_upscaler_forward.1} parent=1 // loop_footer_branch
      %19 = sbr.rel target = $region3
    $region8: #{vgg_upscaler_forward.1} parent=1 // loop_exit
      _
    %4344 = vsyncpa [#allocation6], 1
    %s4345 = scalar_lea.sflag [#allocation6], 1
    %4346 = vsyncpa %s4345, 1
    %4347 = vsyncpa [#allocation8], 1
    %4348 = vsyncpa [#allocation11], 1

</llo_original>
